<compile_context>
chip_gen: v7x
topology: tpu7x:2x2x1
jax: 0.10.0
libtpu: 0.0.40
codegen_flags: <defaults>
</compile_context>

<pallas_src>
import functools

import numpy as np
import jax
import jax.numpy as jnp
from jax.experimental import pallas as pl
from jax.experimental.pallas import tpu as pltpu


# ----------------------------- elementwise helpers ---------------------------
# Exact (erf-based) GELU matching torch.nn.GELU() default; erf uses the
# Eigen/XLA float32 rational approximation (only mul/add/clip/div).
_ERF_ALPHA = (-2.72614225801306e-10, 2.77068142495902e-08, -2.10102402082508e-06,
              -5.69250639462346e-05, -7.34990630326855e-04, -2.95459980854025e-03,
              -1.60960333262415e-02)
_ERF_BETA = (-1.45660718464996e-05, -2.13374055278905e-04, -1.68282697438203e-03,
             -7.37332916720468e-03, -1.42647390514189e-02)


def _erf(x):
    x = jnp.clip(x, -4.0, 4.0)
    x2 = x * x
    p = x2 * _ERF_ALPHA[0] + _ERF_ALPHA[1]
    for a in _ERF_ALPHA[2:]:
        p = p * x2 + a
    p = p * x
    q = x2 * _ERF_BETA[0] + _ERF_BETA[1]
    for b in _ERF_BETA[2:]:
        q = q * x2 + b
    return p / q


def _gelu(x):
    return 0.5 * x * (1.0 + _erf(x * 0.7071067811865476))


# ------------------------------- Pallas kernels ------------------------------
def _patch_matmul_kernel(xp_ref, m_ref, b_ref, o_ref):
    # xp: (TM, dim*64)  m: (dim*64, C4*64)  b: (1, C4*64)  ->  o: (TM, C4*64)
    # Fused conv_in(1x1) + per-patch rfft2*S*irfft2 as one MXU matmul (K=256).
    o_ref[...] = jnp.dot(xp_ref[...], m_ref[...],
                         preferred_element_type=jnp.float32) + b_ref[...]


def patch_matmul(xp, m, b):
    M, K = xp.shape
    N = m.shape[1]
    TM = M
    for cand in (512, 256, 128, 64, 32, 16, 8):   # biggest row tile dividing M
        if M % cand == 0:
            TM = cand
            break
    return pl.pallas_call(
        _patch_matmul_kernel,
        out_shape=jax.ShapeDtypeStruct((M, N), jnp.float32),
        grid=(M // TM,),
        in_specs=[pl.BlockSpec((TM, K), lambda i: (i, 0)),
                  pl.BlockSpec((K, N), lambda i: (0, 0)),
                  pl.BlockSpec((1, N), lambda i: (0, 0))],
        out_specs=pl.BlockSpec((TM, N), lambda i: (i, 0)),
        compiler_params=pltpu.CompilerParams(dimension_semantics=("parallel",)),
    )(xp, m, b)


def _dw_gelu_pw_kernel(x2_ref, wd_ref, mask_ref, bd_ref, w3_ref, b3_ref, o_ref,
                       *, W):
    # x2:   (1, C4, HW)  channel-major, spatial flattened row-major (y*W + x)
    # wd:   (C4, 49)     depthwise taps (per-channel weight along sublanes)
    # mask: (49, HW)     per-tap zero-padding validity mask (precomputed)
    # bd:   (C4, 1)      depthwise bias
    # w3:   (Cout, C4)   conv3 (1x1) weight, transposed for (Cout, HW) output
    # b3:   (Cout, 1)
    # o:    (1, Cout, HW)  NCHW-flat output, lane dim = HW (lane-dense stores)
    x2 = x2_ref[0]                                   # (C4, HW)
    C4, HW = x2.shape
    acc = jnp.zeros((C4, HW), jnp.float32)
    # 7x7 depthwise cross-correlation via lane rolls + masks (no padded buffer,
    # no overlapping slices). roll(x, (-s) % HW)[f] == x[f + s]  (jnp.roll sem.)
    for t in range(49):
        oy = t // 7 - 3
        ox = t % 7 - 3
        s = oy * W + ox                              # source offset, flattened
        rolled = x2 if s == 0 else pltpu.roll(x2, (-s) % HW, axis=1)
        acc = acc + wd_ref[:, t:t + 1] * (rolled * mask_ref[t:t + 1, :])
    acc = _gelu(acc + bd_ref[...])
    # conv3 (1x1): (Cout, C4) @ (C4, HW) -> (Cout, HW); output already NCHW-flat
    o_ref[0] = jnp.dot(w3_ref[...], acc,
                       preferred_element_type=jnp.float32) + b3_ref[...]


def dw_gelu_pw(x2, wd, mask, bd, w3, b3, W):
    B, C4, HW = x2.shape
    Cout = w3.shape[0]
    kernel = functools.partial(_dw_gelu_pw_kernel, W=W)
    # grid=(B,) parallel -> shards across the 2 TensorCores on v7x when B >= 2.
    # Per-step VMEM footprint is a few hundred KB, far below the 32 MiB scoped
    # limit on all generations, so no row-strip tiling is needed at these sizes.
    return pl.pallas_call(
        kernel,
        out_shape=jax.ShapeDtypeStruct((B, Cout, HW), jnp.float32),
        grid=(B,),
        in_specs=[pl.BlockSpec((1, C4, HW), lambda b: (b, 0, 0)),
                  pl.BlockSpec((C4, 49), lambda b: (0, 0)),
                  pl.BlockSpec((49, HW), lambda b: (0, 0)),
                  pl.BlockSpec((C4, 1), lambda b: (0, 0)),
                  pl.BlockSpec((Cout, C4), lambda b: (0, 0)),
                  pl.BlockSpec((Cout, 1), lambda b: (0, 0))],
        out_specs=pl.BlockSpec((1, Cout, HW), lambda b: (b, 0, 0)),
        compiler_params=pltpu.CompilerParams(dimension_semantics=("parallel",)),
    )(x2, wd, mask, bd, w3, b3)


# --------------------------- parameter / glue helpers -------------------------
def _fft_filter_matrices(fft_param):
    """Exact 64x64 real operator per channel equivalent to
    rfft2(patch) * S_c -> irfft2 (S_c real => composite map is R-linear)."""
    C4 = fft_param.shape[0]
    basis = jnp.eye(64, dtype=jnp.float32).reshape(64, 8, 8)
    basis_f = jnp.fft.rfft2(basis)                                  # (64, 8, 5)
    filt = fft_param.astype(jnp.complex64)[:, None, :, :]           # (C4,1,8,5)
    resp = jnp.fft.irfft2(basis_f[None] * filt, s=(8, 8))           # (C4,64,8,8)
    return jnp.real(resp).astype(jnp.float32).reshape(C4, 64, 64)   # M_c[k, j]


def prepare_params(params, H, W):
    """Build kernel-ready constant operators ONCE (hoisted out of the forward)."""
    dim, C4 = params['w_in'].shape
    mats = _fft_filter_matrices(params['fft'])                      # (C4,64,64)
    # Mbig[(d*64+k), (c*64+j)] = w_in[d,c] * M_c[k,j]   (conv_in fused in)
    m_big = jnp.einsum('dc,ckj->dkcj', params['w_in'], mats) \
        .reshape(dim * 64, C4 * 64)
    # conv_in bias propagated through the linear patch operator
    b_big = (params['b_in'][:, None] * mats.sum(axis=1)).reshape(1, C4 * 64)

    wd = params['w_dw'].reshape(49, C4).T                           # (C4, 49)

    # per-tap validity masks for the zero-padded 7x7 depthwise conv,
    # flattened spatial index f = y*W + x
    f = np.arange(H * W)
    row, col = f // W, f % W
    masks = np.zeros((49, H * W), np.float32)
    for t in range(49):
        oy, ox = t // 7 - 3, t % 7 - 3
        masks[t] = ((row + oy >= 0) & (row + oy < H) &
                    (col + ox >= 0) & (col + ox < W)).astype(np.float32)

    return {
        'm_big': m_big,
        'b_big': b_big,
        'wd': wd,
        'bd': params['b_dw'].reshape(C4, 1),
        'mask': jnp.asarray(masks),
        'w3': params['w_out'].T,                                    # (dim, C4)
        'b3': params['b_out'].reshape(dim, 1),
    }


@jax.jit
def fft3_forward(x_nchw, prep):
    B, C, H, W = x_nchw.shape
    C4 = prep['bd'].shape[0]
    assert H % 8 == 0 and W % 8 == 0
    h, w = H // 8, W // 8
    x = x_nchw.astype(jnp.float32)

    # patchify the RAW input once (tiny tensor): rows = (b, ph, pw),
    # cols = (d, p1, p2)  ->  (B*P, dim*64)
    xp = (x.reshape(B, C, h, 8, w, 8)
           .transpose(0, 2, 4, 1, 3, 5)
           .reshape(B * h * w, C * 64))

    # fused conv_in + rfft2*S*irfft2 : one MXU matmul, lane-dense 1024-wide out
    y = patch_matmul(xp, prep['m_big'], prep['b_big'])              # (B*P, C4*64)

    # unpatchify to channel-major, spatially-flattened layout (lane dim = H*W);
    # this is the only XLA transpose of an intermediate (~32 KB at these sizes).
    x2 = (y.reshape(B, h, w, C4, 8, 8)
           .transpose(0, 3, 1, 4, 2, 5)
           .reshape(B, C4, H * W))

    # fused depthwise 7x7 + GELU + conv3; output is already NCHW-flat
    out = dw_gelu_pw(x2, prep['wd'], prep['mask'], prep['bd'],
                     prep['w3'], prep['b3'], W)                     # (B, dim, HW)
    return out.reshape(B, -1, H, W)


# -------------------------- pure-JAX reference (check) ------------------------
def fft3_reference(x_nchw, params):
    B, C, H, W = x_nchw.shape
    C4 = params['w_in'].shape[1]
    x1 = jnp.einsum('bchw,cd->bdhw', x_nchw, params['w_in']) \
        + params['b_in'][None, :, None, None]
    h, w = H // 8, W // 8
    xp = x1.reshape(B, C4, h, 8, w, 8).transpose(0, 1, 2, 4, 3, 5)
    xf = jnp.fft.rfft2(xp)
    xf = xf * params['fft'][None, :, None, None, :, :]
    xp2 = jnp.fft.irfft2(xf, s=(8, 8))
    x2 = xp2.transpose(0, 1, 2, 4, 3, 5).reshape(B, C4, H, W)
    xpad = jnp.pad(x2, ((0, 0), (0, 0), (3, 3), (3, 3)))
    acc = jnp.zeros_like(x2)
    for dy in range(7):
        for dx in range(7):
            acc = acc + xpad[:, :, dy:dy + H, dx:dx + W] \
                * params['w_dw'][dy, dx][None, :, None, None]
    acc = acc + params['b_dw'][None, :, None, None]
    acc = _gelu(acc)
    out = jnp.einsum('bchw,cd->bdhw', acc, params['w_out']) \
        + params['b_out'][None, :, None, None]
    return out


# ------------------------------------ main ------------------------------------
if __name__ == "__main__":
    key = jax.random.PRNGKey(0)
    B, dim, H, W = 2, 4, 16, 16
    C4 = dim * 4

    kx, *kp = jax.random.split(key, 8)
    # Deterministic synthetic parameters (shapes follow the torch module):
    #   conv_in.weight (C4,dim,1,1) -> w_in (dim,C4); conv2.weight (C4,1,7,7) -> w_dw (7,7,C4)
    #   conv3.weight (dim,C4,1,1) -> w_out (C4,dim);  fft (C4,1,1,8,5) -> (C4,8,5)
    params = {
        'w_in': 0.2 * jax.random.normal(kp[0], (dim, C4), jnp.float32),
        'b_in': 0.05 * jax.random.normal(kp[1], (C4,), jnp.float32),
        # module init is torch.ones(...); perturbed deterministically so the
        # frequency-domain filter is numerically non-trivial
        'fft': 1.0 + 0.1 * jax.random.normal(kp[2], (C4, 8, 5), jnp.float32),
        'w_dw': 0.1 * jax.random.normal(kp[3], (7, 7, C4), jnp.float32),
        'b_dw': 0.05 * jax.random.normal(kp[4], (C4,), jnp.float32),
        'w_out': 0.2 * jax.random.normal(kp[5], (C4, dim), jnp.float32),
        'b_out': 0.05 * jax.random.normal(kp[6], (dim,), jnp.float32),
    }
    x = jax.random.normal(kx, (B, dim, H, W), jnp.float32)

    prep = prepare_params(params, H, W)          # built once, reused every call
    y = jax.block_until_ready(fft3_forward(x, prep))
    y_ref = jax.block_until_ready(fft3_reference(x, params))

    assert y.shape == (B, dim, H, W) and y.dtype == jnp.float32
    np.testing.assert_allclose(np.asarray(y), np.asarray(y_ref), rtol=1e-2, atol=1e-2)
    print("KERNEL_OK")
</pallas_src>

<mosaic_0001>
module attributes {stable_mosaic.version = 11 : i64} {
  func.func @_patch_matmul_kernel(%arg0: i32, %arg1: memref<8x256xf32, #tpu.memory_space<vmem>>, %arg2: memref<256x1024xf32, #tpu.memory_space<vmem>>, %arg3: memref<1x1024xf32, #tpu.memory_space<vmem>>, %arg4: memref<8x1024xf32, #tpu.memory_space<vmem>>) attributes {dimension_semantics = [#tpu.dimension_semantics<parallel>], iteration_bounds = array<i64: 1>, scalar_prefetch = 0 : i64, scratch_operands = 0 : i64, tpu.core_type = #tpu.core_type<tc>, window_params = [{transform_indices = @transform_0, window_bounds = array<i64: 8, 256>}, {pipeline_mode = #tpu.pipeline_mode<synchronous>, transform_indices = @transform_1, window_bounds = array<i64: 256, 1024>}, {pipeline_mode = #tpu.pipeline_mode<synchronous>, transform_indices = @transform_2, window_bounds = array<i64: 1, 1024>}, {transform_indices = @transform_3, window_bounds = array<i64: 8, 1024>}]} {
    %c0 = arith.constant 0 : index
    %c0_0 = arith.constant 0 : index
    %0 = vector.load %arg1[%c0, %c0_0] : memref<8x256xf32, #tpu.memory_space<vmem>>, vector<8x256xf32>
    %c0_1 = arith.constant 0 : index
    %c0_2 = arith.constant 0 : index
    %1 = vector.load %arg2[%c0_1, %c0_2] : memref<256x1024xf32, #tpu.memory_space<vmem>>, vector<256x1024xf32>
    %cst = arith.constant dense<0.000000e+00> : vector<8x1024xf32>
    %2 = tpu.matmul %0, %1, %cst {dimension_numbers = #tpu.dot_dimension_numbers<[1], [0], [0], [1], [0, 0, 1, 1], [], []>} : vector<8x256xf32>, vector<256x1024xf32>, vector<8x1024xf32> -> vector<8x1024xf32>
    %c0_3 = arith.constant 0 : index
    %c0_4 = arith.constant 0 : index
    %3 = vector.load %arg3[%c0_3, %c0_4] : memref<1x1024xf32, #tpu.memory_space<vmem>>, vector<1x1024xf32>
    %4 = vector.broadcast %3 : vector<1x1024xf32> to vector<8x1024xf32>
    %5 = arith.addf %2, %4 : vector<8x1024xf32>
    %c0_5 = arith.constant 0 : index
    %c0_6 = arith.constant 0 : index
    %6 = vector.load %arg4[%c0_5, %c0_6] : memref<8x1024xf32, #tpu.memory_space<vmem>>, vector<8x1024xf32>
    tpu.vector_store %arg4[%c0_5, %c0_6], %5 {strides = array<i32>} : memref<8x1024xf32, #tpu.memory_space<vmem>>, vector<8x1024xf32>,
    return
  }
  func.func @transform_0(%arg0: i32) -> (i32, i32) {
    %c0_i32 = arith.constant 0 : i32
    %c0_i32_0 = arith.constant 0 : i32
    return %arg0, %c0_i32 : i32, i32
  }
  func.func @transform_1(%arg0: i32) -> (i32, i32) {
    %c0_i32 = arith.constant 0 : i32
    %c0_i32_0 = arith.constant 0 : i32
    %c0_i32_1 = arith.constant 0 : i32
    return %c0_i32, %c0_i32_0 : i32, i32
  }
  func.func @transform_2(%arg0: i32) -> (i32, i32) {
    %c0_i32 = arith.constant 0 : i32
    %c0_i32_0 = arith.constant 0 : i32
    %c0_i32_1 = arith.constant 0 : i32
    return %c0_i32, %c0_i32_0 : i32, i32
  }
  func.func @transform_3(%arg0: i32) -> (i32, i32) {
    %c0_i32 = arith.constant 0 : i32
    %c0_i32_0 = arith.constant 0 : i32
    return %arg0, %c0_i32 : i32, i32
  }
}

module attributes {stable_mosaic.version = 11 : i64} {
  func.func @_dw_gelu_pw_kernel(%arg0: i32, %arg1: memref<1x16x256xf32, #tpu.memory_space<vmem>>, %arg2: memref<16x49xf32, #tpu.memory_space<vmem>>, %arg3: memref<49x256xf32, #tpu.memory_space<vmem>>, %arg4: memref<16x1xf32, #tpu.memory_space<vmem>>, %arg5: memref<4x16xf32, #tpu.memory_space<vmem>>, %arg6: memref<4x1xf32, #tpu.memory_space<vmem>>, %arg7: memref<1x4x256xf32, #tpu.memory_space<vmem>>) attributes {dimension_semantics = [#tpu.dimension_semantics<parallel>], iteration_bounds = array<i64: 2>, scalar_prefetch = 0 : i64, scratch_operands = 0 : i64, tpu.core_type = #tpu.core_type<tc>, window_params = [{transform_indices = @transform_0, window_bounds = array<i64: 1, 16, 256>}, {pipeline_mode = #tpu.pipeline_mode<synchronous>, transform_indices = @transform_1, window_bounds = array<i64: 16, 49>}, {pipeline_mode = #tpu.pipeline_mode<synchronous>, transform_indices = @transform_2, window_bounds = array<i64: 49, 256>}, {pipeline_mode = #tpu.pipeline_mode<synchronous>, transform_indices = @transform_3, window_bounds = array<i64: 16, 1>}, {pipeline_mode = #tpu.pipeline_mode<synchronous>, transform_indices = @transform_4, window_bounds = array<i64: 4, 16>}, {pipeline_mode = #tpu.pipeline_mode<synchronous>, transform_indices = @transform_5, window_bounds = array<i64: 4, 1>}, {transform_indices = @transform_6, window_bounds = array<i64: 1, 4, 256>}]} {
    %c0 = arith.constant 0 : index
    %c0_0 = arith.constant 0 : index
    %c0_1 = arith.constant 0 : index
    %0 = vector.load %arg1[%c0, %c0_0, %c0_1] : memref<1x16x256xf32, #tpu.memory_space<vmem>>, vector<1x16x256xf32>
    %1 = vector.shape_cast %0 : vector<1x16x256xf32> to vector<16x256xf32>
    %cst = arith.constant 0.000000e+00 : f32
    %2 = vector.broadcast %cst : f32 to vector<16x256xf32>
    %c51_i32 = arith.constant 51 : i32
    %3 = tpu.dynamic_rotate %1 by %c51_i32 dim 1 : vector<16x256xf32>, i32 -> vector<16x256xf32>
    %c0_2 = arith.constant 0 : index
    %c0_3 = arith.constant 0 : index
    %4 = vector.load %arg2[%c0_2, %c0_3] : memref<16x49xf32, #tpu.memory_space<vmem>>, vector<16x1xf32>
    %c0_4 = arith.constant 0 : index
    %c0_5 = arith.constant 0 : index
    %5 = vector.load %arg3[%c0_4, %c0_5] : memref<49x256xf32, #tpu.memory_space<vmem>>, vector<1x256xf32>
    %6 = vector.broadcast %5 : vector<1x256xf32> to vector<16x256xf32>
    %7 = arith.mulf %3, %6 : vector<16x256xf32>
    %8 = vector.broadcast %4 : vector<16x1xf32> to vector<16x256xf32>
    %9 = arith.mulf %8, %7 : vector<16x256xf32>
    %10 = arith.addf %2, %9 : vector<16x256xf32>
    %c50_i32 = arith.constant 50 : i32
    %11 = tpu.dynamic_rotate %1 by %c50_i32 dim 1 : vector<16x256xf32>, i32 -> vector<16x256xf32>
    %c0_6 = arith.constant 0 : index
    %c1 = arith.constant 1 : index
    %12 = vector.load %arg2[%c0_6, %c1] : memref<16x49xf32, #tpu.memory_space<vmem>>, vector<16x1xf32>
    %c1_7 = arith.constant 1 : index
    %c0_8 = arith.constant 0 : index
    %13 = vector.load %arg3[%c1_7, %c0_8] : memref<49x256xf32, #tpu.memory_space<vmem>>, vector<1x256xf32>
    %14 = vector.broadcast %13 : vector<1x256xf32> to vector<16x256xf32>
    %15 = arith.mulf %11, %14 : vector<16x256xf32>
    %16 = vector.broadcast %12 : vector<16x1xf32> to vector<16x256xf32>
    %17 = arith.mulf %16, %15 : vector<16x256xf32>
    %18 = arith.addf %10, %17 : vector<16x256xf32>
    %c49_i32 = arith.constant 49 : i32
    %19 = tpu.dynamic_rotate %1 by %c49_i32 dim 1 : vector<16x256xf32>, i32 -> vector<16x256xf32>
    %c0_9 = arith.constant 0 : index
    %c2 = arith.constant 2 : index
    %20 = vector.load %arg2[%c0_9, %c2] : memref<16x49xf32, #tpu.memory_space<vmem>>, vector<16x1xf32>
    %c2_10 = arith.constant 2 : index
    %c0_11 = arith.constant 0 : index
    %21 = vector.load %arg3[%c2_10, %c0_11] : memref<49x256xf32, #tpu.memory_space<vmem>>, vector<1x256xf32>
    %22 = vector.broadcast %21 : vector<1x256xf32> to vector<16x256xf32>
    %23 = arith.mulf %19, %22 : vector<16x256xf32>
    %24 = vector.broadcast %20 : vector<16x1xf32> to vector<16x256xf32>
    %25 = arith.mulf %24, %23 : vector<16x256xf32>
    %26 = arith.addf %18, %25 : vector<16x256xf32>
    %c48_i32 = arith.constant 48 : i32
    %27 = tpu.dynamic_rotate %1 by %c48_i32 dim 1 : vector<16x256xf32>, i32 -> vector<16x256xf32>
    %c0_12 = arith.constant 0 : index
    %c3 = arith.constant 3 : index
    %28 = vector.load %arg2[%c0_12, %c3] : memref<16x49xf32, #tpu.memory_space<vmem>>, vector<16x1xf32>
    %c3_13 = arith.constant 3 : index
    %c0_14 = arith.constant 0 : index
    %29 = vector.load %arg3[%c3_13, %c0_14] : memref<49x256xf32, #tpu.memory_space<vmem>>, vector<1x256xf32>
    %30 = vector.broadcast %29 : vector<1x256xf32> to vector<16x256xf32>
    %31 = arith.mulf %27, %30 : vector<16x256xf32>
    %32 = vector.broadcast %28 : vector<16x1xf32> to vector<16x256xf32>
    %33 = arith.mulf %32, %31 : vector<16x256xf32>
    %34 = arith.addf %26, %33 : vector<16x256xf32>
    %c47_i32 = arith.constant 47 : i32
    %35 = tpu.dynamic_rotate %1 by %c47_i32 dim 1 : vector<16x256xf32>, i32 -> vector<16x256xf32>
    %c0_15 = arith.constant 0 : index
    %c4 = arith.constant 4 : index
    %36 = vector.load %arg2[%c0_15, %c4] : memref<16x49xf32, #tpu.memory_space<vmem>>, vector<16x1xf32>
    %c4_16 = arith.constant 4 : index
    %c0_17 = arith.constant 0 : index
    %37 = vector.load %arg3[%c4_16, %c0_17] : memref<49x256xf32, #tpu.memory_space<vmem>>, vector<1x256xf32>
    %38 = vector.broadcast %37 : vector<1x256xf32> to vector<16x256xf32>
    %39 = arith.mulf %35, %38 : vector<16x256xf32>
    %40 = vector.broadcast %36 : vector<16x1xf32> to vector<16x256xf32>
    %41 = arith.mulf %40, %39 : vector<16x256xf32>
    %42 = arith.addf %34, %41 : vector<16x256xf32>
    %c46_i32 = arith.constant 46 : i32
    %43 = tpu.dynamic_rotate %1 by %c46_i32 dim 1 : vector<16x256xf32>, i32 -> vector<16x256xf32>
    %c0_18 = arith.constant 0 : index
    %c5 = arith.constant 5 : index
    %44 = vector.load %arg2[%c0_18, %c5] : memref<16x49xf32, #tpu.memory_space<vmem>>, vector<16x1xf32>
    %c5_19 = arith.constant 5 : index
    %c0_20 = arith.constant 0 : index
    %45 = vector.load %arg3[%c5_19, %c0_20] : memref<49x256xf32, #tpu.memory_space<vmem>>, vector<1x256xf32>
    %46 = vector.broadcast %45 : vector<1x256xf32> to vector<16x256xf32>
    %47 = arith.mulf %43, %46 : vector<16x256xf32>
    %48 = vector.broadcast %44 : vector<16x1xf32> to vector<16x256xf32>
    %49 = arith.mulf %48, %47 : vector<16x256xf32>
    %50 = arith.addf %42, %49 : vector<16x256xf32>
    %c45_i32 = arith.constant 45 : i32
    %51 = tpu.dynamic_rotate %1 by %c45_i32 dim 1 : vector<16x256xf32>, i32 -> vector<16x256xf32>
    %c0_21 = arith.constant 0 : index
    %c6 = arith.constant 6 : index
    %52 = vector.load %arg2[%c0_21, %c6] : memref<16x49xf32, #tpu.memory_space<vmem>>, vector<16x1xf32>
    %c6_22 = arith.constant 6 : index
    %c0_23 = arith.constant 0 : index
    %53 = vector.load %arg3[%c6_22, %c0_23] : memref<49x256xf32, #tpu.memory_space<vmem>>, vector<1x256xf32>
    %54 = vector.broadcast %53 : vector<1x256xf32> to vector<16x256xf32>
    %55 = arith.mulf %51, %54 : vector<16x256xf32>
    %56 = vector.broadcast %52 : vector<16x1xf32> to vector<16x256xf32>
    %57 = arith.mulf %56, %55 : vector<16x256xf32>
    %58 = arith.addf %50, %57 : vector<16x256xf32>
    %c35_i32 = arith.constant 35 : i32
    %59 = tpu.dynamic_rotate %1 by %c35_i32 dim 1 : vector<16x256xf32>, i32 -> vector<16x256xf32>
    %c0_24 = arith.constant 0 : index
    %c7 = arith.constant 7 : index
    %60 = vector.load %arg2[%c0_24, %c7] : memref<16x49xf32, #tpu.memory_space<vmem>>, vector<16x1xf32>
    %c7_25 = arith.constant 7 : index
    %c0_26 = arith.constant 0 : index
    %61 = vector.load %arg3[%c7_25, %c0_26] : memref<49x256xf32, #tpu.memory_space<vmem>>, vector<1x256xf32>
    %62 = vector.broadcast %61 : vector<1x256xf32> to vector<16x256xf32>
    %63 = arith.mulf %59, %62 : vector<16x256xf32>
    %64 = vector.broadcast %60 : vector<16x1xf32> to vector<16x256xf32>
    %65 = arith.mulf %64, %63 : vector<16x256xf32>
    %66 = arith.addf %58, %65 : vector<16x256xf32>
    %c34_i32 = arith.constant 34 : i32
    %67 = tpu.dynamic_rotate %1 by %c34_i32 dim 1 : vector<16x256xf32>, i32 -> vector<16x256xf32>
    %c0_27 = arith.constant 0 : index
    %c8 = arith.constant 8 : index
    %68 = vector.load %arg2[%c0_27, %c8] : memref<16x49xf32, #tpu.memory_space<vmem>>, vector<16x1xf32>
    %c8_28 = arith.constant 8 : index
    %c0_29 = arith.constant 0 : index
    %69 = vector.load %arg3[%c8_28, %c0_29] : memref<49x256xf32, #tpu.memory_space<vmem>>, vector<1x256xf32>
    %70 = vector.broadcast %69 : vector<1x256xf32> to vector<16x256xf32>
    %71 = arith.mulf %67, %70 : vector<16x256xf32>
    %72 = vector.broadcast %68 : vector<16x1xf32> to vector<16x256xf32>
    %73 = arith.mulf %72, %71 : vector<16x256xf32>
    %74 = arith.addf %66, %73 : vector<16x256xf32>
    %c33_i32 = arith.constant 33 : i32
    %75 = tpu.dynamic_rotate %1 by %c33_i32 dim 1 : vector<16x256xf32>, i32 -> vector<16x256xf32>
    %c0_30 = arith.constant 0 : index
    %c9 = arith.constant 9 : index
    %76 = vector.load %arg2[%c0_30, %c9] : memref<16x49xf32, #tpu.memory_space<vmem>>, vector<16x1xf32>
    %c9_31 = arith.constant 9 : index
    %c0_32 = arith.constant 0 : index
    %77 = vector.load %arg3[%c9_31, %c0_32] : memref<49x256xf32, #tpu.memory_space<vmem>>, vector<1x256xf32>
    %78 = vector.broadcast %77 : vector<1x256xf32> to vector<16x256xf32>
    %79 = arith.mulf %75, %78 : vector<16x256xf32>
    %80 = vector.broadcast %76 : vector<16x1xf32> to vector<16x256xf32>
    %81 = arith.mulf %80, %79 : vector<16x256xf32>
    %82 = arith.addf %74, %81 : vector<16x256xf32>
    %c32_i32 = arith.constant 32 : i32
    %83 = tpu.dynamic_rotate %1 by %c32_i32 dim 1 : vector<16x256xf32>, i32 -> vector<16x256xf32>
    %c0_33 = arith.constant 0 : index
    %c10 = arith.constant 10 : index
    %84 = vector.load %arg2[%c0_33, %c10] : memref<16x49xf32, #tpu.memory_space<vmem>>, vector<16x1xf32>
    %c10_34 = arith.constant 10 : index
    %c0_35 = arith.constant 0 : index
    %85 = vector.load %arg3[%c10_34, %c0_35] : memref<49x256xf32, #tpu.memory_space<vmem>>, vector<1x256xf32>
    %86 = vector.broadcast %85 : vector<1x256xf32> to vector<16x256xf32>
    %87 = arith.mulf %83, %86 : vector<16x256xf32>
    %88 = vector.broadcast %84 : vector<16x1xf32> to vector<16x256xf32>
    %89 = arith.mulf %88, %87 : vector<16x256xf32>
    %90 = arith.addf %82, %89 : vector<16x256xf32>
    %c31_i32 = arith.constant 31 : i32
    %91 = tpu.dynamic_rotate %1 by %c31_i32 dim 1 : vector<16x256xf32>, i32 -> vector<16x256xf32>
    %c0_36 = arith.constant 0 : index
    %c11 = arith.constant 11 : index
    %92 = vector.load %arg2[%c0_36, %c11] : memref<16x49xf32, #tpu.memory_space<vmem>>, vector<16x1xf32>
    %c11_37 = arith.constant 11 : index
    %c0_38 = arith.constant 0 : index
    %93 = vector.load %arg3[%c11_37, %c0_38] : memref<49x256xf32, #tpu.memory_space<vmem>>, vector<1x256xf32>
    %94 = vector.broadcast %93 : vector<1x256xf32> to vector<16x256xf32>
    %95 = arith.mulf %91, %94 : vector<16x256xf32>
    %96 = vector.broadcast %92 : vector<16x1xf32> to vector<16x256xf32>
    %97 = arith.mulf %96, %95 : vector<16x256xf32>
    %98 = arith.addf %90, %97 : vector<16x256xf32>
    %c30_i32 = arith.constant 30 : i32
    %99 = tpu.dynamic_rotate %1 by %c30_i32 dim 1 : vector<16x256xf32>, i32 -> vector<16x256xf32>
    %c0_39 = arith.constant 0 : index
    %c12 = arith.constant 12 : index
    %100 = vector.load %arg2[%c0_39, %c12] : memref<16x49xf32, #tpu.memory_space<vmem>>, vector<16x1xf32>
    %c12_40 = arith.constant 12 : index
    %c0_41 = arith.constant 0 : index
    %101 = vector.load %arg3[%c12_40, %c0_41] : memref<49x256xf32, #tpu.memory_space<vmem>>, vector<1x256xf32>
    %102 = vector.broadcast %101 : vector<1x256xf32> to vector<16x256xf32>
    %103 = arith.mulf %99, %102 : vector<16x256xf32>
    %104 = vector.broadcast %100 : vector<16x1xf32> to vector<16x256xf32>
    %105 = arith.mulf %104, %103 : vector<16x256xf32>
    %106 = arith.addf %98, %105 : vector<16x256xf32>
    %c29_i32 = arith.constant 29 : i32
    %107 = tpu.dynamic_rotate %1 by %c29_i32 dim 1 : vector<16x256xf32>, i32 -> vector<16x256xf32>
    %c0_42 = arith.constant 0 : index
    %c13 = arith.constant 13 : index
    %108 = vector.load %arg2[%c0_42, %c13] : memref<16x49xf32, #tpu.memory_space<vmem>>, vector<16x1xf32>
    %c13_43 = arith.constant 13 : index
    %c0_44 = arith.constant 0 : index
    %109 = vector.load %arg3[%c13_43, %c0_44] : memref<49x256xf32, #tpu.memory_space<vmem>>, vector<1x256xf32>
    %110 = vector.broadcast %109 : vector<1x256xf32> to vector<16x256xf32>
    %111 = arith.mulf %107, %110 : vector<16x256xf32>
    %112 = vector.broadcast %108 : vector<16x1xf32> to vector<16x256xf32>
    %113 = arith.mulf %112, %111 : vector<16x256xf32>
    %114 = arith.addf %106, %113 : vector<16x256xf32>
    %c19_i32 = arith.constant 19 : i32
    %115 = tpu.dynamic_rotate %1 by %c19_i32 dim 1 : vector<16x256xf32>, i32 -> vector<16x256xf32>
    %c0_45 = arith.constant 0 : index
    %c14 = arith.constant 14 : index
    %116 = vector.load %arg2[%c0_45, %c14] : memref<16x49xf32, #tpu.memory_space<vmem>>, vector<16x1xf32>
    %c14_46 = arith.constant 14 : index
    %c0_47 = arith.constant 0 : index
    %117 = vector.load %arg3[%c14_46, %c0_47] : memref<49x256xf32, #tpu.memory_space<vmem>>, vector<1x256xf32>
    %118 = vector.broadcast %117 : vector<1x256xf32> to vector<16x256xf32>
    %119 = arith.mulf %115, %118 : vector<16x256xf32>
    %120 = vector.broadcast %116 : vector<16x1xf32> to vector<16x256xf32>
    %121 = arith.mulf %120, %119 : vector<16x256xf32>
    %122 = arith.addf %114, %121 : vector<16x256xf32>
    %c18_i32 = arith.constant 18 : i32
    %123 = tpu.dynamic_rotate %1 by %c18_i32 dim 1 : vector<16x256xf32>, i32 -> vector<16x256xf32>
    %c0_48 = arith.constant 0 : index
    %c15 = arith.constant 15 : index
    %124 = vector.load %arg2[%c0_48, %c15] : memref<16x49xf32, #tpu.memory_space<vmem>>, vector<16x1xf32>
    %c15_49 = arith.constant 15 : index
    %c0_50 = arith.constant 0 : index
    %125 = vector.load %arg3[%c15_49, %c0_50] : memref<49x256xf32, #tpu.memory_space<vmem>>, vector<1x256xf32>
    %126 = vector.broadcast %125 : vector<1x256xf32> to vector<16x256xf32>
    %127 = arith.mulf %123, %126 : vector<16x256xf32>
    %128 = vector.broadcast %124 : vector<16x1xf32> to vector<16x256xf32>
    %129 = arith.mulf %128, %127 : vector<16x256xf32>
    %130 = arith.addf %122, %129 : vector<16x256xf32>
    %c17_i32 = arith.constant 17 : i32
    %131 = tpu.dynamic_rotate %1 by %c17_i32 dim 1 : vector<16x256xf32>, i32 -> vector<16x256xf32>
    %c0_51 = arith.constant 0 : index
    %c16 = arith.constant 16 : index
    %132 = vector.load %arg2[%c0_51, %c16] : memref<16x49xf32, #tpu.memory_space<vmem>>, vector<16x1xf32>
    %c16_52 = arith.constant 16 : index
    %c0_53 = arith.constant 0 : index
    %133 = vector.load %arg3[%c16_52, %c0_53] : memref<49x256xf32, #tpu.memory_space<vmem>>, vector<1x256xf32>
    %134 = vector.broadcast %133 : vector<1x256xf32> to vector<16x256xf32>
    %135 = arith.mulf %131, %134 : vector<16x256xf32>
    %136 = vector.broadcast %132 : vector<16x1xf32> to vector<16x256xf32>
    %137 = arith.mulf %136, %135 : vector<16x256xf32>
    %138 = arith.addf %130, %137 : vector<16x256xf32>
    %c16_i32 = arith.constant 16 : i32
    %139 = tpu.dynamic_rotate %1 by %c16_i32 dim 1 : vector<16x256xf32>, i32 -> vector<16x256xf32>
    %c0_54 = arith.constant 0 : index
    %c17 = arith.constant 17 : index
    %140 = vector.load %arg2[%c0_54, %c17] : memref<16x49xf32, #tpu.memory_space<vmem>>, vector<16x1xf32>
    %c17_55 = arith.constant 17 : index
    %c0_56 = arith.constant 0 : index
    %141 = vector.load %arg3[%c17_55, %c0_56] : memref<49x256xf32, #tpu.memory_space<vmem>>, vector<1x256xf32>
    %142 = vector.broadcast %141 : vector<1x256xf32> to vector<16x256xf32>
    %143 = arith.mulf %139, %142 : vector<16x256xf32>
    %144 = vector.broadcast %140 : vector<16x1xf32> to vector<16x256xf32>
    %145 = arith.mulf %144, %143 : vector<16x256xf32>
    %146 = arith.addf %138, %145 : vector<16x256xf32>
    %c15_i32 = arith.constant 15 : i32
    %147 = tpu.dynamic_rotate %1 by %c15_i32 dim 1 : vector<16x256xf32>, i32 -> vector<16x256xf32>
    %c0_57 = arith.constant 0 : index
    %c18 = arith.constant 18 : index
    %148 = vector.load %arg2[%c0_57, %c18] : memref<16x49xf32, #tpu.memory_space<vmem>>, vector<16x1xf32>
    %c18_58 = arith.constant 18 : index
    %c0_59 = arith.constant 0 : index
    %149 = vector.load %arg3[%c18_58, %c0_59] : memref<49x256xf32, #tpu.memory_space<vmem>>, vector<1x256xf32>
    %150 = vector.broadcast %149 : vector<1x256xf32> to vector<16x256xf32>
    %151 = arith.mulf %147, %150 : vector<16x256xf32>
    %152 = vector.broadcast %148 : vector<16x1xf32> to vector<16x256xf32>
    %153 = arith.mulf %152, %151 : vector<16x256xf32>
    %154 = arith.addf %146, %153 : vector<16x256xf32>
    %c14_i32 = arith.constant 14 : i32
    %155 = tpu.dynamic_rotate %1 by %c14_i32 dim 1 : vector<16x256xf32>, i32 -> vector<16x256xf32>
    %c0_60 = arith.constant 0 : index
    %c19 = arith.constant 19 : index
    %156 = vector.load %arg2[%c0_60, %c19] : memref<16x49xf32, #tpu.memory_space<vmem>>, vector<16x1xf32>
    %c19_61 = arith.constant 19 : index
    %c0_62 = arith.constant 0 : index
    %157 = vector.load %arg3[%c19_61, %c0_62] : memref<49x256xf32, #tpu.memory_space<vmem>>, vector<1x256xf32>
    %158 = vector.broadcast %157 : vector<1x256xf32> to vector<16x256xf32>
    %159 = arith.mulf %155, %158 : vector<16x256xf32>
    %160 = vector.broadcast %156 : vector<16x1xf32> to vector<16x256xf32>
    %161 = arith.mulf %160, %159 : vector<16x256xf32>
    %162 = arith.addf %154, %161 : vector<16x256xf32>
    %c13_i32 = arith.constant 13 : i32
    %163 = tpu.dynamic_rotate %1 by %c13_i32 dim 1 : vector<16x256xf32>, i32 -> vector<16x256xf32>
    %c0_63 = arith.constant 0 : index
    %c20 = arith.constant 20 : index
    %164 = vector.load %arg2[%c0_63, %c20] : memref<16x49xf32, #tpu.memory_space<vmem>>, vector<16x1xf32>
    %c20_64 = arith.constant 20 : index
    %c0_65 = arith.constant 0 : index
    %165 = vector.load %arg3[%c20_64, %c0_65] : memref<49x256xf32, #tpu.memory_space<vmem>>, vector<1x256xf32>
    %166 = vector.broadcast %165 : vector<1x256xf32> to vector<16x256xf32>
    %167 = arith.mulf %163, %166 : vector<16x256xf32>
    %168 = vector.broadcast %164 : vector<16x1xf32> to vector<16x256xf32>
    %169 = arith.mulf %168, %167 : vector<16x256xf32>
    %170 = arith.addf %162, %169 : vector<16x256xf32>
    %c3_i32 = arith.constant 3 : i32
    %171 = tpu.dynamic_rotate %1 by %c3_i32 dim 1 : vector<16x256xf32>, i32 -> vector<16x256xf32>
    %c0_66 = arith.constant 0 : index
    %c21 = arith.constant 21 : index
    %172 = vector.load %arg2[%c0_66, %c21] : memref<16x49xf32, #tpu.memory_space<vmem>>, vector<16x1xf32>
    %c21_67 = arith.constant 21 : index
    %c0_68 = arith.constant 0 : index
    %173 = vector.load %arg3[%c21_67, %c0_68] : memref<49x256xf32, #tpu.memory_space<vmem>>, vector<1x256xf32>
    %174 = vector.broadcast %173 : vector<1x256xf32> to vector<16x256xf32>
    %175 = arith.mulf %171, %174 : vector<16x256xf32>
    %176 = vector.broadcast %172 : vector<16x1xf32> to vector<16x256xf32>
    %177 = arith.mulf %176, %175 : vector<16x256xf32>
    %178 = arith.addf %170, %177 : vector<16x256xf32>
    %c2_i32 = arith.constant 2 : i32
    %179 = tpu.dynamic_rotate %1 by %c2_i32 dim 1 : vector<16x256xf32>, i32 -> vector<16x256xf32>
    %c0_69 = arith.constant 0 : index
    %c22 = arith.constant 22 : index
    %180 = vector.load %arg2[%c0_69, %c22] : memref<16x49xf32, #tpu.memory_space<vmem>>, vector<16x1xf32>
    %c22_70 = arith.constant 22 : index
    %c0_71 = arith.constant 0 : index
    %181 = vector.load %arg3[%c22_70, %c0_71] : memref<49x256xf32, #tpu.memory_space<vmem>>, vector<1x256xf32>
    %182 = vector.broadcast %181 : vector<1x256xf32> to vector<16x256xf32>
    %183 = arith.mulf %179, %182 : vector<16x256xf32>
    %184 = vector.broadcast %180 : vector<16x1xf32> to vector<16x256xf32>
    %185 = arith.mulf %184, %183 : vector<16x256xf32>
    %186 = arith.addf %178, %185 : vector<16x256xf32>
    %c1_i32 = arith.constant 1 : i32
    %187 = tpu.dynamic_rotate %1 by %c1_i32 dim 1 : vector<16x256xf32>, i32 -> vector<16x256xf32>
    %c0_72 = arith.constant 0 : index
    %c23 = arith.constant 23 : index
    %188 = vector.load %arg2[%c0_72, %c23] : memref<16x49xf32, #tpu.memory_space<vmem>>, vector<16x1xf32>
    %c23_73 = arith.constant 23 : index
    %c0_74 = arith.constant 0 : index
    %189 = vector.load %arg3[%c23_73, %c0_74] : memref<49x256xf32, #tpu.memory_space<vmem>>, vector<1x256xf32>
    %190 = vector.broadcast %189 : vector<1x256xf32> to vector<16x256xf32>
    %191 = arith.mulf %187, %190 : vector<16x256xf32>
    %192 = vector.broadcast %188 : vector<16x1xf32> to vector<16x256xf32>
    %193 = arith.mulf %192, %191 : vector<16x256xf32>
    %194 = arith.addf %186, %193 : vector<16x256xf32>
    %c0_75 = arith.constant 0 : index
    %c24 = arith.constant 24 : index
    %195 = vector.load %arg2[%c0_75, %c24] : memref<16x49xf32, #tpu.memory_space<vmem>>, vector<16x1xf32>
    %c24_76 = arith.constant 24 : index
    %c0_77 = arith.constant 0 : index
    %196 = vector.load %arg3[%c24_76, %c0_77] : memref<49x256xf32, #tpu.memory_space<vmem>>, vector<1x256xf32>
    %197 = vector.broadcast %196 : vector<1x256xf32> to vector<16x256xf32>
    %198 = arith.mulf %1, %197 : vector<16x256xf32>
    %199 = vector.broadcast %195 : vector<16x1xf32> to vector<16x256xf32>
    %200 = arith.mulf %199, %198 : vector<16x256xf32>
    %201 = arith.addf %194, %200 : vector<16x256xf32>
    %c255_i32 = arith.constant 255 : i32
    %202 = tpu.dynamic_rotate %1 by %c255_i32 dim 1 : vector<16x256xf32>, i32 -> vector<16x256xf32>
    %c0_78 = arith.constant 0 : index
    %c25 = arith.constant 25 : index
    %203 = vector.load %arg2[%c0_78, %c25] : memref<16x49xf32, #tpu.memory_space<vmem>>, vector<16x1xf32>
    %c25_79 = arith.constant 25 : index
    %c0_80 = arith.constant 0 : index
    %204 = vector.load %arg3[%c25_79, %c0_80] : memref<49x256xf32, #tpu.memory_space<vmem>>, vector<1x256xf32>
    %205 = vector.broadcast %204 : vector<1x256xf32> to vector<16x256xf32>
    %206 = arith.mulf %202, %205 : vector<16x256xf32>
    %207 = vector.broadcast %203 : vector<16x1xf32> to vector<16x256xf32>
    %208 = arith.mulf %207, %206 : vector<16x256xf32>
    %209 = arith.addf %201, %208 : vector<16x256xf32>
    %c254_i32 = arith.constant 254 : i32
    %210 = tpu.dynamic_rotate %1 by %c254_i32 dim 1 : vector<16x256xf32>, i32 -> vector<16x256xf32>
    %c0_81 = arith.constant 0 : index
    %c26 = arith.constant 26 : index
    %211 = vector.load %arg2[%c0_81, %c26] : memref<16x49xf32, #tpu.memory_space<vmem>>, vector<16x1xf32>
    %c26_82 = arith.constant 26 : index
    %c0_83 = arith.constant 0 : index
    %212 = vector.load %arg3[%c26_82, %c0_83] : memref<49x256xf32, #tpu.memory_space<vmem>>, vector<1x256xf32>
    %213 = vector.broadcast %212 : vector<1x256xf32> to vector<16x256xf32>
    %214 = arith.mulf %210, %213 : vector<16x256xf32>
    %215 = vector.broadcast %211 : vector<16x1xf32> to vector<16x256xf32>
    %216 = arith.mulf %215, %214 : vector<16x256xf32>
    %217 = arith.addf %209, %216 : vector<16x256xf32>
    %c253_i32 = arith.constant 253 : i32
    %218 = tpu.dynamic_rotate %1 by %c253_i32 dim 1 : vector<16x256xf32>, i32 -> vector<16x256xf32>
    %c0_84 = arith.constant 0 : index
    %c27 = arith.constant 27 : index
    %219 = vector.load %arg2[%c0_84, %c27] : memref<16x49xf32, #tpu.memory_space<vmem>>, vector<16x1xf32>
    %c27_85 = arith.constant 27 : index
    %c0_86 = arith.constant 0 : index
    %220 = vector.load %arg3[%c27_85, %c0_86] : memref<49x256xf32, #tpu.memory_space<vmem>>, vector<1x256xf32>
    %221 = vector.broadcast %220 : vector<1x256xf32> to vector<16x256xf32>
    %222 = arith.mulf %218, %221 : vector<16x256xf32>
    %223 = vector.broadcast %219 : vector<16x1xf32> to vector<16x256xf32>
    %224 = arith.mulf %223, %222 : vector<16x256xf32>
    %225 = arith.addf %217, %224 : vector<16x256xf32>
    %c243_i32 = arith.constant 243 : i32
    %226 = tpu.dynamic_rotate %1 by %c243_i32 dim 1 : vector<16x256xf32>, i32 -> vector<16x256xf32>
    %c0_87 = arith.constant 0 : index
    %c28 = arith.constant 28 : index
    %227 = vector.load %arg2[%c0_87, %c28] : memref<16x49xf32, #tpu.memory_space<vmem>>, vector<16x1xf32>
    %c28_88 = arith.constant 28 : index
    %c0_89 = arith.constant 0 : index
    %228 = vector.load %arg3[%c28_88, %c0_89] : memref<49x256xf32, #tpu.memory_space<vmem>>, vector<1x256xf32>
    %229 = vector.broadcast %228 : vector<1x256xf32> to vector<16x256xf32>
    %230 = arith.mulf %226, %229 : vector<16x256xf32>
    %231 = vector.broadcast %227 : vector<16x1xf32> to vector<16x256xf32>
    %232 = arith.mulf %231, %230 : vector<16x256xf32>
    %233 = arith.addf %225, %232 : vector<16x256xf32>
    %c242_i32 = arith.constant 242 : i32
    %234 = tpu.dynamic_rotate %1 by %c242_i32 dim 1 : vector<16x256xf32>, i32 -> vector<16x256xf32>
    %c0_90 = arith.constant 0 : index
    %c29 = arith.constant 29 : index
    %235 = vector.load %arg2[%c0_90, %c29] : memref<16x49xf32, #tpu.memory_space<vmem>>, vector<16x1xf32>
    %c29_91 = arith.constant 29 : index
    %c0_92 = arith.constant 0 : index
    %236 = vector.load %arg3[%c29_91, %c0_92] : memref<49x256xf32, #tpu.memory_space<vmem>>, vector<1x256xf32>
    %237 = vector.broadcast %236 : vector<1x256xf32> to vector<16x256xf32>
    %238 = arith.mulf %234, %237 : vector<16x256xf32>
    %239 = vector.broadcast %235 : vector<16x1xf32> to vector<16x256xf32>
    %240 = arith.mulf %239, %238 : vector<16x256xf32>
    %241 = arith.addf %233, %240 : vector<16x256xf32>
    %c241_i32 = arith.constant 241 : i32
    %242 = tpu.dynamic_rotate %1 by %c241_i32 dim 1 : vector<16x256xf32>, i32 -> vector<16x256xf32>
    %c0_93 = arith.constant 0 : index
    %c30 = arith.constant 30 : index
    %243 = vector.load %arg2[%c0_93, %c30] : memref<16x49xf32, #tpu.memory_space<vmem>>, vector<16x1xf32>
    %c30_94 = arith.constant 30 : index
    %c0_95 = arith.constant 0 : index
    %244 = vector.load %arg3[%c30_94, %c0_95] : memref<49x256xf32, #tpu.memory_space<vmem>>, vector<1x256xf32>
    %245 = vector.broadcast %244 : vector<1x256xf32> to vector<16x256xf32>
    %246 = arith.mulf %242, %245 : vector<16x256xf32>
    %247 = vector.broadcast %243 : vector<16x1xf32> to vector<16x256xf32>
    %248 = arith.mulf %247, %246 : vector<16x256xf32>
    %249 = arith.addf %241, %248 : vector<16x256xf32>
    %c240_i32 = arith.constant 240 : i32
    %250 = tpu.dynamic_rotate %1 by %c240_i32 dim 1 : vector<16x256xf32>, i32 -> vector<16x256xf32>
    %c0_96 = arith.constant 0 : index
    %c31 = arith.constant 31 : index
    %251 = vector.load %arg2[%c0_96, %c31] : memref<16x49xf32, #tpu.memory_space<vmem>>, vector<16x1xf32>
    %c31_97 = arith.constant 31 : index
    %c0_98 = arith.constant 0 : index
    %252 = vector.load %arg3[%c31_97, %c0_98] : memref<49x256xf32, #tpu.memory_space<vmem>>, vector<1x256xf32>
    %253 = vector.broadcast %252 : vector<1x256xf32> to vector<16x256xf32>
    %254 = arith.mulf %250, %253 : vector<16x256xf32>
    %255 = vector.broadcast %251 : vector<16x1xf32> to vector<16x256xf32>
    %256 = arith.mulf %255, %254 : vector<16x256xf32>
    %257 = arith.addf %249, %256 : vector<16x256xf32>
    %c239_i32 = arith.constant 239 : i32
    %258 = tpu.dynamic_rotate %1 by %c239_i32 dim 1 : vector<16x256xf32>, i32 -> vector<16x256xf32>
    %c0_99 = arith.constant 0 : index
    %c32 = arith.constant 32 : index
    %259 = vector.load %arg2[%c0_99, %c32] : memref<16x49xf32, #tpu.memory_space<vmem>>, vector<16x1xf32>
    %c32_100 = arith.constant 32 : index
    %c0_101 = arith.constant 0 : index
    %260 = vector.load %arg3[%c32_100, %c0_101] : memref<49x256xf32, #tpu.memory_space<vmem>>, vector<1x256xf32>
    %261 = vector.broadcast %260 : vector<1x256xf32> to vector<16x256xf32>
    %262 = arith.mulf %258, %261 : vector<16x256xf32>
    %263 = vector.broadcast %259 : vector<16x1xf32> to vector<16x256xf32>
    %264 = arith.mulf %263, %262 : vector<16x256xf32>
    %265 = arith.addf %257, %264 : vector<16x256xf32>
    %c238_i32 = arith.constant 238 : i32
    %266 = tpu.dynamic_rotate %1 by %c238_i32 dim 1 : vector<16x256xf32>, i32 -> vector<16x256xf32>
    %c0_102 = arith.constant 0 : index
    %c33 = arith.constant 33 : index
    %267 = vector.load %arg2[%c0_102, %c33] : memref<16x49xf32, #tpu.memory_space<vmem>>, vector<16x1xf32>
    %c33_103 = arith.constant 33 : index
    %c0_104 = arith.constant 0 : index
    %268 = vector.load %arg3[%c33_103, %c0_104] : memref<49x256xf32, #tpu.memory_space<vmem>>, vector<1x256xf32>
    %269 = vector.broadcast %268 : vector<1x256xf32> to vector<16x256xf32>
    %270 = arith.mulf %266, %269 : vector<16x256xf32>
    %271 = vector.broadcast %267 : vector<16x1xf32> to vector<16x256xf32>
    %272 = arith.mulf %271, %270 : vector<16x256xf32>
    %273 = arith.addf %265, %272 : vector<16x256xf32>
    %c237_i32 = arith.constant 237 : i32
    %274 = tpu.dynamic_rotate %1 by %c237_i32 dim 1 : vector<16x256xf32>, i32 -> vector<16x256xf32>
    %c0_105 = arith.constant 0 : index
    %c34 = arith.constant 34 : index
    %275 = vector.load %arg2[%c0_105, %c34] : memref<16x49xf32, #tpu.memory_space<vmem>>, vector<16x1xf32>
    %c34_106 = arith.constant 34 : index
    %c0_107 = arith.constant 0 : index
    %276 = vector.load %arg3[%c34_106, %c0_107] : memref<49x256xf32, #tpu.memory_space<vmem>>, vector<1x256xf32>
    %277 = vector.broadcast %276 : vector<1x256xf32> to vector<16x256xf32>
    %278 = arith.mulf %274, %277 : vector<16x256xf32>
    %279 = vector.broadcast %275 : vector<16x1xf32> to vector<16x256xf32>
    %280 = arith.mulf %279, %278 : vector<16x256xf32>
    %281 = arith.addf %273, %280 : vector<16x256xf32>
    %c227_i32 = arith.constant 227 : i32
    %282 = tpu.dynamic_rotate %1 by %c227_i32 dim 1 : vector<16x256xf32>, i32 -> vector<16x256xf32>
    %c0_108 = arith.constant 0 : index
    %c35 = arith.constant 35 : index
    %283 = vector.load %arg2[%c0_108, %c35] : memref<16x49xf32, #tpu.memory_space<vmem>>, vector<16x1xf32>
    %c35_109 = arith.constant 35 : index
    %c0_110 = arith.constant 0 : index
    %284 = vector.load %arg3[%c35_109, %c0_110] : memref<49x256xf32, #tpu.memory_space<vmem>>, vector<1x256xf32>
    %285 = vector.broadcast %284 : vector<1x256xf32> to vector<16x256xf32>
    %286 = arith.mulf %282, %285 : vector<16x256xf32>
    %287 = vector.broadcast %283 : vector<16x1xf32> to vector<16x256xf32>
    %288 = arith.mulf %287, %286 : vector<16x256xf32>
    %289 = arith.addf %281, %288 : vector<16x256xf32>
    %c226_i32 = arith.constant 226 : i32
    %290 = tpu.dynamic_rotate %1 by %c226_i32 dim 1 : vector<16x256xf32>, i32 -> vector<16x256xf32>
    %c0_111 = arith.constant 0 : index
    %c36 = arith.constant 36 : index
    %291 = vector.load %arg2[%c0_111, %c36] : memref<16x49xf32, #tpu.memory_space<vmem>>, vector<16x1xf32>
    %c36_112 = arith.constant 36 : index
    %c0_113 = arith.constant 0 : index
    %292 = vector.load %arg3[%c36_112, %c0_113] : memref<49x256xf32, #tpu.memory_space<vmem>>, vector<1x256xf32>
    %293 = vector.broadcast %292 : vector<1x256xf32> to vector<16x256xf32>
    %294 = arith.mulf %290, %293 : vector<16x256xf32>
    %295 = vector.broadcast %291 : vector<16x1xf32> to vector<16x256xf32>
    %296 = arith.mulf %295, %294 : vector<16x256xf32>
    %297 = arith.addf %289, %296 : vector<16x256xf32>
    %c225_i32 = arith.constant 225 : i32
    %298 = tpu.dynamic_rotate %1 by %c225_i32 dim 1 : vector<16x256xf32>, i32 -> vector<16x256xf32>
    %c0_114 = arith.constant 0 : index
    %c37 = arith.constant 37 : index
    %299 = vector.load %arg2[%c0_114, %c37] : memref<16x49xf32, #tpu.memory_space<vmem>>, vector<16x1xf32>
    %c37_115 = arith.constant 37 : index
    %c0_116 = arith.constant 0 : index
    %300 = vector.load %arg3[%c37_115, %c0_116] : memref<49x256xf32, #tpu.memory_space<vmem>>, vector<1x256xf32>
    %301 = vector.broadcast %300 : vector<1x256xf32> to vector<16x256xf32>
    %302 = arith.mulf %298, %301 : vector<16x256xf32>
    %303 = vector.broadcast %299 : vector<16x1xf32> to vector<16x256xf32>
    %304 = arith.mulf %303, %302 : vector<16x256xf32>
    %305 = arith.addf %297, %304 : vector<16x256xf32>
    %c224_i32 = arith.constant 224 : i32
    %306 = tpu.dynamic_rotate %1 by %c224_i32 dim 1 : vector<16x256xf32>, i32 -> vector<16x256xf32>
    %c0_117 = arith.constant 0 : index
    %c38 = arith.constant 38 : index
    %307 = vector.load %arg2[%c0_117, %c38] : memref<16x49xf32, #tpu.memory_space<vmem>>, vector<16x1xf32>
    %c38_118 = arith.constant 38 : index
    %c0_119 = arith.constant 0 : index
    %308 = vector.load %arg3[%c38_118, %c0_119] : memref<49x256xf32, #tpu.memory_space<vmem>>, vector<1x256xf32>
    %309 = vector.broadcast %308 : vector<1x256xf32> to vector<16x256xf32>
    %310 = arith.mulf %306, %309 : vector<16x256xf32>
    %311 = vector.broadcast %307 : vector<16x1xf32> to vector<16x256xf32>
    %312 = arith.mulf %311, %310 : vector<16x256xf32>
    %313 = arith.addf %305, %312 : vector<16x256xf32>
    %c223_i32 = arith.constant 223 : i32
    %314 = tpu.dynamic_rotate %1 by %c223_i32 dim 1 : vector<16x256xf32>, i32 -> vector<16x256xf32>
    %c0_120 = arith.constant 0 : index
    %c39 = arith.constant 39 : index
    %315 = vector.load %arg2[%c0_120, %c39] : memref<16x49xf32, #tpu.memory_space<vmem>>, vector<16x1xf32>
    %c39_121 = arith.constant 39 : index
    %c0_122 = arith.constant 0 : index
    %316 = vector.load %arg3[%c39_121, %c0_122] : memref<49x256xf32, #tpu.memory_space<vmem>>, vector<1x256xf32>
    %317 = vector.broadcast %316 : vector<1x256xf32> to vector<16x256xf32>
    %318 = arith.mulf %314, %317 : vector<16x256xf32>
    %319 = vector.broadcast %315 : vector<16x1xf32> to vector<16x256xf32>
    %320 = arith.mulf %319, %318 : vector<16x256xf32>
    %321 = arith.addf %313, %320 : vector<16x256xf32>
    %c222_i32 = arith.constant 222 : i32
    %322 = tpu.dynamic_rotate %1 by %c222_i32 dim 1 : vector<16x256xf32>, i32 -> vector<16x256xf32>
    %c0_123 = arith.constant 0 : index
    %c40 = arith.constant 40 : index
    %323 = vector.load %arg2[%c0_123, %c40] : memref<16x49xf32, #tpu.memory_space<vmem>>, vector<16x1xf32>
    %c40_124 = arith.constant 40 : index
    %c0_125 = arith.constant 0 : index
    %324 = vector.load %arg3[%c40_124, %c0_125] : memref<49x256xf32, #tpu.memory_space<vmem>>, vector<1x256xf32>
    %325 = vector.broadcast %324 : vector<1x256xf32> to vector<16x256xf32>
    %326 = arith.mulf %322, %325 : vector<16x256xf32>
    %327 = vector.broadcast %323 : vector<16x1xf32> to vector<16x256xf32>
    %328 = arith.mulf %327, %326 : vector<16x256xf32>
    %329 = arith.addf %321, %328 : vector<16x256xf32>
    %c221_i32 = arith.constant 221 : i32
    %330 = tpu.dynamic_rotate %1 by %c221_i32 dim 1 : vector<16x256xf32>, i32 -> vector<16x256xf32>
    %c0_126 = arith.constant 0 : index
    %c41 = arith.constant 41 : index
    %331 = vector.load %arg2[%c0_126, %c41] : memref<16x49xf32, #tpu.memory_space<vmem>>, vector<16x1xf32>
    %c41_127 = arith.constant 41 : index
    %c0_128 = arith.constant 0 : index
    %332 = vector.load %arg3[%c41_127, %c0_128] : memref<49x256xf32, #tpu.memory_space<vmem>>, vector<1x256xf32>
    %333 = vector.broadcast %332 : vector<1x256xf32> to vector<16x256xf32>
    %334 = arith.mulf %330, %333 : vector<16x256xf32>
    %335 = vector.broadcast %331 : vector<16x1xf32> to vector<16x256xf32>
    %336 = arith.mulf %335, %334 : vector<16x256xf32>
    %337 = arith.addf %329, %336 : vector<16x256xf32>
    %c211_i32 = arith.constant 211 : i32
    %338 = tpu.dynamic_rotate %1 by %c211_i32 dim 1 : vector<16x256xf32>, i32 -> vector<16x256xf32>
    %c0_129 = arith.constant 0 : index
    %c42 = arith.constant 42 : index
    %339 = vector.load %arg2[%c0_129, %c42] : memref<16x49xf32, #tpu.memory_space<vmem>>, vector<16x1xf32>
    %c42_130 = arith.constant 42 : index
    %c0_131 = arith.constant 0 : index
    %340 = vector.load %arg3[%c42_130, %c0_131] : memref<49x256xf32, #tpu.memory_space<vmem>>, vector<1x256xf32>
    %341 = vector.broadcast %340 : vector<1x256xf32> to vector<16x256xf32>
    %342 = arith.mulf %338, %341 : vector<16x256xf32>
    %343 = vector.broadcast %339 : vector<16x1xf32> to vector<16x256xf32>
    %344 = arith.mulf %343, %342 : vector<16x256xf32>
    %345 = arith.addf %337, %344 : vector<16x256xf32>
    %c210_i32 = arith.constant 210 : i32
    %346 = tpu.dynamic_rotate %1 by %c210_i32 dim 1 : vector<16x256xf32>, i32 -> vector<16x256xf32>
    %c0_132 = arith.constant 0 : index
    %c43 = arith.constant 43 : index
    %347 = vector.load %arg2[%c0_132, %c43] : memref<16x49xf32, #tpu.memory_space<vmem>>, vector<16x1xf32>
    %c43_133 = arith.constant 43 : index
    %c0_134 = arith.constant 0 : index
    %348 = vector.load %arg3[%c43_133, %c0_134] : memref<49x256xf32, #tpu.memory_space<vmem>>, vector<1x256xf32>
    %349 = vector.broadcast %348 : vector<1x256xf32> to vector<16x256xf32>
    %350 = arith.mulf %346, %349 : vector<16x256xf32>
    %351 = vector.broadcast %347 : vector<16x1xf32> to vector<16x256xf32>
    %352 = arith.mulf %351, %350 : vector<16x256xf32>
    %353 = arith.addf %345, %352 : vector<16x256xf32>
    %c209_i32 = arith.constant 209 : i32
    %354 = tpu.dynamic_rotate %1 by %c209_i32 dim 1 : vector<16x256xf32>, i32 -> vector<16x256xf32>
    %c0_135 = arith.constant 0 : index
    %c44 = arith.constant 44 : index
    %355 = vector.load %arg2[%c0_135, %c44] : memref<16x49xf32, #tpu.memory_space<vmem>>, vector<16x1xf32>
    %c44_136 = arith.constant 44 : index
    %c0_137 = arith.constant 0 : index
    %356 = vector.load %arg3[%c44_136, %c0_137] : memref<49x256xf32, #tpu.memory_space<vmem>>, vector<1x256xf32>
    %357 = vector.broadcast %356 : vector<1x256xf32> to vector<16x256xf32>
    %358 = arith.mulf %354, %357 : vector<16x256xf32>
    %359 = vector.broadcast %355 : vector<16x1xf32> to vector<16x256xf32>
    %360 = arith.mulf %359, %358 : vector<16x256xf32>
    %361 = arith.addf %353, %360 : vector<16x256xf32>
    %c208_i32 = arith.constant 208 : i32
    %362 = tpu.dynamic_rotate %1 by %c208_i32 dim 1 : vector<16x256xf32>, i32 -> vector<16x256xf32>
    %c0_138 = arith.constant 0 : index
    %c45 = arith.constant 45 : index
    %363 = vector.load %arg2[%c0_138, %c45] : memref<16x49xf32, #tpu.memory_space<vmem>>, vector<16x1xf32>
    %c45_139 = arith.constant 45 : index
    %c0_140 = arith.constant 0 : index
    %364 = vector.load %arg3[%c45_139, %c0_140] : memref<49x256xf32, #tpu.memory_space<vmem>>, vector<1x256xf32>
    %365 = vector.broadcast %364 : vector<1x256xf32> to vector<16x256xf32>
    %366 = arith.mulf %362, %365 : vector<16x256xf32>
    %367 = vector.broadcast %363 : vector<16x1xf32> to vector<16x256xf32>
    %368 = arith.mulf %367, %366 : vector<16x256xf32>
    %369 = arith.addf %361, %368 : vector<16x256xf32>
    %c207_i32 = arith.constant 207 : i32
    %370 = tpu.dynamic_rotate %1 by %c207_i32 dim 1 : vector<16x256xf32>, i32 -> vector<16x256xf32>
    %c0_141 = arith.constant 0 : index
    %c46 = arith.constant 46 : index
    %371 = vector.load %arg2[%c0_141, %c46] : memref<16x49xf32, #tpu.memory_space<vmem>>, vector<16x1xf32>
    %c46_142 = arith.constant 46 : index
    %c0_143 = arith.constant 0 : index
    %372 = vector.load %arg3[%c46_142, %c0_143] : memref<49x256xf32, #tpu.memory_space<vmem>>, vector<1x256xf32>
    %373 = vector.broadcast %372 : vector<1x256xf32> to vector<16x256xf32>
    %374 = arith.mulf %370, %373 : vector<16x256xf32>
    %375 = vector.broadcast %371 : vector<16x1xf32> to vector<16x256xf32>
    %376 = arith.mulf %375, %374 : vector<16x256xf32>
    %377 = arith.addf %369, %376 : vector<16x256xf32>
    %c206_i32 = arith.constant 206 : i32
    %378 = tpu.dynamic_rotate %1 by %c206_i32 dim 1 : vector<16x256xf32>, i32 -> vector<16x256xf32>
    %c0_144 = arith.constant 0 : index
    %c47 = arith.constant 47 : index
    %379 = vector.load %arg2[%c0_144, %c47] : memref<16x49xf32, #tpu.memory_space<vmem>>, vector<16x1xf32>
    %c47_145 = arith.constant 47 : index
    %c0_146 = arith.constant 0 : index
    %380 = vector.load %arg3[%c47_145, %c0_146] : memref<49x256xf32, #tpu.memory_space<vmem>>, vector<1x256xf32>
    %381 = vector.broadcast %380 : vector<1x256xf32> to vector<16x256xf32>
    %382 = arith.mulf %378, %381 : vector<16x256xf32>
    %383 = vector.broadcast %379 : vector<16x1xf32> to vector<16x256xf32>
    %384 = arith.mulf %383, %382 : vector<16x256xf32>
    %385 = arith.addf %377, %384 : vector<16x256xf32>
    %c205_i32 = arith.constant 205 : i32
    %386 = tpu.dynamic_rotate %1 by %c205_i32 dim 1 : vector<16x256xf32>, i32 -> vector<16x256xf32>
    %c0_147 = arith.constant 0 : index
    %c48 = arith.constant 48 : index
    %387 = vector.load %arg2[%c0_147, %c48] : memref<16x49xf32, #tpu.memory_space<vmem>>, vector<16x1xf32>
    %c48_148 = arith.constant 48 : index
    %c0_149 = arith.constant 0 : index
    %388 = vector.load %arg3[%c48_148, %c0_149] : memref<49x256xf32, #tpu.memory_space<vmem>>, vector<1x256xf32>
    %389 = vector.broadcast %388 : vector<1x256xf32> to vector<16x256xf32>
    %390 = arith.mulf %386, %389 : vector<16x256xf32>
    %391 = vector.broadcast %387 : vector<16x1xf32> to vector<16x256xf32>
    %392 = arith.mulf %391, %390 : vector<16x256xf32>
    %393 = arith.addf %385, %392 : vector<16x256xf32>
    %c0_150 = arith.constant 0 : index
    %c0_151 = arith.constant 0 : index
    %394 = vector.load %arg4[%c0_150, %c0_151] : memref<16x1xf32, #tpu.memory_space<vmem>>, vector<16x1xf32>
    %395 = vector.broadcast %394 : vector<16x1xf32> to vector<16x256xf32>
    %396 = arith.addf %393, %395 : vector<16x256xf32>
    %cst_152 = arith.constant 5.000000e-01 : f32
    %397 = vector.broadcast %cst_152 : f32 to vector<16x256xf32>
    %398 = arith.mulf %397, %396 : vector<16x256xf32>
    %cst_153 = arith.constant 0.707106769 : f32
    %399 = vector.broadcast %cst_153 : f32 to vector<16x256xf32>
    %400 = arith.mulf %396, %399 : vector<16x256xf32>
    %cst_154 = arith.constant -4.000000e+00 : f32
    %cst_155 = arith.constant 4.000000e+00 : f32
    %401 = vector.broadcast %cst_154 : f32 to vector<16x256xf32>
    %402 = arith.maximumf %401, %400 : vector<16x256xf32>
    %403 = vector.broadcast %cst_155 : f32 to vector<16x256xf32>
    %404 = arith.minimumf %403, %402 : vector<16x256xf32>
    %405 = arith.mulf %404, %404 : vector<16x256xf32>
    %cst_156 = arith.constant -2.72614237E-10 : f32
    %406 = vector.broadcast %cst_156 : f32 to vector<16x256xf32>
    %407 = arith.mulf %405, %406 : vector<16x256xf32>
    %cst_157 = arith.constant 2.77068146E-8 : f32
    %408 = vector.broadcast %cst_157 : f32 to vector<16x256xf32>
    %409 = arith.addf %407, %408 : vector<16x256xf32>
    %410 = arith.mulf %409, %405 : vector<16x256xf32>
    %cst_158 = arith.constant -2.10102394E-6 : f32
    %411 = vector.broadcast %cst_158 : f32 to vector<16x256xf32>
    %412 = arith.addf %410, %411 : vector<16x256xf32>
    %413 = arith.mulf %412, %405 : vector<16x256xf32>
    %cst_159 = arith.constant -5.69250624E-5 : f32
    %414 = vector.broadcast %cst_159 : f32 to vector<16x256xf32>
    %415 = arith.addf %413, %414 : vector<16x256xf32>
    %416 = arith.mulf %415, %405 : vector<16x256xf32>
    %cst_160 = arith.constant -7.34990637E-4 : f32
    %417 = vector.broadcast %cst_160 : f32 to vector<16x256xf32>
    %418 = arith.addf %416, %417 : vector<16x256xf32>
    %419 = arith.mulf %418, %405 : vector<16x256xf32>
    %cst_161 = arith.constant -2.954600e-03 : f32
    %420 = vector.broadcast %cst_161 : f32 to vector<16x256xf32>
    %421 = arith.addf %419, %420 : vector<16x256xf32>
    %422 = arith.mulf %421, %405 : vector<16x256xf32>
    %cst_162 = arith.constant -0.0160960332 : f32
    %423 = vector.broadcast %cst_162 : f32 to vector<16x256xf32>
    %424 = arith.addf %422, %423 : vector<16x256xf32>
    %425 = arith.mulf %424, %404 : vector<16x256xf32>
    %cst_163 = arith.constant -1.45660715E-5 : f32
    %426 = vector.broadcast %cst_163 : f32 to vector<16x256xf32>
    %427 = arith.mulf %405, %426 : vector<16x256xf32>
    %cst_164 = arith.constant -2.13374049E-4 : f32
    %428 = vector.broadcast %cst_164 : f32 to vector<16x256xf32>
    %429 = arith.addf %427, %428 : vector<16x256xf32>
    %430 = arith.mulf %429, %405 : vector<16x256xf32>
    %cst_165 = arith.constant -0.00168282702 : f32
    %431 = vector.broadcast %cst_165 : f32 to vector<16x256xf32>
    %432 = arith.addf %430, %431 : vector<16x256xf32>
    %433 = arith.mulf %432, %405 : vector<16x256xf32>
    %cst_166 = arith.constant -0.00737332925 : f32
    %434 = vector.broadcast %cst_166 : f32 to vector<16x256xf32>
    %435 = arith.addf %433, %434 : vector<16x256xf32>
    %436 = arith.mulf %435, %405 : vector<16x256xf32>
    %cst_167 = arith.constant -0.0142647391 : f32
    %437 = vector.broadcast %cst_167 : f32 to vector<16x256xf32>
    %438 = arith.addf %436, %437 : vector<16x256xf32>
    %439 = arith.divf %425, %438 : vector<16x256xf32>
    %cst_168 = arith.constant 1.000000e+00 : f32
    %440 = vector.broadcast %cst_168 : f32 to vector<16x256xf32>
    %441 = arith.addf %440, %439 : vector<16x256xf32>
    %442 = arith.mulf %398, %441 : vector<16x256xf32>
    %c0_169 = arith.constant 0 : index
    %c0_170 = arith.constant 0 : index
    %443 = vector.load %arg5[%c0_169, %c0_170] : memref<4x16xf32, #tpu.memory_space<vmem>>, vector<4x16xf32>
    %cst_171 = arith.constant dense<0.000000e+00> : vector<4x256xf32>
    %444 = tpu.matmul %443, %442, %cst_171 {dimension_numbers = #tpu.dot_dimension_numbers<[1], [0], [0], [1], [0, 0, 1, 1], [], []>} : vector<4x16xf32>, vector<16x256xf32>, vector<4x256xf32> -> vector<4x256xf32>
    %c0_172 = arith.constant 0 : index
    %c0_173 = arith.constant 0 : index
    %445 = vector.load %arg6[%c0_172, %c0_173] : memref<4x1xf32, #tpu.memory_space<vmem>>, vector<4x1xf32>
    %446 = vector.broadcast %445 : vector<4x1xf32> to vector<4x256xf32>
    %447 = arith.addf %444, %446 : vector<4x256xf32>
    %c0_174 = arith.constant 0 : index
    %c0_175 = arith.constant 0 : index
    %c0_176 = arith.constant 0 : index
    %448 = vector.load %arg7[%c0_174, %c0_175, %c0_176] : memref<1x4x256xf32, #tpu.memory_space<vmem>>, vector<1x4x256xf32>
    %449 = vector.shape_cast %448 : vector<1x4x256xf32> to vector<4x256xf32>
    %450 = vector.shape_cast %447 : vector<4x256xf32> to vector<1x4x256xf32>
    tpu.vector_store %arg7[%c0_174, %c0_175, %c0_176], %450 {strides = array<i32>} : memref<1x4x256xf32, #tpu.memory_space<vmem>>, vector<1x4x256xf32>,
    return
  }
  func.func @transform_0(%arg0: i32) -> (i32, i32, i32) {
    %c0_i32 = arith.constant 0 : i32
    %c0_i32_0 = arith.constant 0 : i32
    %c0_i32_1 = arith.constant 0 : i32
    return %arg0, %c0_i32, %c0_i32_0 : i32, i32, i32
  }
  func.func @transform_1(%arg0: i32) -> (i32, i32) {
    %c0_i32 = arith.constant 0 : i32
    %c0_i32_0 = arith.constant 0 : i32
    %c0_i32_1 = arith.constant 0 : i32
    return %c0_i32, %c0_i32_0 : i32, i32
  }
  func.func @transform_2(%arg0: i32) -> (i32, i32) {
    %c0_i32 = arith.constant 0 : i32
    %c0_i32_0 = arith.constant 0 : i32
    %c0_i32_1 = arith.constant 0 : i32
    return %c0_i32, %c0_i32_0 : i32, i32
  }
  func.func @transform_3(%arg0: i32) -> (i32, i32) {
    %c0_i32 = arith.constant 0 : i32
    %c0_i32_0 = arith.constant 0 : i32
    %c0_i32_1 = arith.constant 0 : i32
    return %c0_i32, %c0_i32_0 : i32, i32
  }
  func.func @transform_4(%arg0: i32) -> (i32, i32) {
    %c0_i32 = arith.constant 0 : i32
    %c0_i32_0 = arith.constant 0 : i32
    %c0_i32_1 = arith.constant 0 : i32
    return %c0_i32, %c0_i32_0 : i32, i32
  }
  func.func @transform_5(%arg0: i32) -> (i32, i32) {
    %c0_i32 = arith.constant 0 : i32
    %c0_i32_0 = arith.constant 0 : i32
    %c0_i32_1 = arith.constant 0 : i32
    return %c0_i32, %c0_i32_0 : i32, i32
  }
  func.func @transform_6(%arg0: i32) -> (i32, i32, i32) {
    %c0_i32 = arith.constant 0 : i32
    %c0_i32_0 = arith.constant 0 : i32
    %c0_i32_1 = arith.constant 0 : i32
    return %arg0, %c0_i32, %c0_i32_0 : i32, i32, i32
  }
}

</mosaic_0001>

<llo_original>
// kernel: fft3_forward.2
$region0: #{fft3_forward.2}
  #allocation0 [shape = 'u32[]', space=smem, size = 0x4, offset = 0x4, fixed_abs, tag = 'smem constant byte address 0x4 - core index']
  #allocation1 [shape = 'u32[144,128]{1,0:T(1,128)}', space=vmem, size = 0x12000, scoped, tag = 'internal scratch']
  %s0 = inlined_call_operand.vmem [shape: f32[8,256], index: 0, kind: input, shape index: {}]
  %s1 = inlined_call_operand.hbm [shape: f32[256,1024], index: 1, kind: input, shape index: {}]
  %s2 = inlined_call_operand.vmem [shape: f32[1,1024], index: 2, kind: input, shape index: {}]
  %s3 = inlined_call_operand.vmem [shape: f32[8,1024], index: 3, kind: output, shape index: {}]
  %s4 = sld [smem:[#allocation0]]
  $region26: #{fft3_forward.2} parent=0
    _
  %s6 = ssub.s32 1, %s4
  %s7 = scalar_select 0, %s6, %s4
  $region1: #{fft3_forward.2} parent=0
    #allocation2 [shape = 'u8[1048576]{0}', space=vmem, size = 0x100000, scoped, tag = 'input window, operand 1, single buffered']
    #allocation3 [shape = 's32[1]{0}', space=sflag, size = 0x4, scoped, tag = 'scoped memory for fft3_forward.2']
    %8 = vsyncpa [#allocation3], 0
    // Predicated region
    $region2: #{fft3_forward.2} parent=1 // pred_check
      _
    $region3: #{fft3_forward.2} parent=1 // pred_check_branch
      %10 = sbr.rel (0) target = $region5
    $region4: #{fft3_forward.2} parent=1 // pred_region
      _
    $region5: #{fft3_forward.2} parent=1 // pred_fallthru
      _
    // Predicated region
    $region6: #{fft3_forward.2} parent=1 // pred_check
      _
    $region7: #{fft3_forward.2} parent=1 // pred_check_branch
      %12 = sbr.rel (0) target = $region9
    $region8: #{fft3_forward.2} parent=1 // pred_region
      %s14 = ssub.s32 32768, 32768
      %15 = vsyncadd [#allocation3], %s14
      %s16 = sshll.u32 [#allocation2], 4
      %s17 = int_to_ptr.vmem [resolvable:$true] %s16
      %22 = dma.hbm_to_vmem [thread:$0]  %s1, 32768, %s17, [#allocation3], 1024, 1024, 64
    $region9: #{fft3_forward.2} parent=1 // pred_fallthru
      _
    // Predicated region
    $region10: #{fft3_forward.2} parent=1 // pred_check
      _
    $region11: #{fft3_forward.2} parent=1 // pred_check_branch
      %24 = sbr.rel (0) target = $region13
    $region12: #{fft3_forward.2} parent=1 // pred_region
      _
    $region13: #{fft3_forward.2} parent=1 // pred_fallthru
      _
    // Predicated region
    $region14: #{fft3_forward.2} parent=1 // pred_check
      _
    $region15: #{fft3_forward.2} parent=1 // pred_check_branch
      %26 = sbr.rel (0) target = $region17
    $region16: #{fft3_forward.2} parent=1 // pred_region
      %27 = dma.done [#allocation3], 32768
    $region17: #{fft3_forward.2} parent=1 // pred_fallthru
      _
    %v28 = vld [vmem:[%s0] sm:$0xff]
    %v29 = vld [vmem:[%s0 + $0x8] sm:$0xff]
    %v30 = vld [vmem:[#allocation2] sm:$0xff]
    %v31 = vld [vmem:[#allocation2 + $0x8] sm:$0xff]
    %v32 = vld [vmem:[#allocation2 + $0x10] sm:$0xff]
    %v33 = vld [vmem:[#allocation2 + $0x18] sm:$0xff]
    %v34 = vld [vmem:[#allocation2 + $0x20] sm:$0xff]
    %v35 = vld [vmem:[#allocation2 + $0x28] sm:$0xff]
    %v36 = vld [vmem:[#allocation2 + $0x30] sm:$0xff]
    %v37 = vld [vmem:[#allocation2 + $0x38] sm:$0xff]
    %v38 = vld [vmem:[#allocation2 + $0x40] sm:$0xff]
    %v39 = vld [vmem:[#allocation2 + $0x48] sm:$0xff]
    %v40 = vld [vmem:[#allocation2 + $0x50] sm:$0xff]
    %v41 = vld [vmem:[#allocation2 + $0x58] sm:$0xff]
    %v42 = vld [vmem:[#allocation2 + $0x60] sm:$0xff]
    %v43 = vld [vmem:[#allocation2 + $0x68] sm:$0xff]
    %v44 = vld [vmem:[#allocation2 + $0x70] sm:$0xff]
    %v45 = vld [vmem:[#allocation2 + $0x78] sm:$0xff]
    %v46 = vld [vmem:[#allocation2 + $0x80] sm:$0xff]
    %v47 = vld [vmem:[#allocation2 + $0x88] sm:$0xff]
    %v48 = vld [vmem:[#allocation2 + $0x90] sm:$0xff]
    %v49 = vld [vmem:[#allocation2 + $0x98] sm:$0xff]
    %v50 = vld [vmem:[#allocation2 + $0xa0] sm:$0xff]
    %v51 = vld [vmem:[#allocation2 + $0xa8] sm:$0xff]
    %v52 = vld [vmem:[#allocation2 + $0xb0] sm:$0xff]
    %v53 = vld [vmem:[#allocation2 + $0xb8] sm:$0xff]
    %v54 = vld [vmem:[#allocation2 + $0xc0] sm:$0xff]
    %v55 = vld [vmem:[#allocation2 + $0xc8] sm:$0xff]
    %v56 = vld [vmem:[#allocation2 + $0xd0] sm:$0xff]
    %v57 = vld [vmem:[#allocation2 + $0xd8] sm:$0xff]
    %v58 = vld [vmem:[#allocation2 + $0xe0] sm:$0xff]
    %v59 = vld [vmem:[#allocation2 + $0xe8] sm:$0xff]
    %v60 = vld [vmem:[#allocation2 + $0xf0] sm:$0xff]
    %v61 = vld [vmem:[#allocation2 + $0xf8] sm:$0xff]
    %v62 = vld [vmem:[#allocation2 + $0x100] sm:$0xff]
    %v63 = vld [vmem:[#allocation2 + $0x108] sm:$0xff]
    %v64 = vld [vmem:[#allocation2 + $0x110] sm:$0xff]
    %v65 = vld [vmem:[#allocation2 + $0x118] sm:$0xff]
    %v66 = vld [vmem:[#allocation2 + $0x120] sm:$0xff]
    %v67 = vld [vmem:[#allocation2 + $0x128] sm:$0xff]
    %v68 = vld [vmem:[#allocation2 + $0x130] sm:$0xff]
    %v69 = vld [vmem:[#allocation2 + $0x138] sm:$0xff]
    %v70 = vld [vmem:[#allocation2 + $0x140] sm:$0xff]
    %v71 = vld [vmem:[#allocation2 + $0x148] sm:$0xff]
    %v72 = vld [vmem:[#allocation2 + $0x150] sm:$0xff]
    %v73 = vld [vmem:[#allocation2 + $0x158] sm:$0xff]
    %v74 = vld [vmem:[#allocation2 + $0x160] sm:$0xff]
    %v75 = vld [vmem:[#allocation2 + $0x168] sm:$0xff]
    %v76 = vld [vmem:[#allocation2 + $0x170] sm:$0xff]
    %v77 = vld [vmem:[#allocation2 + $0x178] sm:$0xff]
    %v78 = vld [vmem:[#allocation2 + $0x180] sm:$0xff]
    %v79 = vld [vmem:[#allocation2 + $0x188] sm:$0xff]
    %v80 = vld [vmem:[#allocation2 + $0x190] sm:$0xff]
    %v81 = vld [vmem:[#allocation2 + $0x198] sm:$0xff]
    %v82 = vld [vmem:[#allocation2 + $0x1a0] sm:$0xff]
    %v83 = vld [vmem:[#allocation2 + $0x1a8] sm:$0xff]
    %v84 = vld [vmem:[#allocation2 + $0x1b0] sm:$0xff]
    %v85 = vld [vmem:[#allocation2 + $0x1b8] sm:$0xff]
    %v86 = vld [vmem:[#allocation2 + $0x1c0] sm:$0xff]
    %v87 = vld [vmem:[#allocation2 + $0x1c8] sm:$0xff]
    %v88 = vld [vmem:[#allocation2 + $0x1d0] sm:$0xff]
    %v89 = vld [vmem:[#allocation2 + $0x1d8] sm:$0xff]
    %v90 = vld [vmem:[#allocation2 + $0x1e0] sm:$0xff]
    %v91 = vld [vmem:[#allocation2 + $0x1e8] sm:$0xff]
    %v92 = vld [vmem:[#allocation2 + $0x1f0] sm:$0xff]
    %v93 = vld [vmem:[#allocation2 + $0x1f8] sm:$0xff]
    %v94 = vld [vmem:[#allocation2 + $0x200] sm:$0xff]
    %v95 = vld [vmem:[#allocation2 + $0x208] sm:$0xff]
    %v96 = vld [vmem:[#allocation2 + $0x210] sm:$0xff]
    %v97 = vld [vmem:[#allocation2 + $0x218] sm:$0xff]
    %v98 = vld [vmem:[#allocation2 + $0x220] sm:$0xff]
    %v99 = vld [vmem:[#allocation2 + $0x228] sm:$0xff]
    %v100 = vld [vmem:[#allocation2 + $0x230] sm:$0xff]
    %v101 = vld [vmem:[#allocation2 + $0x238] sm:$0xff]
    %v102 = vld [vmem:[#allocation2 + $0x240] sm:$0xff]
    %v103 = vld [vmem:[#allocation2 + $0x248] sm:$0xff]
    %v104 = vld [vmem:[#allocation2 + $0x250] sm:$0xff]
    %v105 = vld [vmem:[#allocation2 + $0x258] sm:$0xff]
    %v106 = vld [vmem:[#allocation2 + $0x260] sm:$0xff]
    %v107 = vld [vmem:[#allocation2 + $0x268] sm:$0xff]
    %v108 = vld [vmem:[#allocation2 + $0x270] sm:$0xff]
    %v109 = vld [vmem:[#allocation2 + $0x278] sm:$0xff]
    %v110 = vld [vmem:[#allocation2 + $0x280] sm:$0xff]
    %v111 = vld [vmem:[#allocation2 + $0x288] sm:$0xff]
    %v112 = vld [vmem:[#allocation2 + $0x290] sm:$0xff]
    %v113 = vld [vmem:[#allocation2 + $0x298] sm:$0xff]
    %v114 = vld [vmem:[#allocation2 + $0x2a0] sm:$0xff]
    %v115 = vld [vmem:[#allocation2 + $0x2a8] sm:$0xff]
    %v116 = vld [vmem:[#allocation2 + $0x2b0] sm:$0xff]
    %v117 = vld [vmem:[#allocation2 + $0x2b8] sm:$0xff]
    %v118 = vld [vmem:[#allocation2 + $0x2c0] sm:$0xff]
    %v119 = vld [vmem:[#allocation2 + $0x2c8] sm:$0xff]
    %v120 = vld [vmem:[#allocation2 + $0x2d0] sm:$0xff]
    %v121 = vld [vmem:[#allocation2 + $0x2d8] sm:$0xff]
    %v122 = vld [vmem:[#allocation2 + $0x2e0] sm:$0xff]
    %v123 = vld [vmem:[#allocation2 + $0x2e8] sm:$0xff]
    %v124 = vld [vmem:[#allocation2 + $0x2f0] sm:$0xff]
    %v125 = vld [vmem:[#allocation2 + $0x2f8] sm:$0xff]
    %v126 = vld [vmem:[#allocation2 + $0x300] sm:$0xff]
    %v127 = vld [vmem:[#allocation2 + $0x308] sm:$0xff]
    %v128 = vld [vmem:[#allocation2 + $0x310] sm:$0xff]
    %v129 = vld [vmem:[#allocation2 + $0x318] sm:$0xff]
    %v130 = vld [vmem:[#allocation2 + $0x320] sm:$0xff]
    %v131 = vld [vmem:[#allocation2 + $0x328] sm:$0xff]
    %v132 = vld [vmem:[#allocation2 + $0x330] sm:$0xff]
    %v133 = vld [vmem:[#allocation2 + $0x338] sm:$0xff]
    %v134 = vld [vmem:[#allocation2 + $0x340] sm:$0xff]
    %v135 = vld [vmem:[#allocation2 + $0x348] sm:$0xff]
    %v136 = vld [vmem:[#allocation2 + $0x350] sm:$0xff]
    %v137 = vld [vmem:[#allocation2 + $0x358] sm:$0xff]
    %v138 = vld [vmem:[#allocation2 + $0x360] sm:$0xff]
    %v139 = vld [vmem:[#allocation2 + $0x368] sm:$0xff]
    %v140 = vld [vmem:[#allocation2 + $0x370] sm:$0xff]
    %v141 = vld [vmem:[#allocation2 + $0x378] sm:$0xff]
    %v142 = vld [vmem:[#allocation2 + $0x380] sm:$0xff]
    %v143 = vld [vmem:[#allocation2 + $0x388] sm:$0xff]
    %v144 = vld [vmem:[#allocation2 + $0x390] sm:$0xff]
    %v145 = vld [vmem:[#allocation2 + $0x398] sm:$0xff]
    %v146 = vld [vmem:[#allocation2 + $0x3a0] sm:$0xff]
    %v147 = vld [vmem:[#allocation2 + $0x3a8] sm:$0xff]
    %v148 = vld [vmem:[#allocation2 + $0x3b0] sm:$0xff]
    %v149 = vld [vmem:[#allocation2 + $0x3b8] sm:$0xff]
    %v150 = vld [vmem:[#allocation2 + $0x3c0] sm:$0xff]
    %v151 = vld [vmem:[#allocation2 + $0x3c8] sm:$0xff]
    %v152 = vld [vmem:[#allocation2 + $0x3d0] sm:$0xff]
    %v153 = vld [vmem:[#allocation2 + $0x3d8] sm:$0xff]
    %v154 = vld [vmem:[#allocation2 + $0x3e0] sm:$0xff]
    %v155 = vld [vmem:[#allocation2 + $0x3e8] sm:$0xff]
    %v156 = vld [vmem:[#allocation2 + $0x3f0] sm:$0xff]
    %v157 = vld [vmem:[#allocation2 + $0x3f8] sm:$0xff]
    %v158 = vld [vmem:[#allocation2 + $0x400] sm:$0xff]
    %v159 = vld [vmem:[#allocation2 + $0x408] sm:$0xff]
    %v160 = vld [vmem:[#allocation2 + $0x410] sm:$0xff]
    %v161 = vld [vmem:[#allocation2 + $0x418] sm:$0xff]
    %v162 = vld [vmem:[#allocation2 + $0x420] sm:$0xff]
    %v163 = vld [vmem:[#allocation2 + $0x428] sm:$0xff]
    %v164 = vld [vmem:[#allocation2 + $0x430] sm:$0xff]
    %v165 = vld [vmem:[#allocation2 + $0x438] sm:$0xff]
    %v166 = vld [vmem:[#allocation2 + $0x440] sm:$0xff]
    %v167 = vld [vmem:[#allocation2 + $0x448] sm:$0xff]
    %v168 = vld [vmem:[#allocation2 + $0x450] sm:$0xff]
    %v169 = vld [vmem:[#allocation2 + $0x458] sm:$0xff]
    %v170 = vld [vmem:[#allocation2 + $0x460] sm:$0xff]
    %v171 = vld [vmem:[#allocation2 + $0x468] sm:$0xff]
    %v172 = vld [vmem:[#allocation2 + $0x470] sm:$0xff]
    %v173 = vld [vmem:[#allocation2 + $0x478] sm:$0xff]
    %v174 = vld [vmem:[#allocation2 + $0x480] sm:$0xff]
    %v175 = vld [vmem:[#allocation2 + $0x488] sm:$0xff]
    %v176 = vld [vmem:[#allocation2 + $0x490] sm:$0xff]
    %v177 = vld [vmem:[#allocation2 + $0x498] sm:$0xff]
    %v178 = vld [vmem:[#allocation2 + $0x4a0] sm:$0xff]
    %v179 = vld [vmem:[#allocation2 + $0x4a8] sm:$0xff]
    %v180 = vld [vmem:[#allocation2 + $0x4b0] sm:$0xff]
    %v181 = vld [vmem:[#allocation2 + $0x4b8] sm:$0xff]
    %v182 = vld [vmem:[#allocation2 + $0x4c0] sm:$0xff]
    %v183 = vld [vmem:[#allocation2 + $0x4c8] sm:$0xff]
    %v184 = vld [vmem:[#allocation2 + $0x4d0] sm:$0xff]
    %v185 = vld [vmem:[#allocation2 + $0x4d8] sm:$0xff]
    %v186 = vld [vmem:[#allocation2 + $0x4e0] sm:$0xff]
    %v187 = vld [vmem:[#allocation2 + $0x4e8] sm:$0xff]
    %v188 = vld [vmem:[#allocation2 + $0x4f0] sm:$0xff]
    %v189 = vld [vmem:[#allocation2 + $0x4f8] sm:$0xff]
    %v190 = vld [vmem:[#allocation2 + $0x500] sm:$0xff]
    %v191 = vld [vmem:[#allocation2 + $0x508] sm:$0xff]
    %v192 = vld [vmem:[#allocation2 + $0x510] sm:$0xff]
    %v193 = vld [vmem:[#allocation2 + $0x518] sm:$0xff]
    %v194 = vld [vmem:[#allocation2 + $0x520] sm:$0xff]
    %v195 = vld [vmem:[#allocation2 + $0x528] sm:$0xff]
    %v196 = vld [vmem:[#allocation2 + $0x530] sm:$0xff]
    %v197 = vld [vmem:[#allocation2 + $0x538] sm:$0xff]
    %v198 = vld [vmem:[#allocation2 + $0x540] sm:$0xff]
    %v199 = vld [vmem:[#allocation2 + $0x548] sm:$0xff]
    %v200 = vld [vmem:[#allocation2 + $0x550] sm:$0xff]
    %v201 = vld [vmem:[#allocation2 + $0x558] sm:$0xff]
    %v202 = vld [vmem:[#allocation2 + $0x560] sm:$0xff]
    %v203 = vld [vmem:[#allocation2 + $0x568] sm:$0xff]
    %v204 = vld [vmem:[#allocation2 + $0x570] sm:$0xff]
    %v205 = vld [vmem:[#allocation2 + $0x578] sm:$0xff]
    %v206 = vld [vmem:[#allocation2 + $0x580] sm:$0xff]
    %v207 = vld [vmem:[#allocation2 + $0x588] sm:$0xff]
    %v208 = vld [vmem:[#allocation2 + $0x590] sm:$0xff]
    %v209 = vld [vmem:[#allocation2 + $0x598] sm:$0xff]
    %v210 = vld [vmem:[#allocation2 + $0x5a0] sm:$0xff]
    %v211 = vld [vmem:[#allocation2 + $0x5a8] sm:$0xff]
    %v212 = vld [vmem:[#allocation2 + $0x5b0] sm:$0xff]
    %v213 = vld [vmem:[#allocation2 + $0x5b8] sm:$0xff]
    %v214 = vld [vmem:[#allocation2 + $0x5c0] sm:$0xff]
    %v215 = vld [vmem:[#allocation2 + $0x5c8] sm:$0xff]
    %v216 = vld [vmem:[#allocation2 + $0x5d0] sm:$0xff]
    %v217 = vld [vmem:[#allocation2 + $0x5d8] sm:$0xff]
    %v218 = vld [vmem:[#allocation2 + $0x5e0] sm:$0xff]
    %v219 = vld [vmem:[#allocation2 + $0x5e8] sm:$0xff]
    %v220 = vld [vmem:[#allocation2 + $0x5f0] sm:$0xff]
    %v221 = vld [vmem:[#allocation2 + $0x5f8] sm:$0xff]
    %v222 = vld [vmem:[#allocation2 + $0x600] sm:$0xff]
    %v223 = vld [vmem:[#allocation2 + $0x608] sm:$0xff]
    %v224 = vld [vmem:[#allocation2 + $0x610] sm:$0xff]
    %v225 = vld [vmem:[#allocation2 + $0x618] sm:$0xff]
    %v226 = vld [vmem:[#allocation2 + $0x620] sm:$0xff]
    %v227 = vld [vmem:[#allocation2 + $0x628] sm:$0xff]
    %v228 = vld [vmem:[#allocation2 + $0x630] sm:$0xff]
    %v229 = vld [vmem:[#allocation2 + $0x638] sm:$0xff]
    %v230 = vld [vmem:[#allocation2 + $0x640] sm:$0xff]
    %v231 = vld [vmem:[#allocation2 + $0x648] sm:$0xff]
    %v232 = vld [vmem:[#allocation2 + $0x650] sm:$0xff]
    %v233 = vld [vmem:[#allocation2 + $0x658] sm:$0xff]
    %v234 = vld [vmem:[#allocation2 + $0x660] sm:$0xff]
    %v235 = vld [vmem:[#allocation2 + $0x668] sm:$0xff]
    %v236 = vld [vmem:[#allocation2 + $0x670] sm:$0xff]
    %v237 = vld [vmem:[#allocation2 + $0x678] sm:$0xff]
    %v238 = vld [vmem:[#allocation2 + $0x680] sm:$0xff]
    %v239 = vld [vmem:[#allocation2 + $0x688] sm:$0xff]
    %v240 = vld [vmem:[#allocation2 + $0x690] sm:$0xff]
    %v241 = vld [vmem:[#allocation2 + $0x698] sm:$0xff]
    %v242 = vld [vmem:[#allocation2 + $0x6a0] sm:$0xff]
    %v243 = vld [vmem:[#allocation2 + $0x6a8] sm:$0xff]
    %v244 = vld [vmem:[#allocation2 + $0x6b0] sm:$0xff]
    %v245 = vld [vmem:[#allocation2 + $0x6b8] sm:$0xff]
    %v246 = vld [vmem:[#allocation2 + $0x6c0] sm:$0xff]
    %v247 = vld [vmem:[#allocation2 + $0x6c8] sm:$0xff]
    %v248 = vld [vmem:[#allocation2 + $0x6d0] sm:$0xff]
    %v249 = vld [vmem:[#allocation2 + $0x6d8] sm:$0xff]
    %v250 = vld [vmem:[#allocation2 + $0x6e0] sm:$0xff]
    %v251 = vld [vmem:[#allocation2 + $0x6e8] sm:$0xff]
    %v252 = vld [vmem:[#allocation2 + $0x6f0] sm:$0xff]
    %v253 = vld [vmem:[#allocation2 + $0x6f8] sm:$0xff]
    %v254 = vld [vmem:[#allocation2 + $0x700] sm:$0xff]
    %v255 = vld [vmem:[#allocation2 + $0x708] sm:$0xff]
    %v256 = vld [vmem:[#allocation2 + $0x710] sm:$0xff]
    %v257 = vld [vmem:[#allocation2 + $0x718] sm:$0xff]
    %v258 = vld [vmem:[#allocation2 + $0x720] sm:$0xff]
    %v259 = vld [vmem:[#allocation2 + $0x728] sm:$0xff]
    %v260 = vld [vmem:[#allocation2 + $0x730] sm:$0xff]
    %v261 = vld [vmem:[#allocation2 + $0x738] sm:$0xff]
    %v262 = vld [vmem:[#allocation2 + $0x740] sm:$0xff]
    %v263 = vld [vmem:[#allocation2 + $0x748] sm:$0xff]
    %v264 = vld [vmem:[#allocation2 + $0x750] sm:$0xff]
    %v265 = vld [vmem:[#allocation2 + $0x758] sm:$0xff]
    %v266 = vld [vmem:[#allocation2 + $0x760] sm:$0xff]
    %v267 = vld [vmem:[#allocation2 + $0x768] sm:$0xff]
    %v268 = vld [vmem:[#allocation2 + $0x770] sm:$0xff]
    %v269 = vld [vmem:[#allocation2 + $0x778] sm:$0xff]
    %v270 = vld [vmem:[#allocation2 + $0x780] sm:$0xff]
    %v271 = vld [vmem:[#allocation2 + $0x788] sm:$0xff]
    %v272 = vld [vmem:[#allocation2 + $0x790] sm:$0xff]
    %v273 = vld [vmem:[#allocation2 + $0x798] sm:$0xff]
    %v274 = vld [vmem:[#allocation2 + $0x7a0] sm:$0xff]
    %v275 = vld [vmem:[#allocation2 + $0x7a8] sm:$0xff]
    %v276 = vld [vmem:[#allocation2 + $0x7b0] sm:$0xff]
    %v277 = vld [vmem:[#allocation2 + $0x7b8] sm:$0xff]
    %v278 = vld [vmem:[#allocation2 + $0x7c0] sm:$0xff]
    %v279 = vld [vmem:[#allocation2 + $0x7c8] sm:$0xff]
    %v280 = vld [vmem:[#allocation2 + $0x7d0] sm:$0xff]
    %v281 = vld [vmem:[#allocation2 + $0x7d8] sm:$0xff]
    %v282 = vld [vmem:[#allocation2 + $0x7e0] sm:$0xff]
    %v283 = vld [vmem:[#allocation2 + $0x7e8] sm:$0xff]
    %v284 = vld [vmem:[#allocation2 + $0x7f0] sm:$0xff]
    %v285 = vld [vmem:[#allocation2 + $0x7f8] sm:$0xff]
    %v286 = vld [vmem:[%s2] sm:$0xff]
    %v288 = vlaneseq
    %v289 = vshrl.u32 %v288, 7
    %v290 = vsub.s32 0, %v289
    %v291 = vrot.slane %v286, %v290
    %v292 = vlaneseq
    %v293 = vshrl.u32 %v292, 7
    %v294 = vsub.s32 1, %v293
    %v295 = vrot.slane %v286, %v294
    %v296 = vlaneseq
    %v297 = vshrl.u32 %v296, 7
    %v298 = vsub.s32 2, %v297
    %v299 = vrot.slane %v286, %v298
    %v300 = vlaneseq
    %v301 = vshrl.u32 %v300, 7
    %v302 = vsub.s32 3, %v301
    %v303 = vrot.slane %v286, %v302
    %v304 = vlaneseq
    %v305 = vshrl.u32 %v304, 7
    %v306 = vsub.s32 4, %v305
    %v307 = vrot.slane %v286, %v306
    %v308 = vlaneseq
    %v309 = vshrl.u32 %v308, 7
    %v310 = vsub.s32 5, %v309
    %v311 = vrot.slane %v286, %v310
    %v312 = vlaneseq
    %v313 = vshrl.u32 %v312, 7
    %v314 = vsub.s32 6, %v313
    %v315 = vrot.slane %v286, %v314
    %v316 = vlaneseq
    %v317 = vshrl.u32 %v316, 7
    %v318 = vsub.s32 7, %v317
    %v319 = vrot.slane %v286, %v318
    %328 = vmatprep.subr.mxu0 %v31
    %329 = vmatpush1.msra.mxu0 %v30
    %330 = vmatprep.subr.mxu0 %v39
    %331 = vmatpush1.msra.mxu0 %v38
    %332 = vmatprep.subr.mxu0 %v47
    %333 = vmatpush1.msra.mxu0 %v46
    %334 = vmatprep.subr.mxu0 %v55
    %335 = vmatpush1.msra.mxu0 %v54
    %336 = vmatprep.subr.mxu0 %v63
    %337 = vmatpush1.msra.mxu0 %v62
    %338 = vmatprep.subr.mxu0 %v71
    %339 = vmatpush1.msra.mxu0 %v70
    %340 = vmatprep.subr.mxu0 %v79
    %341 = vmatpush1.msra.mxu0 %v78
    %342 = vmatprep.subr.mxu0 %v87
    %343 = vmatpush1.msra.mxu0 %v86
    %344 = vmatprep.subr.mxu0 %v95
    %345 = vmatpush1.msra.mxu0 %v94
    %346 = vmatprep.subr.mxu0 %v103
    %347 = vmatpush1.msra.mxu0 %v102
    %348 = vmatprep.subr.mxu0 %v111
    %349 = vmatpush1.msra.mxu0 %v110
    %350 = vmatprep.subr.mxu0 %v119
    %351 = vmatpush1.msra.mxu0 %v118
    %352 = vmatprep.subr.mxu0 %v127
    %353 = vmatpush1.msra.mxu0 %v126
    %354 = vmatprep.subr.mxu0 %v135
    %355 = vmatpush1.msra.mxu0 %v134
    %356 = vmatprep.subr.mxu0 %v143
    %357 = vmatpush1.msra.mxu0 %v142
    %358 = vmatprep.subr.mxu0 %v151
    %359 = vmatpush1.msra.mxu0 %v150
    %360 = vmatprep.subr.mxu0 %v159
    %361 = vmatpush1.msra.mxu0 %v158
    %362 = vmatprep.subr.mxu0 %v167
    %363 = vmatpush1.msra.mxu0 %v166
    %364 = vmatprep.subr.mxu0 %v175
    %365 = vmatpush1.msra.mxu0 %v174
    %366 = vmatprep.subr.mxu0 %v183
    %367 = vmatpush1.msra.mxu0 %v182
    %368 = vmatprep.subr.mxu0 %v191
    %369 = vmatpush1.msra.mxu0 %v190
    %370 = vmatprep.subr.mxu0 %v199
    %371 = vmatpush1.msra.mxu0 %v198
    %372 = vmatprep.subr.mxu0 %v207
    %373 = vmatpush1.msra.mxu0 %v206
    %374 = vmatprep.subr.mxu0 %v215
    %375 = vmatpush1.msra.mxu0 %v214
    %376 = vmatprep.subr.mxu0 %v223
    %377 = vmatpush1.msra.mxu0 %v222
    %378 = vmatprep.subr.mxu0 %v231
    %379 = vmatpush1.msra.mxu0 %v230
    %380 = vmatprep.subr.mxu0 %v239
    %381 = vmatpush1.msra.mxu0 %v238
    %382 = vmatprep.subr.mxu0 %v247
    %383 = vmatpush1.msra.mxu0 %v246
    %384 = vmatprep.subr.mxu0 %v255
    %385 = vmatpush1.msra.mxu0 %v254
    %386 = vmatprep.subr.mxu0 %v263
    %387 = vmatpush1.msra.mxu0 %v262
    %388 = vmatprep.subr.mxu0 %v271
    %389 = vmatpush1.msra.mxu0 %v270
    %390 = vmatprep.subr.mxu0 %v279
    %391 = vmatpush1.msra.mxu0 %v278
    %392 = vmatprep.mubr.f32.mxu0 %v29
    %393 = vmatmul.mubr.f32.gmra.mrb[0].mxu0 %v28
    %v394 = vpop.f32.mrb[0].mxu0
    %v395 = vadd.f32 %v291, %v394
    %v396 = vpop.f32.mrb[0].mxu0
    %v397 = vadd.f32 %v295, %v396
    %398 = vdwg.mxu0
    %399 = vmatprep.subr.mxu0 %v33
    %400 = vmatpush1.msra.mxu0 %v32
    %401 = vmatprep.subr.mxu0 %v41
    %402 = vmatpush1.msra.mxu0 %v40
    %403 = vmatprep.subr.mxu0 %v49
    %404 = vmatpush1.msra.mxu0 %v48
    %405 = vmatprep.subr.mxu0 %v57
    %406 = vmatpush1.msra.mxu0 %v56
    %407 = vmatprep.subr.mxu0 %v65
    %408 = vmatpush1.msra.mxu0 %v64
    %409 = vmatprep.subr.mxu0 %v73
    %410 = vmatpush1.msra.mxu0 %v72
    %411 = vmatprep.subr.mxu0 %v81
    %412 = vmatpush1.msra.mxu0 %v80
    %413 = vmatprep.subr.mxu0 %v89
    %414 = vmatpush1.msra.mxu0 %v88
    %415 = vmatprep.subr.mxu0 %v97
    %416 = vmatpush1.msra.mxu0 %v96
    %417 = vmatprep.subr.mxu0 %v105
    %418 = vmatpush1.msra.mxu0 %v104
    %419 = vmatprep.subr.mxu0 %v113
    %420 = vmatpush1.msra.mxu0 %v112
    %421 = vmatprep.subr.mxu0 %v121
    %422 = vmatpush1.msra.mxu0 %v120
    %423 = vmatprep.subr.mxu0 %v129
    %424 = vmatpush1.msra.mxu0 %v128
    %425 = vmatprep.subr.mxu0 %v137
    %426 = vmatpush1.msra.mxu0 %v136
    %427 = vmatprep.subr.mxu0 %v145
    %428 = vmatpush1.msra.mxu0 %v144
    %429 = vmatprep.subr.mxu0 %v153
    %430 = vmatpush1.msra.mxu0 %v152
    %431 = vmatprep.subr.mxu0 %v161
    %432 = vmatpush1.msra.mxu0 %v160
    %433 = vmatprep.subr.mxu0 %v169
    %434 = vmatpush1.msra.mxu0 %v168
    %435 = vmatprep.subr.mxu0 %v177
    %436 = vmatpush1.msra.mxu0 %v176
    %437 = vmatprep.subr.mxu0 %v185
    %438 = vmatpush1.msra.mxu0 %v184
    %439 = vmatprep.subr.mxu0 %v193
    %440 = vmatpush1.msra.mxu0 %v192
    %441 = vmatprep.subr.mxu0 %v201
    %442 = vmatpush1.msra.mxu0 %v200
    %443 = vmatprep.subr.mxu0 %v209
    %444 = vmatpush1.msra.mxu0 %v208
    %445 = vmatprep.subr.mxu0 %v217
    %446 = vmatpush1.msra.mxu0 %v216
    %447 = vmatprep.subr.mxu0 %v225
    %448 = vmatpush1.msra.mxu0 %v224
    %449 = vmatprep.subr.mxu0 %v233
    %450 = vmatpush1.msra.mxu0 %v232
    %451 = vmatprep.subr.mxu0 %v241
    %452 = vmatpush1.msra.mxu0 %v240
    %453 = vmatprep.subr.mxu0 %v249
    %454 = vmatpush1.msra.mxu0 %v248
    %455 = vmatprep.subr.mxu0 %v257
    %456 = vmatpush1.msra.mxu0 %v256
    %457 = vmatprep.subr.mxu0 %v265
    %458 = vmatpush1.msra.mxu0 %v264
    %459 = vmatprep.subr.mxu0 %v273
    %460 = vmatpush1.msra.mxu0 %v272
    %461 = vmatprep.subr.mxu0 %v281
    %462 = vmatpush1.msra.mxu0 %v280
    %463 = vmatprep.mubr.f32.mxu0 %v29
    %464 = vmatmul.mubr.f32.gmra.mrb[0].mxu0 %v28
    %v465 = vpop.f32.mrb[0].mxu0
    %v466 = vadd.f32 %v299, %v465
    %v467 = vpop.f32.mrb[0].mxu0
    %v468 = vadd.f32 %v303, %v467
    %469 = vdwg.mxu0
    %470 = vmatprep.subr.mxu0 %v35
    %471 = vmatpush1.msra.mxu0 %v34
    %472 = vmatprep.subr.mxu0 %v43
    %473 = vmatpush1.msra.mxu0 %v42
    %474 = vmatprep.subr.mxu0 %v51
    %475 = vmatpush1.msra.mxu0 %v50
    %476 = vmatprep.subr.mxu0 %v59
    %477 = vmatpush1.msra.mxu0 %v58
    %478 = vmatprep.subr.mxu0 %v67
    %479 = vmatpush1.msra.mxu0 %v66
    %480 = vmatprep.subr.mxu0 %v75
    %481 = vmatpush1.msra.mxu0 %v74
    %482 = vmatprep.subr.mxu0 %v83
    %483 = vmatpush1.msra.mxu0 %v82
    %484 = vmatprep.subr.mxu0 %v91
    %485 = vmatpush1.msra.mxu0 %v90
    %486 = vmatprep.subr.mxu0 %v99
    %487 = vmatpush1.msra.mxu0 %v98
    %488 = vmatprep.subr.mxu0 %v107
    %489 = vmatpush1.msra.mxu0 %v106
    %490 = vmatprep.subr.mxu0 %v115
    %491 = vmatpush1.msra.mxu0 %v114
    %492 = vmatprep.subr.mxu0 %v123
    %493 = vmatpush1.msra.mxu0 %v122
    %494 = vmatprep.subr.mxu0 %v131
    %495 = vmatpush1.msra.mxu0 %v130
    %496 = vmatprep.subr.mxu0 %v139
    %497 = vmatpush1.msra.mxu0 %v138
    %498 = vmatprep.subr.mxu0 %v147
    %499 = vmatpush1.msra.mxu0 %v146
    %500 = vmatprep.subr.mxu0 %v155
    %501 = vmatpush1.msra.mxu0 %v154
    %502 = vmatprep.subr.mxu0 %v163
    %503 = vmatpush1.msra.mxu0 %v162
    %504 = vmatprep.subr.mxu0 %v171
    %505 = vmatpush1.msra.mxu0 %v170
    %506 = vmatprep.subr.mxu0 %v179
    %507 = vmatpush1.msra.mxu0 %v178
    %508 = vmatprep.subr.mxu0 %v187
    %509 = vmatpush1.msra.mxu0 %v186
    %510 = vmatprep.subr.mxu0 %v195
    %511 = vmatpush1.msra.mxu0 %v194
    %512 = vmatprep.subr.mxu0 %v203
    %513 = vmatpush1.msra.mxu0 %v202
    %514 = vmatprep.subr.mxu0 %v211
    %515 = vmatpush1.msra.mxu0 %v210
    %516 = vmatprep.subr.mxu0 %v219
    %517 = vmatpush1.msra.mxu0 %v218
    %518 = vmatprep.subr.mxu0 %v227
    %519 = vmatpush1.msra.mxu0 %v226
    %520 = vmatprep.subr.mxu0 %v235
    %521 = vmatpush1.msra.mxu0 %v234
    %522 = vmatprep.subr.mxu0 %v243
    %523 = vmatpush1.msra.mxu0 %v242
    %524 = vmatprep.subr.mxu0 %v251
    %525 = vmatpush1.msra.mxu0 %v250
    %526 = vmatprep.subr.mxu0 %v259
    %527 = vmatpush1.msra.mxu0 %v258
    %528 = vmatprep.subr.mxu0 %v267
    %529 = vmatpush1.msra.mxu0 %v266
    %530 = vmatprep.subr.mxu0 %v275
    %531 = vmatpush1.msra.mxu0 %v274
    %532 = vmatprep.subr.mxu0 %v283
    %533 = vmatpush1.msra.mxu0 %v282
    %534 = vmatprep.mubr.f32.mxu0 %v29
    %535 = vmatmul.mubr.f32.gmra.mrb[0].mxu0 %v28
    %v536 = vpop.f32.mrb[0].mxu0
    %v537 = vadd.f32 %v307, %v536
    %v538 = vpop.f32.mrb[0].mxu0
    %v539 = vadd.f32 %v311, %v538
    %540 = vdwg.mxu0
    %541 = vmatprep.subr.mxu0 %v37
    %542 = vmatpush1.msra.mxu0 %v36
    %543 = vmatprep.subr.mxu0 %v45
    %544 = vmatpush1.msra.mxu0 %v44
    %545 = vmatprep.subr.mxu0 %v53
    %546 = vmatpush1.msra.mxu0 %v52
    %547 = vmatprep.subr.mxu0 %v61
    %548 = vmatpush1.msra.mxu0 %v60
    %549 = vmatprep.subr.mxu0 %v69
    %550 = vmatpush1.msra.mxu0 %v68
    %551 = vmatprep.subr.mxu0 %v77
    %552 = vmatpush1.msra.mxu0 %v76
    %553 = vmatprep.subr.mxu0 %v85
    %554 = vmatpush1.msra.mxu0 %v84
    %555 = vmatprep.subr.mxu0 %v93
    %556 = vmatpush1.msra.mxu0 %v92
    %557 = vmatprep.subr.mxu0 %v101
    %558 = vmatpush1.msra.mxu0 %v100
    %559 = vmatprep.subr.mxu0 %v109
    %560 = vmatpush1.msra.mxu0 %v108
    %561 = vmatprep.subr.mxu0 %v117
    %562 = vmatpush1.msra.mxu0 %v116
    %563 = vmatprep.subr.mxu0 %v125
    %564 = vmatpush1.msra.mxu0 %v124
    %565 = vmatprep.subr.mxu0 %v133
    %566 = vmatpush1.msra.mxu0 %v132
    %567 = vmatprep.subr.mxu0 %v141
    %568 = vmatpush1.msra.mxu0 %v140
    %569 = vmatprep.subr.mxu0 %v149
    %570 = vmatpush1.msra.mxu0 %v148
    %571 = vmatprep.subr.mxu0 %v157
    %572 = vmatpush1.msra.mxu0 %v156
    %573 = vmatprep.subr.mxu0 %v165
    %574 = vmatpush1.msra.mxu0 %v164
    %575 = vmatprep.subr.mxu0 %v173
    %576 = vmatpush1.msra.mxu0 %v172
    %577 = vmatprep.subr.mxu0 %v181
    %578 = vmatpush1.msra.mxu0 %v180
    %579 = vmatprep.subr.mxu0 %v189
    %580 = vmatpush1.msra.mxu0 %v188
    %581 = vmatprep.subr.mxu0 %v197
    %582 = vmatpush1.msra.mxu0 %v196
    %583 = vmatprep.subr.mxu0 %v205
    %584 = vmatpush1.msra.mxu0 %v204
    %585 = vmatprep.subr.mxu0 %v213
    %586 = vmatpush1.msra.mxu0 %v212
    %587 = vmatprep.subr.mxu0 %v221
    %588 = vmatpush1.msra.mxu0 %v220
    %589 = vmatprep.subr.mxu0 %v229
    %590 = vmatpush1.msra.mxu0 %v228
    %591 = vmatprep.subr.mxu0 %v237
    %592 = vmatpush1.msra.mxu0 %v236
    %593 = vmatprep.subr.mxu0 %v245
    %594 = vmatpush1.msra.mxu0 %v244
    %595 = vmatprep.subr.mxu0 %v253
    %596 = vmatpush1.msra.mxu0 %v252
    %597 = vmatprep.subr.mxu0 %v261
    %598 = vmatpush1.msra.mxu0 %v260
    %599 = vmatprep.subr.mxu0 %v269
    %600 = vmatpush1.msra.mxu0 %v268
    %601 = vmatprep.subr.mxu0 %v277
    %602 = vmatpush1.msra.mxu0 %v276
    %603 = vmatprep.subr.mxu0 %v285
    %604 = vmatpush1.msra.mxu0 %v284
    %605 = vmatprep.mubr.f32.mxu0 %v29
    %606 = vmatmul.mubr.f32.gmra.mrb[0].mxu0 %v28
    %v607 = vpop.f32.mrb[0].mxu0
    %v608 = vadd.f32 %v315, %v607
    %v609 = vpop.f32.mrb[0].mxu0
    %v610 = vadd.f32 %v319, %v609
    %611 = vdwg.mxu0
    %612 = vst [vmem:[%s3] sm:$0xff] %v395
    %613 = vst [vmem:[%s3 + $0x8] sm:$0xff] %v397
    %614 = vst [vmem:[%s3 + $0x10] sm:$0xff] %v466
    %615 = vst [vmem:[%s3 + $0x18] sm:$0xff] %v468
    %616 = vst [vmem:[%s3 + $0x20] sm:$0xff] %v537
    %617 = vst [vmem:[%s3 + $0x28] sm:$0xff] %v539
    %618 = vst [vmem:[%s3 + $0x30] sm:$0xff] %v608
    %619 = vst [vmem:[%s3 + $0x38] sm:$0xff] %v610
    // Predicated region
    $region18: #{fft3_forward.2} parent=1 // pred_check
      _
    $region19: #{fft3_forward.2} parent=1 // pred_check_branch
      %621 = sbr.rel (0) target = $region21
    $region20: #{fft3_forward.2} parent=1 // pred_region
      _
    $region21: #{fft3_forward.2} parent=1 // pred_fallthru
      _
    // Predicated region
    $region22: #{fft3_forward.2} parent=1 // pred_check
      _
    $region23: #{fft3_forward.2} parent=1 // pred_check_branch
      %623 = sbr.rel (0) target = $region25
    $region24: #{fft3_forward.2} parent=1 // pred_region
      _
    $region25: #{fft3_forward.2} parent=1 // pred_fallthru
      _
    %624 = vsyncpa [#allocation3], 1

// kernel: fft3_forward.3
$region0: #{fft3_forward.3}
  #allocation0 [shape = 'u32[]', space=smem, size = 0x4, offset = 0x4, fixed_abs, tag = 'smem constant byte address 0x4 - core index']
  #allocation1 [shape = 'u32[144,128]{1,0:T(1,128)}', space=vmem, size = 0x12000, scoped, tag = 'internal scratch']
  %s0 = inlined_call_operand.vmem [shape: f32[2,16,256], index: 0, kind: input, shape index: {}]
  %s1 = inlined_call_operand.vmem [shape: f32[16,49], index: 1, kind: input, shape index: {}]
  %s2 = inlined_call_operand.vmem [shape: f32[49,256], index: 2, kind: input, shape index: {}]
  %s3 = inlined_call_operand.vmem [shape: f32[16,1], index: 3, kind: input, shape index: {}]
  %s4 = inlined_call_operand.vmem [shape: f32[4,16], index: 4, kind: input, shape index: {}]
  %s5 = inlined_call_operand.vmem [shape: f32[4,1], index: 5, kind: input, shape index: {}]
  %s6 = inlined_call_operand.vmem [shape: f32[2,4,256], index: 6, kind: output, shape index: {}]
  %s7 = sld [smem:[#allocation0]]
  $region57: #{fft3_forward.3} parent=0
    _
  %s9 = ssub.s32 1, %s7
  %s10 = scalar_select 0, %s9, %s7
  loop: start=0, step=1, limit=4
  $region2: #{fft3_forward.3} parent=0 // loop_pre_header
    _
  $region3: #{fft3_forward.3} parent=0 // loop_header
    %s12 = sphi 0, %s16
    %p13 = scmp.ge.s32.totalorder %s12, 4
    %s22 = sphi 0, %s24
    %s25 = sphi 0, %s22
    %s26 = sphi 0, %s25
    %s42 = sphi 0, %s26
    %s46 = sphi 0, %s46
    %s48 = sphi 0, %s46
    %s49 = sphi 0, %s48
    %s63 = sphi 0, %s49
    %s67 = sphi 0, %s67
    %s69 = sphi 0, %s67
    %s70 = sphi 0, %s69
    %s84 = sphi 0, %s70
    %s88 = sphi 0, %s88
    %s90 = sphi 0, %s88
    %s91 = sphi 0, %s90
    %s105 = sphi 0, %s91
    %s109 = sphi 0, %s109
    %s111 = sphi 0, %s109
    %s112 = sphi 0, %s111
    %s126 = sphi 0, %s112
    %s130 = sphi 0, %s130
    %s132 = sphi 0, %s130
    %s133 = sphi 0, %s132
    %s147 = sphi 0, %s133
    %s153 = sphi 0, %s155
    %s156 = sphi 0, %s153
    %s157 = sphi 0, %s156
    %s173 = sphi 0, %s157
  $region4: #{fft3_forward.3} parent=0 // loop_header_branch
    %15 = sbr.rel (%p13) target = $region8
  $region5: #{fft3_forward.3} parent=0 // loop_body
    %s17 = ssub.s32 %s12, 1
    %s18 = ssub.s32 %s12, 2
    %s19 = sadd.s32 %s12, 1
    %s20 = ssub.s32 %s12, %s19
    %p21 = scmp.eq.s32.totalorder %s20, 0
    %s23 = sadd.s32 %s22, 1
    %s24 = scalar_select %p21, %s22, %s23
    %p27 = pneg %p21
    %p28 = scmp.eq.s32.totalorder %s12, 1
    %p29 = por %p27, %p28
    %p30 = scmp.ne.s32.totalorder %s22, %s25
    %p31 = scmp.eq.s32.totalorder %s12, 0
    %p32 = por %p30, %p31
    %p33 = scmp.ne.s32.totalorder %s22, %s25
    %p34 = scmp.eq.s32.totalorder %s17, 1
    %p35 = por %p33, %p34
    %p36 = scmp.ne.s32.totalorder %s25, %s26
    %p37 = scmp.eq.s32.totalorder %s17, 0
    %p38 = por %p36, %p37
    %p39 = scmp.ne.s32.totalorder %s25, %s26
    %p40 = scmp.eq.s32.totalorder %s18, 1
    %p41 = por %p39, %p40
    %p43 = scmp.ne.s32.totalorder %s26, %s42
    %p44 = scmp.eq.s32.totalorder %s18, 0
    %p45 = por %p43, %p44
    %s47 = sadd.s32 %s46, 1
    %p50 = scmp.eq.s32.totalorder %s12, 1
    %p51 = scmp.ne.s32.totalorder %s46, %s48
    %p52 = scmp.eq.s32.totalorder %s12, 0
    %p53 = por %p51, %p52
    %p54 = scmp.ne.s32.totalorder %s46, %s48
    %p55 = scmp.eq.s32.totalorder %s17, 1
    %p56 = por %p54, %p55
    %p57 = scmp.ne.s32.totalorder %s48, %s49
    %p58 = scmp.eq.s32.totalorder %s17, 0
    %p59 = por %p57, %p58
    %p60 = scmp.ne.s32.totalorder %s48, %s49
    %p61 = scmp.eq.s32.totalorder %s18, 1
    %p62 = por %p60, %p61
    %p64 = scmp.ne.s32.totalorder %s49, %s63
    %p65 = scmp.eq.s32.totalorder %s18, 0
    %p66 = por %p64, %p65
    %s68 = sadd.s32 %s67, 1
    %p71 = scmp.eq.s32.totalorder %s12, 1
    %p72 = scmp.ne.s32.totalorder %s67, %s69
    %p73 = scmp.eq.s32.totalorder %s12, 0
    %p74 = por %p72, %p73
    %p75 = scmp.ne.s32.totalorder %s67, %s69
    %p76 = scmp.eq.s32.totalorder %s17, 1
    %p77 = por %p75, %p76
    %p78 = scmp.ne.s32.totalorder %s69, %s70
    %p79 = scmp.eq.s32.totalorder %s17, 0
    %p80 = por %p78, %p79
    %p81 = scmp.ne.s32.totalorder %s69, %s70
    %p82 = scmp.eq.s32.totalorder %s18, 1
    %p83 = por %p81, %p82
    %p85 = scmp.ne.s32.totalorder %s70, %s84
    %p86 = scmp.eq.s32.totalorder %s18, 0
    %p87 = por %p85, %p86
    %s89 = sadd.s32 %s88, 1
    %p92 = scmp.eq.s32.totalorder %s12, 1
    %p93 = scmp.ne.s32.totalorder %s88, %s90
    %p94 = scmp.eq.s32.totalorder %s12, 0
    %p95 = por %p93, %p94
    %p96 = scmp.ne.s32.totalorder %s88, %s90
    %p97 = scmp.eq.s32.totalorder %s17, 1
    %p98 = por %p96, %p97
    %p99 = scmp.ne.s32.totalorder %s90, %s91
    %p100 = scmp.eq.s32.totalorder %s17, 0
    %p101 = por %p99, %p100
    %p102 = scmp.ne.s32.totalorder %s90, %s91
    %p103 = scmp.eq.s32.totalorder %s18, 1
    %p104 = por %p102, %p103
    %p106 = scmp.ne.s32.totalorder %s91, %s105
    %p107 = scmp.eq.s32.totalorder %s18, 0
    %p108 = por %p106, %p107
    %s110 = sadd.s32 %s109, 1
    %p113 = scmp.eq.s32.totalorder %s12, 1
    %p114 = scmp.ne.s32.totalorder %s109, %s111
    %p115 = scmp.eq.s32.totalorder %s12, 0
    %p116 = por %p114, %p115
    %p117 = scmp.ne.s32.totalorder %s109, %s111
    %p118 = scmp.eq.s32.totalorder %s17, 1
    %p119 = por %p117, %p118
    %p120 = scmp.ne.s32.totalorder %s111, %s112
    %p121 = scmp.eq.s32.totalorder %s17, 0
    %p122 = por %p120, %p121
    %p123 = scmp.ne.s32.totalorder %s111, %s112
    %p124 = scmp.eq.s32.totalorder %s18, 1
    %p125 = por %p123, %p124
    %p127 = scmp.ne.s32.totalorder %s112, %s126
    %p128 = scmp.eq.s32.totalorder %s18, 0
    %p129 = por %p127, %p128
    %s131 = sadd.s32 %s130, 1
    %p134 = scmp.eq.s32.totalorder %s12, 1
    %p135 = scmp.ne.s32.totalorder %s130, %s132
    %p136 = scmp.eq.s32.totalorder %s12, 0
    %p137 = por %p135, %p136
    %p138 = scmp.ne.s32.totalorder %s130, %s132
    %p139 = scmp.eq.s32.totalorder %s17, 1
    %p140 = por %p138, %p139
    %p141 = scmp.ne.s32.totalorder %s132, %s133
    %p142 = scmp.eq.s32.totalorder %s17, 0
    %p143 = por %p141, %p142
    %p144 = scmp.ne.s32.totalorder %s132, %s133
    %p145 = scmp.eq.s32.totalorder %s18, 1
    %p146 = por %p144, %p145
    %p148 = scmp.ne.s32.totalorder %s133, %s147
    %p149 = scmp.eq.s32.totalorder %s18, 0
    %p150 = por %p148, %p149
    %s151 = ssub.s32 %s12, %s19
    %p152 = scmp.eq.s32.totalorder %s151, 0
    %s154 = sadd.s32 %s153, 1
    %s155 = scalar_select %p152, %s153, %s154
    %p158 = pneg %p152
    %p159 = scmp.eq.s32.totalorder %s12, 1
    %p160 = por %p158, %p159
    %p161 = scmp.ne.s32.totalorder %s153, %s156
    %p162 = scmp.eq.s32.totalorder %s12, 0
    %p163 = por %p161, %p162
    %p164 = scmp.ne.s32.totalorder %s153, %s156
    %p165 = scmp.eq.s32.totalorder %s17, 1
    %p166 = por %p164, %p165
    %p167 = scmp.ne.s32.totalorder %s156, %s157
    %p168 = scmp.eq.s32.totalorder %s17, 0
    %p169 = por %p167, %p168
    %p170 = scmp.ne.s32.totalorder %s156, %s157
    %p171 = scmp.eq.s32.totalorder %s18, 1
    %p172 = por %p170, %p171
    %p174 = scmp.ne.s32.totalorder %s157, %s173
    %p175 = scmp.eq.s32.totalorder %s18, 0
    %p176 = por %p174, %p175
    %p177 = scmp.le.s32.totalorder 1, %s12
    %p178 = scmp.lt.s32.totalorder %s12, 3
    %p179 = pnand %p177, %p178
    %p180 = pneg %p179
    // Predicated region
    $region9: #{fft3_forward.3} parent=5 // pred_check
      _
    $region10: #{fft3_forward.3} parent=5 // pred_check_branch
      %182 = sbr.rel (%p179) target = $region12
    $region11: #{fft3_forward.3} parent=5 // pred_region
      %s183 = ssub.s32 %s12, 1
      // Predicated region
      $region13: #{fft3_forward.3} parent=11 // pred_check
        %p184 = pneg %p59
      $region14: #{fft3_forward.3} parent=11 // pred_check_branch
        %186 = sbr.rel (%p184) target = $region16
      $region15: #{fft3_forward.3} parent=11 // pred_region
        _
      $region16: #{fft3_forward.3} parent=11 // pred_fallthru
        _
      // Predicated region
      $region17: #{fft3_forward.3} parent=11 // pred_check
        %p187 = pneg %p80
      $region18: #{fft3_forward.3} parent=11 // pred_check_branch
        %189 = sbr.rel (%p187) target = $region20
      $region19: #{fft3_forward.3} parent=11 // pred_region
        _
      $region20: #{fft3_forward.3} parent=11 // pred_fallthru
        _
      // Predicated region
      $region21: #{fft3_forward.3} parent=11 // pred_check
        %p190 = pneg %p101
      $region22: #{fft3_forward.3} parent=11 // pred_check_branch
        %192 = sbr.rel (%p190) target = $region24
      $region23: #{fft3_forward.3} parent=11 // pred_region
        _
      $region24: #{fft3_forward.3} parent=11 // pred_fallthru
        _
      // Predicated region
      $region25: #{fft3_forward.3} parent=11 // pred_check
        %p193 = pneg %p122
      $region26: #{fft3_forward.3} parent=11 // pred_check_branch
        %195 = sbr.rel (%p193) target = $region28
      $region27: #{fft3_forward.3} parent=11 // pred_region
        _
      $region28: #{fft3_forward.3} parent=11 // pred_fallthru
        _
      // Predicated region
      $region29: #{fft3_forward.3} parent=11 // pred_check
        %p196 = pneg %p143
      $region30: #{fft3_forward.3} parent=11 // pred_check_branch
        %198 = sbr.rel (%p196) target = $region32
      $region31: #{fft3_forward.3} parent=11 // pred_region
        _
      $region32: #{fft3_forward.3} parent=11 // pred_fallthru
        _
    $region12: #{fft3_forward.3} parent=5 // pred_fallthru
      _
    %p199 = scmp.lt.s32.totalorder %s12, 2
    // Predicated region
    $region33: #{fft3_forward.3} parent=5 // pred_check
      %p200 = pneg %p199
    $region34: #{fft3_forward.3} parent=5 // pred_check_branch
      %202 = sbr.rel (%p200) target = $region36
    $region35: #{fft3_forward.3} parent=5 // pred_region
      // Predicated region
      $region37: #{fft3_forward.3} parent=35 // pred_check
        %p203 = pneg %p32
      $region38: #{fft3_forward.3} parent=35 // pred_check_branch
        %205 = sbr.rel (%p203) target = $region40
      $region39: #{fft3_forward.3} parent=35 // pred_region
        %p206 = scmp.lt.s32.totalorder %s12, 1
        %s207 = scalar_select %p206, %s12, 1
        %s208 = smul.addr %s207, 4
        %s209 = smul.addr %s208, 8
        %s210 = scalar_lea.vmem %s0, %s209
      $region40: #{fft3_forward.3} parent=35 // pred_fallthru
        _
    $region36: #{fft3_forward.3} parent=5 // pred_fallthru
      _
    %p211 = scmp.le.s32.totalorder 1, %s12
    %p212 = scmp.lt.s32.totalorder %s12, 3
    %p213 = pnand %p211, %p212
    %p214 = pneg %p213
    // Predicated region
    $region41: #{fft3_forward.3} parent=5 // pred_check
      _
    $region42: #{fft3_forward.3} parent=5 // pred_check_branch
      %216 = sbr.rel (%p213) target = $region44
    $region43: #{fft3_forward.3} parent=5 // pred_region
      %s217 = ssub.s32 %s12, 1
      %p218 = scmp.lt.s32.totalorder %s17, 1
      %s219 = scalar_select %p218, %s17, 1
      %s220 = smul.addr %s219, 4
      %s221 = smul.addr %s220, 8
      %s222 = scalar_lea.vmem %s0, %s221
      %p223 = pneg %p38
      %p224 = pneg %p35
      %p225 = pneg %p59
      %p226 = pneg %p56
      %p227 = pneg %p80
      %p228 = pneg %p77
      %p229 = pneg %p101
      %p230 = pneg %p98
      %p231 = pneg %p122
      %p232 = pneg %p119
      %p233 = pneg %p143
      %p234 = pneg %p140
      %p235 = pneg %p169
      %p236 = pneg %p166
      %p237 = scmp.lt.s32.totalorder %s17, 1
      %s238 = scalar_select %p237, %s17, 1
      %s239 = smul.addr %s238, 2
      %s240 = smul.addr %s239, 4
      %s241 = scalar_lea.vmem %s6, %s240
      %p242 = scmp.lt.s32.totalorder %s17, 1
      %s243 = scalar_select %p242, %s17, 1
      %s244 = smul.addr %s243, 4
      %s245 = smul.addr %s244, 8
      %s246 = scalar_lea.vmem %s0, %s245
      %p247 = scmp.lt.s32.totalorder %s17, 1
      %s248 = scalar_select %p247, %s17, 1
      %s249 = smul.addr %s248, 2
      %s250 = smul.addr %s249, 4
      %s251 = scalar_lea.vmem %s6, %s250
      %v252 = vld [vmem:[%s246] sm:$0xff]
      %v253 = vld [vmem:[%s246 + $0x8] sm:$0xff]
      %v254 = vld [vmem:[%s246 + $0x10] sm:$0xff]
      %v255 = vld [vmem:[%s246 + $0x18] sm:$0xff]
      %256 = vrot.lane.b32.xlu0 %v252, 51
      %v257 = vpop.permute.xlu0 %256
      %258 = vrot.lane.b32.xlu0 %v254, 51
      %v259 = vpop.permute.xlu0 %258
      %260 = vrot.lane.b32.xlu0 %v253, 51
      %v261 = vpop.permute.xlu0 %260
      %262 = vrot.lane.b32.xlu0 %v255, 51
      %v263 = vpop.permute.xlu0 %262
      %v264 = vlaneseq
      %v265 = vand.u32 %v264, 127
      %vm266 = vcmp.lt.s32.totalorder %v265, 51
      %v267 = vsel %vm266, %v257, %v261
      %v268 = vsel %vm266, %v259, %v263
      %v269 = vsel %vm266, %v261, %v257
      %v270 = vsel %vm266, %v263, %v259
      %v271 = vld [vmem:[%s1] sm:$0xff]
      %v272 = vld [vmem:[%s1 + $0x8] sm:$0xff]
      %v273 = vld [vmem:[%s2] ss:$8 sm:$0x3]
      %v275 = vlaneseq
      %v276 = vshrl.u32 %v275, 7
      %v277 = vsub.s32 0, %v276
      %v278 = vrot.slane %v273, %v277
      %v279 = vlaneseq
      %v280 = vshrl.u32 %v279, 7
      %v281 = vsub.s32 1, %v280
      %v282 = vrot.slane %v273, %v281
      %v285 = vmul.f32 %v269, %v278
      %v286 = vmul.f32 %v267, %v282
      %v287 = vmul.f32 %v270, %v278
      %v288 = vmul.f32 %v268, %v282
      %290 = vset.pattern.permute.xlu0 0
      %291 = vperm.xlu0 %290, %v271
      %v292 = vpop.permute.xlu0 %291
      %295 = vset.pattern.permute.xlu0 0
      %296 = vperm.xlu0 %295, %v272
      %v297 = vpop.permute.xlu0 %296
      %v299 = vmul.f32 %v292, %v285
      %v300 = vmul.f32 %v292, %v286
      %v301 = vmul.f32 %v297, %v287
      %v302 = vmul.f32 %v297, %v288
      %v303 = vadd.f32 %v299, 0.0
      %v304 = vadd.f32 %v300, 0.0
      %v305 = vadd.f32 %v301, 0.0
      %v306 = vadd.f32 %v302, 0.0
      %307 = vrot.lane.b32.xlu0 %v252, 50
      %v308 = vpop.permute.xlu0 %307
      %309 = vrot.lane.b32.xlu0 %v254, 50
      %v310 = vpop.permute.xlu0 %309
      %311 = vrot.lane.b32.xlu0 %v253, 50
      %v312 = vpop.permute.xlu0 %311
      %313 = vrot.lane.b32.xlu0 %v255, 50
      %v314 = vpop.permute.xlu0 %313
      %vm315 = vcmp.lt.s32.totalorder %v265, 50
      %v316 = vsel %vm315, %v308, %v312
      %v317 = vsel %vm315, %v310, %v314
      %v318 = vsel %vm315, %v312, %v308
      %v319 = vsel %vm315, %v314, %v310
      %s320 = scalar_lea.vmem %s2, 1
      %v321 = vld [vmem:[%s320] ss:$8 sm:$0x3]
      %v323 = vlaneseq
      %v324 = vshrl.u32 %v323, 7
      %v325 = vsub.s32 0, %v324
      %v326 = vrot.slane %v321, %v325
      %v327 = vlaneseq
      %v328 = vshrl.u32 %v327, 7
      %v329 = vsub.s32 1, %v328
      %v330 = vrot.slane %v321, %v329
      %v333 = vmul.f32 %v318, %v326
      %v334 = vmul.f32 %v316, %v330
      %v335 = vmul.f32 %v319, %v326
      %v336 = vmul.f32 %v317, %v330
      %337 = vset.pattern.permute.xlu0 1
      %338 = vperm.xlu0 %337, %v271
      %v339 = vpop.permute.xlu0 %338
      %341 = vset.pattern.permute.xlu0 1
      %342 = vperm.xlu0 %341, %v272
      %v343 = vpop.permute.xlu0 %342
      %v345 = vmul.f32 %v339, %v333
      %v346 = vmul.f32 %v339, %v334
      %v347 = vmul.f32 %v343, %v335
      %v348 = vmul.f32 %v343, %v336
      %v349 = vadd.f32 %v303, %v345
      %v350 = vadd.f32 %v304, %v346
      %v351 = vadd.f32 %v305, %v347
      %v352 = vadd.f32 %v306, %v348
      %353 = vrot.lane.b32.xlu0 %v252, 49
      %v354 = vpop.permute.xlu0 %353
      %355 = vrot.lane.b32.xlu0 %v254, 49
      %v356 = vpop.permute.xlu0 %355
      %357 = vrot.lane.b32.xlu0 %v253, 49
      %v358 = vpop.permute.xlu0 %357
      %359 = vrot.lane.b32.xlu0 %v255, 49
      %v360 = vpop.permute.xlu0 %359
      %vm361 = vcmp.lt.s32.totalorder %v265, 49
      %v362 = vsel %vm361, %v354, %v358
      %v363 = vsel %vm361, %v356, %v360
      %v364 = vsel %vm361, %v358, %v354
      %v365 = vsel %vm361, %v360, %v356
      %s366 = scalar_lea.vmem %s2, 2
      %v367 = vld [vmem:[%s366] ss:$8 sm:$0x3]
      %v369 = vlaneseq
      %v370 = vshrl.u32 %v369, 7
      %v371 = vsub.s32 0, %v370
      %v372 = vrot.slane %v367, %v371
      %v373 = vlaneseq
      %v374 = vshrl.u32 %v373, 7
      %v375 = vsub.s32 1, %v374
      %v376 = vrot.slane %v367, %v375
      %v379 = vmul.f32 %v364, %v372
      %v380 = vmul.f32 %v362, %v376
      %v381 = vmul.f32 %v365, %v372
      %v382 = vmul.f32 %v363, %v376
      %383 = vset.pattern.permute.xlu0 2
      %384 = vperm.xlu0 %383, %v271
      %v385 = vpop.permute.xlu0 %384
      %387 = vset.pattern.permute.xlu0 2
      %388 = vperm.xlu0 %387, %v272
      %v389 = vpop.permute.xlu0 %388
      %v391 = vmul.f32 %v385, %v379
      %v392 = vmul.f32 %v385, %v380
      %v393 = vmul.f32 %v389, %v381
      %v394 = vmul.f32 %v389, %v382
      %v395 = vadd.f32 %v349, %v391
      %v396 = vadd.f32 %v350, %v392
      %v397 = vadd.f32 %v351, %v393
      %v398 = vadd.f32 %v352, %v394
      %399 = vrot.lane.b32.xlu0 %v252, 48
      %v400 = vpop.permute.xlu0 %399
      %401 = vrot.lane.b32.xlu0 %v254, 48
      %v402 = vpop.permute.xlu0 %401
      %403 = vrot.lane.b32.xlu0 %v253, 48
      %v404 = vpop.permute.xlu0 %403
      %405 = vrot.lane.b32.xlu0 %v255, 48
      %v406 = vpop.permute.xlu0 %405
      %vm407 = vcmp.lt.s32.totalorder %v265, 48
      %v408 = vsel %vm407, %v400, %v404
      %v409 = vsel %vm407, %v402, %v406
      %v410 = vsel %vm407, %v404, %v400
      %v411 = vsel %vm407, %v406, %v402
      %s412 = scalar_lea.vmem %s2, 3
      %v413 = vld [vmem:[%s412] ss:$8 sm:$0x3]
      %v415 = vlaneseq
      %v416 = vshrl.u32 %v415, 7
      %v417 = vsub.s32 0, %v416
      %v418 = vrot.slane %v413, %v417
      %v419 = vlaneseq
      %v420 = vshrl.u32 %v419, 7
      %v421 = vsub.s32 1, %v420
      %v422 = vrot.slane %v413, %v421
      %v425 = vmul.f32 %v410, %v418
      %v426 = vmul.f32 %v408, %v422
      %v427 = vmul.f32 %v411, %v418
      %v428 = vmul.f32 %v409, %v422
      %429 = vset.pattern.permute.xlu0 3
      %430 = vperm.xlu0 %429, %v271
      %v431 = vpop.permute.xlu0 %430
      %433 = vset.pattern.permute.xlu0 3
      %434 = vperm.xlu0 %433, %v272
      %v435 = vpop.permute.xlu0 %434
      %v437 = vmul.f32 %v431, %v425
      %v438 = vmul.f32 %v431, %v426
      %v439 = vmul.f32 %v435, %v427
      %v440 = vmul.f32 %v435, %v428
      %v441 = vadd.f32 %v395, %v437
      %v442 = vadd.f32 %v396, %v438
      %v443 = vadd.f32 %v397, %v439
      %v444 = vadd.f32 %v398, %v440
      %445 = vrot.lane.b32.xlu0 %v252, 47
      %v446 = vpop.permute.xlu0 %445
      %447 = vrot.lane.b32.xlu0 %v254, 47
      %v448 = vpop.permute.xlu0 %447
      %449 = vrot.lane.b32.xlu0 %v253, 47
      %v450 = vpop.permute.xlu0 %449
      %451 = vrot.lane.b32.xlu0 %v255, 47
      %v452 = vpop.permute.xlu0 %451
      %vm453 = vcmp.lt.s32.totalorder %v265, 47
      %v454 = vsel %vm453, %v446, %v450
      %v455 = vsel %vm453, %v448, %v452
      %v456 = vsel %vm453, %v450, %v446
      %v457 = vsel %vm453, %v452, %v448
      %s458 = scalar_lea.vmem %s2, 4
      %v459 = vld [vmem:[%s458] ss:$8 sm:$0x3]
      %v461 = vlaneseq
      %v462 = vshrl.u32 %v461, 7
      %v463 = vsub.s32 0, %v462
      %v464 = vrot.slane %v459, %v463
      %v465 = vlaneseq
      %v466 = vshrl.u32 %v465, 7
      %v467 = vsub.s32 1, %v466
      %v468 = vrot.slane %v459, %v467
      %v471 = vmul.f32 %v456, %v464
      %v472 = vmul.f32 %v454, %v468
      %v473 = vmul.f32 %v457, %v464
      %v474 = vmul.f32 %v455, %v468
      %475 = vset.pattern.permute.xlu0 4
      %476 = vperm.xlu0 %475, %v271
      %v477 = vpop.permute.xlu0 %476
      %479 = vset.pattern.permute.xlu0 4
      %480 = vperm.xlu0 %479, %v272
      %v481 = vpop.permute.xlu0 %480
      %v483 = vmul.f32 %v477, %v471
      %v484 = vmul.f32 %v477, %v472
      %v485 = vmul.f32 %v481, %v473
      %v486 = vmul.f32 %v481, %v474
      %v487 = vadd.f32 %v441, %v483
      %v488 = vadd.f32 %v442, %v484
      %v489 = vadd.f32 %v443, %v485
      %v490 = vadd.f32 %v444, %v486
      %491 = vrot.lane.b32.xlu0 %v252, 46
      %v492 = vpop.permute.xlu0 %491
      %493 = vrot.lane.b32.xlu0 %v254, 46
      %v494 = vpop.permute.xlu0 %493
      %495 = vrot.lane.b32.xlu0 %v253, 46
      %v496 = vpop.permute.xlu0 %495
      %497 = vrot.lane.b32.xlu0 %v255, 46
      %v498 = vpop.permute.xlu0 %497
      %vm499 = vcmp.lt.s32.totalorder %v265, 46
      %v500 = vsel %vm499, %v492, %v496
      %v501 = vsel %vm499, %v494, %v498
      %v502 = vsel %vm499, %v496, %v492
      %v503 = vsel %vm499, %v498, %v494
      %s504 = scalar_lea.vmem %s2, 5
      %v505 = vld [vmem:[%s504] ss:$8 sm:$0x3]
      %v507 = vlaneseq
      %v508 = vshrl.u32 %v507, 7
      %v509 = vsub.s32 0, %v508
      %v510 = vrot.slane %v505, %v509
      %v511 = vlaneseq
      %v512 = vshrl.u32 %v511, 7
      %v513 = vsub.s32 1, %v512
      %v514 = vrot.slane %v505, %v513
      %v517 = vmul.f32 %v502, %v510
      %v518 = vmul.f32 %v500, %v514
      %v519 = vmul.f32 %v503, %v510
      %v520 = vmul.f32 %v501, %v514
      %521 = vset.pattern.permute.xlu0 5
      %522 = vperm.xlu0 %521, %v271
      %v523 = vpop.permute.xlu0 %522
      %525 = vset.pattern.permute.xlu0 5
      %526 = vperm.xlu0 %525, %v272
      %v527 = vpop.permute.xlu0 %526
      %v529 = vmul.f32 %v523, %v517
      %v530 = vmul.f32 %v523, %v518
      %v531 = vmul.f32 %v527, %v519
      %v532 = vmul.f32 %v527, %v520
      %v533 = vadd.f32 %v487, %v529
      %v534 = vadd.f32 %v488, %v530
      %v535 = vadd.f32 %v489, %v531
      %v536 = vadd.f32 %v490, %v532
      %537 = vrot.lane.b32.xlu0 %v252, 45
      %v538 = vpop.permute.xlu0 %537
      %539 = vrot.lane.b32.xlu0 %v254, 45
      %v540 = vpop.permute.xlu0 %539
      %541 = vrot.lane.b32.xlu0 %v253, 45
      %v542 = vpop.permute.xlu0 %541
      %543 = vrot.lane.b32.xlu0 %v255, 45
      %v544 = vpop.permute.xlu0 %543
      %vm545 = vcmp.lt.s32.totalorder %v265, 45
      %v546 = vsel %vm545, %v538, %v542
      %v547 = vsel %vm545, %v540, %v544
      %v548 = vsel %vm545, %v542, %v538
      %v549 = vsel %vm545, %v544, %v540
      %s550 = scalar_lea.vmem %s2, 6
      %v551 = vld [vmem:[%s550] ss:$8 sm:$0x3]
      %v553 = vlaneseq
      %v554 = vshrl.u32 %v553, 7
      %v555 = vsub.s32 0, %v554
      %v556 = vrot.slane %v551, %v555
      %v557 = vlaneseq
      %v558 = vshrl.u32 %v557, 7
      %v559 = vsub.s32 1, %v558
      %v560 = vrot.slane %v551, %v559
      %v563 = vmul.f32 %v548, %v556
      %v564 = vmul.f32 %v546, %v560
      %v565 = vmul.f32 %v549, %v556
      %v566 = vmul.f32 %v547, %v560
      %567 = vset.pattern.permute.xlu0 6
      %568 = vperm.xlu0 %567, %v271
      %v569 = vpop.permute.xlu0 %568
      %571 = vset.pattern.permute.xlu0 6
      %572 = vperm.xlu0 %571, %v272
      %v573 = vpop.permute.xlu0 %572
      %v575 = vmul.f32 %v569, %v563
      %v576 = vmul.f32 %v569, %v564
      %v577 = vmul.f32 %v573, %v565
      %v578 = vmul.f32 %v573, %v566
      %v579 = vadd.f32 %v533, %v575
      %v580 = vadd.f32 %v534, %v576
      %v581 = vadd.f32 %v535, %v577
      %v582 = vadd.f32 %v536, %v578
      %583 = vrot.lane.b32.xlu0 %v252, 35
      %v584 = vpop.permute.xlu0 %583
      %585 = vrot.lane.b32.xlu0 %v254, 35
      %v586 = vpop.permute.xlu0 %585
      %587 = vrot.lane.b32.xlu0 %v253, 35
      %v588 = vpop.permute.xlu0 %587
      %589 = vrot.lane.b32.xlu0 %v255, 35
      %v590 = vpop.permute.xlu0 %589
      %vm591 = vcmp.lt.s32.totalorder %v265, 35
      %v592 = vsel %vm591, %v584, %v588
      %v593 = vsel %vm591, %v586, %v590
      %v594 = vsel %vm591, %v588, %v584
      %v595 = vsel %vm591, %v590, %v586
      %s596 = scalar_lea.vmem %s2, 7
      %v597 = vld [vmem:[%s596] ss:$8 sm:$0x3]
      %v599 = vlaneseq
      %v600 = vshrl.u32 %v599, 7
      %v601 = vsub.s32 0, %v600
      %v602 = vrot.slane %v597, %v601
      %v603 = vlaneseq
      %v604 = vshrl.u32 %v603, 7
      %v605 = vsub.s32 1, %v604
      %v606 = vrot.slane %v597, %v605
      %v609 = vmul.f32 %v594, %v602
      %v610 = vmul.f32 %v592, %v606
      %v611 = vmul.f32 %v595, %v602
      %v612 = vmul.f32 %v593, %v606
      %613 = vset.pattern.permute.xlu0 7
      %614 = vperm.xlu0 %613, %v271
      %v615 = vpop.permute.xlu0 %614
      %617 = vset.pattern.permute.xlu0 7
      %618 = vperm.xlu0 %617, %v272
      %v619 = vpop.permute.xlu0 %618
      %v621 = vmul.f32 %v615, %v609
      %v622 = vmul.f32 %v615, %v610
      %v623 = vmul.f32 %v619, %v611
      %v624 = vmul.f32 %v619, %v612
      %v625 = vadd.f32 %v579, %v621
      %v626 = vadd.f32 %v580, %v622
      %v627 = vadd.f32 %v581, %v623
      %v628 = vadd.f32 %v582, %v624
      %629 = vrot.lane.b32.xlu0 %v252, 34
      %v630 = vpop.permute.xlu0 %629
      %631 = vrot.lane.b32.xlu0 %v254, 34
      %v632 = vpop.permute.xlu0 %631
      %633 = vrot.lane.b32.xlu0 %v253, 34
      %v634 = vpop.permute.xlu0 %633
      %635 = vrot.lane.b32.xlu0 %v255, 34
      %v636 = vpop.permute.xlu0 %635
      %vm637 = vcmp.lt.s32.totalorder %v265, 34
      %v638 = vsel %vm637, %v630, %v634
      %v639 = vsel %vm637, %v632, %v636
      %v640 = vsel %vm637, %v634, %v630
      %v641 = vsel %vm637, %v636, %v632
      %s642 = scalar_lea.vmem %s2, 16
      %v643 = vld [vmem:[%s642] ss:$8 sm:$0x3]
      %v645 = vlaneseq
      %v646 = vshrl.u32 %v645, 7
      %v647 = vsub.s32 0, %v646
      %v648 = vrot.slane %v643, %v647
      %v649 = vlaneseq
      %v650 = vshrl.u32 %v649, 7
      %v651 = vsub.s32 1, %v650
      %v652 = vrot.slane %v643, %v651
      %v655 = vmul.f32 %v640, %v648
      %v656 = vmul.f32 %v638, %v652
      %v657 = vmul.f32 %v641, %v648
      %v658 = vmul.f32 %v639, %v652
      %659 = vset.pattern.permute.xlu0 8
      %660 = vperm.xlu0 %659, %v271
      %v661 = vpop.permute.xlu0 %660
      %663 = vset.pattern.permute.xlu0 8
      %664 = vperm.xlu0 %663, %v272
      %v665 = vpop.permute.xlu0 %664
      %v667 = vmul.f32 %v661, %v655
      %v668 = vmul.f32 %v661, %v656
      %v669 = vmul.f32 %v665, %v657
      %v670 = vmul.f32 %v665, %v658
      %v671 = vadd.f32 %v625, %v667
      %v672 = vadd.f32 %v626, %v668
      %v673 = vadd.f32 %v627, %v669
      %v674 = vadd.f32 %v628, %v670
      %675 = vrot.lane.b32.xlu0 %v252, 33
      %v676 = vpop.permute.xlu0 %675
      %677 = vrot.lane.b32.xlu0 %v254, 33
      %v678 = vpop.permute.xlu0 %677
      %679 = vrot.lane.b32.xlu0 %v253, 33
      %v680 = vpop.permute.xlu0 %679
      %681 = vrot.lane.b32.xlu0 %v255, 33
      %v682 = vpop.permute.xlu0 %681
      %vm683 = vcmp.lt.s32.totalorder %v265, 33
      %v684 = vsel %vm683, %v676, %v680
      %v685 = vsel %vm683, %v678, %v682
      %v686 = vsel %vm683, %v680, %v676
      %v687 = vsel %vm683, %v682, %v678
      %s688 = scalar_lea.vmem %s2, 17
      %v689 = vld [vmem:[%s688] ss:$8 sm:$0x3]
      %v691 = vlaneseq
      %v692 = vshrl.u32 %v691, 7
      %v693 = vsub.s32 0, %v692
      %v694 = vrot.slane %v689, %v693
      %v695 = vlaneseq
      %v696 = vshrl.u32 %v695, 7
      %v697 = vsub.s32 1, %v696
      %v698 = vrot.slane %v689, %v697
      %v701 = vmul.f32 %v686, %v694
      %v702 = vmul.f32 %v684, %v698
      %v703 = vmul.f32 %v687, %v694
      %v704 = vmul.f32 %v685, %v698
      %705 = vset.pattern.permute.xlu0 9
      %706 = vperm.xlu0 %705, %v271
      %v707 = vpop.permute.xlu0 %706
      %709 = vset.pattern.permute.xlu0 9
      %710 = vperm.xlu0 %709, %v272
      %v711 = vpop.permute.xlu0 %710
      %v713 = vmul.f32 %v707, %v701
      %v714 = vmul.f32 %v707, %v702
      %v715 = vmul.f32 %v711, %v703
      %v716 = vmul.f32 %v711, %v704
      %v717 = vadd.f32 %v671, %v713
      %v718 = vadd.f32 %v672, %v714
      %v719 = vadd.f32 %v673, %v715
      %v720 = vadd.f32 %v674, %v716
      %721 = vrot.lane.b32.xlu0 %v252, 32
      %v722 = vpop.permute.xlu0 %721
      %723 = vrot.lane.b32.xlu0 %v254, 32
      %v724 = vpop.permute.xlu0 %723
      %725 = vrot.lane.b32.xlu0 %v253, 32
      %v726 = vpop.permute.xlu0 %725
      %727 = vrot.lane.b32.xlu0 %v255, 32
      %v728 = vpop.permute.xlu0 %727
      %vm729 = vcmp.lt.s32.totalorder %v265, 32
      %v730 = vsel %vm729, %v722, %v726
      %v731 = vsel %vm729, %v724, %v728
      %v732 = vsel %vm729, %v726, %v722
      %v733 = vsel %vm729, %v728, %v724
      %s734 = scalar_lea.vmem %s2, 18
      %v735 = vld [vmem:[%s734] ss:$8 sm:$0x3]
      %v737 = vlaneseq
      %v738 = vshrl.u32 %v737, 7
      %v739 = vsub.s32 0, %v738
      %v740 = vrot.slane %v735, %v739
      %v741 = vlaneseq
      %v742 = vshrl.u32 %v741, 7
      %v743 = vsub.s32 1, %v742
      %v744 = vrot.slane %v735, %v743
      %v747 = vmul.f32 %v732, %v740
      %v748 = vmul.f32 %v730, %v744
      %v749 = vmul.f32 %v733, %v740
      %v750 = vmul.f32 %v731, %v744
      %751 = vset.pattern.permute.xlu0 10
      %752 = vperm.xlu0 %751, %v271
      %v753 = vpop.permute.xlu0 %752
      %755 = vset.pattern.permute.xlu0 10
      %756 = vperm.xlu0 %755, %v272
      %v757 = vpop.permute.xlu0 %756
      %v759 = vmul.f32 %v753, %v747
      %v760 = vmul.f32 %v753, %v748
      %v761 = vmul.f32 %v757, %v749
      %v762 = vmul.f32 %v757, %v750
      %v763 = vadd.f32 %v717, %v759
      %v764 = vadd.f32 %v718, %v760
      %v765 = vadd.f32 %v719, %v761
      %v766 = vadd.f32 %v720, %v762
      %767 = vrot.lane.b32.xlu0 %v252, 31
      %v768 = vpop.permute.xlu0 %767
      %769 = vrot.lane.b32.xlu0 %v254, 31
      %v770 = vpop.permute.xlu0 %769
      %771 = vrot.lane.b32.xlu0 %v253, 31
      %v772 = vpop.permute.xlu0 %771
      %773 = vrot.lane.b32.xlu0 %v255, 31
      %v774 = vpop.permute.xlu0 %773
      %vm775 = vcmp.lt.s32.totalorder %v265, 31
      %v776 = vsel %vm775, %v768, %v772
      %v777 = vsel %vm775, %v770, %v774
      %v778 = vsel %vm775, %v772, %v768
      %v779 = vsel %vm775, %v774, %v770
      %s780 = scalar_lea.vmem %s2, 19
      %v781 = vld [vmem:[%s780] ss:$8 sm:$0x3]
      %v783 = vlaneseq
      %v784 = vshrl.u32 %v783, 7
      %v785 = vsub.s32 0, %v784
      %v786 = vrot.slane %v781, %v785
      %v787 = vlaneseq
      %v788 = vshrl.u32 %v787, 7
      %v789 = vsub.s32 1, %v788
      %v790 = vrot.slane %v781, %v789
      %v793 = vmul.f32 %v778, %v786
      %v794 = vmul.f32 %v776, %v790
      %v795 = vmul.f32 %v779, %v786
      %v796 = vmul.f32 %v777, %v790
      %797 = vset.pattern.permute.xlu0 11
      %798 = vperm.xlu0 %797, %v271
      %v799 = vpop.permute.xlu0 %798
      %801 = vset.pattern.permute.xlu0 11
      %802 = vperm.xlu0 %801, %v272
      %v803 = vpop.permute.xlu0 %802
      %v805 = vmul.f32 %v799, %v793
      %v806 = vmul.f32 %v799, %v794
      %v807 = vmul.f32 %v803, %v795
      %v808 = vmul.f32 %v803, %v796
      %v809 = vadd.f32 %v763, %v805
      %v810 = vadd.f32 %v764, %v806
      %v811 = vadd.f32 %v765, %v807
      %v812 = vadd.f32 %v766, %v808
      %813 = vrot.lane.b32.xlu0 %v252, 30
      %v814 = vpop.permute.xlu0 %813
      %815 = vrot.lane.b32.xlu0 %v254, 30
      %v816 = vpop.permute.xlu0 %815
      %817 = vrot.lane.b32.xlu0 %v253, 30
      %v818 = vpop.permute.xlu0 %817
      %819 = vrot.lane.b32.xlu0 %v255, 30
      %v820 = vpop.permute.xlu0 %819
      %vm821 = vcmp.lt.s32.totalorder %v265, 30
      %v822 = vsel %vm821, %v814, %v818
      %v823 = vsel %vm821, %v816, %v820
      %v824 = vsel %vm821, %v818, %v814
      %v825 = vsel %vm821, %v820, %v816
      %s826 = scalar_lea.vmem %s2, 20
      %v827 = vld [vmem:[%s826] ss:$8 sm:$0x3]
      %v829 = vlaneseq
      %v830 = vshrl.u32 %v829, 7
      %v831 = vsub.s32 0, %v830
      %v832 = vrot.slane %v827, %v831
      %v833 = vlaneseq
      %v834 = vshrl.u32 %v833, 7
      %v835 = vsub.s32 1, %v834
      %v836 = vrot.slane %v827, %v835
      %v839 = vmul.f32 %v824, %v832
      %v840 = vmul.f32 %v822, %v836
      %v841 = vmul.f32 %v825, %v832
      %v842 = vmul.f32 %v823, %v836
      %843 = vset.pattern.permute.xlu0 12
      %844 = vperm.xlu0 %843, %v271
      %v845 = vpop.permute.xlu0 %844
      %847 = vset.pattern.permute.xlu0 12
      %848 = vperm.xlu0 %847, %v272
      %v849 = vpop.permute.xlu0 %848
      %v851 = vmul.f32 %v845, %v839
      %v852 = vmul.f32 %v845, %v840
      %v853 = vmul.f32 %v849, %v841
      %v854 = vmul.f32 %v849, %v842
      %v855 = vadd.f32 %v809, %v851
      %v856 = vadd.f32 %v810, %v852
      %v857 = vadd.f32 %v811, %v853
      %v858 = vadd.f32 %v812, %v854
      %859 = vrot.lane.b32.xlu0 %v252, 29
      %v860 = vpop.permute.xlu0 %859
      %861 = vrot.lane.b32.xlu0 %v254, 29
      %v862 = vpop.permute.xlu0 %861
      %863 = vrot.lane.b32.xlu0 %v253, 29
      %v864 = vpop.permute.xlu0 %863
      %865 = vrot.lane.b32.xlu0 %v255, 29
      %v866 = vpop.permute.xlu0 %865
      %vm867 = vcmp.lt.s32.totalorder %v265, 29
      %v868 = vsel %vm867, %v860, %v864
      %v869 = vsel %vm867, %v862, %v866
      %v870 = vsel %vm867, %v864, %v860
      %v871 = vsel %vm867, %v866, %v862
      %s872 = scalar_lea.vmem %s2, 21
      %v873 = vld [vmem:[%s872] ss:$8 sm:$0x3]
      %v875 = vlaneseq
      %v876 = vshrl.u32 %v875, 7
      %v877 = vsub.s32 0, %v876
      %v878 = vrot.slane %v873, %v877
      %v879 = vlaneseq
      %v880 = vshrl.u32 %v879, 7
      %v881 = vsub.s32 1, %v880
      %v882 = vrot.slane %v873, %v881
      %v885 = vmul.f32 %v870, %v878
      %v886 = vmul.f32 %v868, %v882
      %v887 = vmul.f32 %v871, %v878
      %v888 = vmul.f32 %v869, %v882
      %889 = vset.pattern.permute.xlu0 13
      %890 = vperm.xlu0 %889, %v271
      %v891 = vpop.permute.xlu0 %890
      %893 = vset.pattern.permute.xlu0 13
      %894 = vperm.xlu0 %893, %v272
      %v895 = vpop.permute.xlu0 %894
      %v897 = vmul.f32 %v891, %v885
      %v898 = vmul.f32 %v891, %v886
      %v899 = vmul.f32 %v895, %v887
      %v900 = vmul.f32 %v895, %v888
      %v901 = vadd.f32 %v855, %v897
      %v902 = vadd.f32 %v856, %v898
      %v903 = vadd.f32 %v857, %v899
      %v904 = vadd.f32 %v858, %v900
      %905 = vrot.lane.b32.xlu0 %v252, 19
      %v906 = vpop.permute.xlu0 %905
      %907 = vrot.lane.b32.xlu0 %v254, 19
      %v908 = vpop.permute.xlu0 %907
      %909 = vrot.lane.b32.xlu0 %v253, 19
      %v910 = vpop.permute.xlu0 %909
      %911 = vrot.lane.b32.xlu0 %v255, 19
      %v912 = vpop.permute.xlu0 %911
      %vm913 = vcmp.lt.s32.totalorder %v265, 19
      %v914 = vsel %vm913, %v906, %v910
      %v915 = vsel %vm913, %v908, %v912
      %v916 = vsel %vm913, %v910, %v906
      %v917 = vsel %vm913, %v912, %v908
      %s918 = scalar_lea.vmem %s2, 22
      %v919 = vld [vmem:[%s918] ss:$8 sm:$0x3]
      %v921 = vlaneseq
      %v922 = vshrl.u32 %v921, 7
      %v923 = vsub.s32 0, %v922
      %v924 = vrot.slane %v919, %v923
      %v925 = vlaneseq
      %v926 = vshrl.u32 %v925, 7
      %v927 = vsub.s32 1, %v926
      %v928 = vrot.slane %v919, %v927
      %v931 = vmul.f32 %v916, %v924
      %v932 = vmul.f32 %v914, %v928
      %v933 = vmul.f32 %v917, %v924
      %v934 = vmul.f32 %v915, %v928
      %935 = vset.pattern.permute.xlu0 14
      %936 = vperm.xlu0 %935, %v271
      %v937 = vpop.permute.xlu0 %936
      %939 = vset.pattern.permute.xlu0 14
      %940 = vperm.xlu0 %939, %v272
      %v941 = vpop.permute.xlu0 %940
      %v943 = vmul.f32 %v937, %v931
      %v944 = vmul.f32 %v937, %v932
      %v945 = vmul.f32 %v941, %v933
      %v946 = vmul.f32 %v941, %v934
      %v947 = vadd.f32 %v901, %v943
      %v948 = vadd.f32 %v902, %v944
      %v949 = vadd.f32 %v903, %v945
      %v950 = vadd.f32 %v904, %v946
      %951 = vrot.lane.b32.xlu0 %v252, 18
      %v952 = vpop.permute.xlu0 %951
      %953 = vrot.lane.b32.xlu0 %v254, 18
      %v954 = vpop.permute.xlu0 %953
      %955 = vrot.lane.b32.xlu0 %v253, 18
      %v956 = vpop.permute.xlu0 %955
      %957 = vrot.lane.b32.xlu0 %v255, 18
      %v958 = vpop.permute.xlu0 %957
      %vm959 = vcmp.lt.s32.totalorder %v265, 18
      %v960 = vsel %vm959, %v952, %v956
      %v961 = vsel %vm959, %v954, %v958
      %v962 = vsel %vm959, %v956, %v952
      %v963 = vsel %vm959, %v958, %v954
      %s964 = scalar_lea.vmem %s2, 23
      %v965 = vld [vmem:[%s964] ss:$8 sm:$0x3]
      %v967 = vlaneseq
      %v968 = vshrl.u32 %v967, 7
      %v969 = vsub.s32 0, %v968
      %v970 = vrot.slane %v965, %v969
      %v971 = vlaneseq
      %v972 = vshrl.u32 %v971, 7
      %v973 = vsub.s32 1, %v972
      %v974 = vrot.slane %v965, %v973
      %v977 = vmul.f32 %v962, %v970
      %v978 = vmul.f32 %v960, %v974
      %v979 = vmul.f32 %v963, %v970
      %v980 = vmul.f32 %v961, %v974
      %981 = vset.pattern.permute.xlu0 15
      %982 = vperm.xlu0 %981, %v271
      %v983 = vpop.permute.xlu0 %982
      %985 = vset.pattern.permute.xlu0 15
      %986 = vperm.xlu0 %985, %v272
      %v987 = vpop.permute.xlu0 %986
      %v989 = vmul.f32 %v983, %v977
      %v990 = vmul.f32 %v983, %v978
      %v991 = vmul.f32 %v987, %v979
      %v992 = vmul.f32 %v987, %v980
      %v993 = vadd.f32 %v947, %v989
      %v994 = vadd.f32 %v948, %v990
      %v995 = vadd.f32 %v949, %v991
      %v996 = vadd.f32 %v950, %v992
      %997 = vrot.lane.b32.xlu0 %v252, 17
      %v998 = vpop.permute.xlu0 %997
      %999 = vrot.lane.b32.xlu0 %v254, 17
      %v1000 = vpop.permute.xlu0 %999
      %1001 = vrot.lane.b32.xlu0 %v253, 17
      %v1002 = vpop.permute.xlu0 %1001
      %1003 = vrot.lane.b32.xlu0 %v255, 17
      %v1004 = vpop.permute.xlu0 %1003
      %vm1005 = vcmp.lt.s32.totalorder %v265, 17
      %v1006 = vsel %vm1005, %v998, %v1002
      %v1007 = vsel %vm1005, %v1000, %v1004
      %v1008 = vsel %vm1005, %v1002, %v998
      %v1009 = vsel %vm1005, %v1004, %v1000
      %s1010 = scalar_lea.vmem %s2, 32
      %v1011 = vld [vmem:[%s1010] ss:$8 sm:$0x3]
      %v1013 = vlaneseq
      %v1014 = vshrl.u32 %v1013, 7
      %v1015 = vsub.s32 0, %v1014
      %v1016 = vrot.slane %v1011, %v1015
      %v1017 = vlaneseq
      %v1018 = vshrl.u32 %v1017, 7
      %v1019 = vsub.s32 1, %v1018
      %v1020 = vrot.slane %v1011, %v1019
      %v1023 = vmul.f32 %v1008, %v1016
      %v1024 = vmul.f32 %v1006, %v1020
      %v1025 = vmul.f32 %v1009, %v1016
      %v1026 = vmul.f32 %v1007, %v1020
      %1027 = vset.pattern.permute.xlu0 16
      %1028 = vperm.xlu0 %1027, %v271
      %v1029 = vpop.permute.xlu0 %1028
      %1031 = vset.pattern.permute.xlu0 16
      %1032 = vperm.xlu0 %1031, %v272
      %v1033 = vpop.permute.xlu0 %1032
      %v1035 = vmul.f32 %v1029, %v1023
      %v1036 = vmul.f32 %v1029, %v1024
      %v1037 = vmul.f32 %v1033, %v1025
      %v1038 = vmul.f32 %v1033, %v1026
      %v1039 = vadd.f32 %v993, %v1035
      %v1040 = vadd.f32 %v994, %v1036
      %v1041 = vadd.f32 %v995, %v1037
      %v1042 = vadd.f32 %v996, %v1038
      %1043 = vrot.lane.b32.xlu0 %v252, 16
      %v1044 = vpop.permute.xlu0 %1043
      %1045 = vrot.lane.b32.xlu0 %v254, 16
      %v1046 = vpop.permute.xlu0 %1045
      %1047 = vrot.lane.b32.xlu0 %v253, 16
      %v1048 = vpop.permute.xlu0 %1047
      %1049 = vrot.lane.b32.xlu0 %v255, 16
      %v1050 = vpop.permute.xlu0 %1049
      %vm1051 = vcmp.lt.s32.totalorder %v265, 16
      %v1052 = vsel %vm1051, %v1044, %v1048
      %v1053 = vsel %vm1051, %v1046, %v1050
      %v1054 = vsel %vm1051, %v1048, %v1044
      %v1055 = vsel %vm1051, %v1050, %v1046
      %s1056 = scalar_lea.vmem %s2, 33
      %v1057 = vld [vmem:[%s1056] ss:$8 sm:$0x3]
      %v1059 = vlaneseq
      %v1060 = vshrl.u32 %v1059, 7
      %v1061 = vsub.s32 0, %v1060
      %v1062 = vrot.slane %v1057, %v1061
      %v1063 = vlaneseq
      %v1064 = vshrl.u32 %v1063, 7
      %v1065 = vsub.s32 1, %v1064
      %v1066 = vrot.slane %v1057, %v1065
      %v1069 = vmul.f32 %v1054, %v1062
      %v1070 = vmul.f32 %v1052, %v1066
      %v1071 = vmul.f32 %v1055, %v1062
      %v1072 = vmul.f32 %v1053, %v1066
      %1073 = vset.pattern.permute.xlu0 17
      %1074 = vperm.xlu0 %1073, %v271
      %v1075 = vpop.permute.xlu0 %1074
      %1077 = vset.pattern.permute.xlu0 17
      %1078 = vperm.xlu0 %1077, %v272
      %v1079 = vpop.permute.xlu0 %1078
      %v1081 = vmul.f32 %v1075, %v1069
      %v1082 = vmul.f32 %v1075, %v1070
      %v1083 = vmul.f32 %v1079, %v1071
      %v1084 = vmul.f32 %v1079, %v1072
      %v1085 = vadd.f32 %v1039, %v1081
      %v1086 = vadd.f32 %v1040, %v1082
      %v1087 = vadd.f32 %v1041, %v1083
      %v1088 = vadd.f32 %v1042, %v1084
      %1089 = vrot.lane.b32.xlu0 %v252, 15
      %v1090 = vpop.permute.xlu0 %1089
      %1091 = vrot.lane.b32.xlu0 %v254, 15
      %v1092 = vpop.permute.xlu0 %1091
      %1093 = vrot.lane.b32.xlu0 %v253, 15
      %v1094 = vpop.permute.xlu0 %1093
      %1095 = vrot.lane.b32.xlu0 %v255, 15
      %v1096 = vpop.permute.xlu0 %1095
      %vm1097 = vcmp.lt.s32.totalorder %v265, 15
      %v1098 = vsel %vm1097, %v1090, %v1094
      %v1099 = vsel %vm1097, %v1092, %v1096
      %v1100 = vsel %vm1097, %v1094, %v1090
      %v1101 = vsel %vm1097, %v1096, %v1092
      %s1102 = scalar_lea.vmem %s2, 34
      %v1103 = vld [vmem:[%s1102] ss:$8 sm:$0x3]
      %v1105 = vlaneseq
      %v1106 = vshrl.u32 %v1105, 7
      %v1107 = vsub.s32 0, %v1106
      %v1108 = vrot.slane %v1103, %v1107
      %v1109 = vlaneseq
      %v1110 = vshrl.u32 %v1109, 7
      %v1111 = vsub.s32 1, %v1110
      %v1112 = vrot.slane %v1103, %v1111
      %v1115 = vmul.f32 %v1100, %v1108
      %v1116 = vmul.f32 %v1098, %v1112
      %v1117 = vmul.f32 %v1101, %v1108
      %v1118 = vmul.f32 %v1099, %v1112
      %1119 = vset.pattern.permute.xlu0 18
      %1120 = vperm.xlu0 %1119, %v271
      %v1121 = vpop.permute.xlu0 %1120
      %1123 = vset.pattern.permute.xlu0 18
      %1124 = vperm.xlu0 %1123, %v272
      %v1125 = vpop.permute.xlu0 %1124
      %v1127 = vmul.f32 %v1121, %v1115
      %v1128 = vmul.f32 %v1121, %v1116
      %v1129 = vmul.f32 %v1125, %v1117
      %v1130 = vmul.f32 %v1125, %v1118
      %v1131 = vadd.f32 %v1085, %v1127
      %v1132 = vadd.f32 %v1086, %v1128
      %v1133 = vadd.f32 %v1087, %v1129
      %v1134 = vadd.f32 %v1088, %v1130
      %1135 = vrot.lane.b32.xlu0 %v252, 14
      %v1136 = vpop.permute.xlu0 %1135
      %1137 = vrot.lane.b32.xlu0 %v254, 14
      %v1138 = vpop.permute.xlu0 %1137
      %1139 = vrot.lane.b32.xlu0 %v253, 14
      %v1140 = vpop.permute.xlu0 %1139
      %1141 = vrot.lane.b32.xlu0 %v255, 14
      %v1142 = vpop.permute.xlu0 %1141
      %vm1143 = vcmp.lt.s32.totalorder %v265, 14
      %v1144 = vsel %vm1143, %v1136, %v1140
      %v1145 = vsel %vm1143, %v1138, %v1142
      %v1146 = vsel %vm1143, %v1140, %v1136
      %v1147 = vsel %vm1143, %v1142, %v1138
      %s1148 = scalar_lea.vmem %s2, 35
      %v1149 = vld [vmem:[%s1148] ss:$8 sm:$0x3]
      %v1151 = vlaneseq
      %v1152 = vshrl.u32 %v1151, 7
      %v1153 = vsub.s32 0, %v1152
      %v1154 = vrot.slane %v1149, %v1153
      %v1155 = vlaneseq
      %v1156 = vshrl.u32 %v1155, 7
      %v1157 = vsub.s32 1, %v1156
      %v1158 = vrot.slane %v1149, %v1157
      %v1161 = vmul.f32 %v1146, %v1154
      %v1162 = vmul.f32 %v1144, %v1158
      %v1163 = vmul.f32 %v1147, %v1154
      %v1164 = vmul.f32 %v1145, %v1158
      %1165 = vset.pattern.permute.xlu0 19
      %1166 = vperm.xlu0 %1165, %v271
      %v1167 = vpop.permute.xlu0 %1166
      %1169 = vset.pattern.permute.xlu0 19
      %1170 = vperm.xlu0 %1169, %v272
      %v1171 = vpop.permute.xlu0 %1170
      %v1173 = vmul.f32 %v1167, %v1161
      %v1174 = vmul.f32 %v1167, %v1162
      %v1175 = vmul.f32 %v1171, %v1163
      %v1176 = vmul.f32 %v1171, %v1164
      %v1177 = vadd.f32 %v1131, %v1173
      %v1178 = vadd.f32 %v1132, %v1174
      %v1179 = vadd.f32 %v1133, %v1175
      %v1180 = vadd.f32 %v1134, %v1176
      %1181 = vrot.lane.b32.xlu0 %v252, 13
      %v1182 = vpop.permute.xlu0 %1181
      %1183 = vrot.lane.b32.xlu0 %v254, 13
      %v1184 = vpop.permute.xlu0 %1183
      %1185 = vrot.lane.b32.xlu0 %v253, 13
      %v1186 = vpop.permute.xlu0 %1185
      %1187 = vrot.lane.b32.xlu0 %v255, 13
      %v1188 = vpop.permute.xlu0 %1187
      %vm1189 = vcmp.lt.s32.totalorder %v265, 13
      %v1190 = vsel %vm1189, %v1182, %v1186
      %v1191 = vsel %vm1189, %v1184, %v1188
      %v1192 = vsel %vm1189, %v1186, %v1182
      %v1193 = vsel %vm1189, %v1188, %v1184
      %s1194 = scalar_lea.vmem %s2, 36
      %v1195 = vld [vmem:[%s1194] ss:$8 sm:$0x3]
      %v1197 = vlaneseq
      %v1198 = vshrl.u32 %v1197, 7
      %v1199 = vsub.s32 0, %v1198
      %v1200 = vrot.slane %v1195, %v1199
      %v1201 = vlaneseq
      %v1202 = vshrl.u32 %v1201, 7
      %v1203 = vsub.s32 1, %v1202
      %v1204 = vrot.slane %v1195, %v1203
      %v1207 = vmul.f32 %v1192, %v1200
      %v1208 = vmul.f32 %v1190, %v1204
      %v1209 = vmul.f32 %v1193, %v1200
      %v1210 = vmul.f32 %v1191, %v1204
      %1211 = vset.pattern.permute.xlu0 20
      %1212 = vperm.xlu0 %1211, %v271
      %v1213 = vpop.permute.xlu0 %1212
      %1215 = vset.pattern.permute.xlu0 20
      %1216 = vperm.xlu0 %1215, %v272
      %v1217 = vpop.permute.xlu0 %1216
      %v1219 = vmul.f32 %v1213, %v1207
      %v1220 = vmul.f32 %v1213, %v1208
      %v1221 = vmul.f32 %v1217, %v1209
      %v1222 = vmul.f32 %v1217, %v1210
      %v1223 = vadd.f32 %v1177, %v1219
      %v1224 = vadd.f32 %v1178, %v1220
      %v1225 = vadd.f32 %v1179, %v1221
      %v1226 = vadd.f32 %v1180, %v1222
      %1227 = vrot.lane.b32.xlu0 %v252, 3
      %v1228 = vpop.permute.xlu0 %1227
      %1229 = vrot.lane.b32.xlu0 %v254, 3
      %v1230 = vpop.permute.xlu0 %1229
      %1231 = vrot.lane.b32.xlu0 %v253, 3
      %v1232 = vpop.permute.xlu0 %1231
      %1233 = vrot.lane.b32.xlu0 %v255, 3
      %v1234 = vpop.permute.xlu0 %1233
      %vm1235 = vcmp.lt.s32.totalorder %v265, 3
      %v1236 = vsel %vm1235, %v1228, %v1232
      %v1237 = vsel %vm1235, %v1230, %v1234
      %v1238 = vsel %vm1235, %v1232, %v1228
      %v1239 = vsel %vm1235, %v1234, %v1230
      %s1240 = scalar_lea.vmem %s2, 37
      %v1241 = vld [vmem:[%s1240] ss:$8 sm:$0x3]
      %v1243 = vlaneseq
      %v1244 = vshrl.u32 %v1243, 7
      %v1245 = vsub.s32 0, %v1244
      %v1246 = vrot.slane %v1241, %v1245
      %v1247 = vlaneseq
      %v1248 = vshrl.u32 %v1247, 7
      %v1249 = vsub.s32 1, %v1248
      %v1250 = vrot.slane %v1241, %v1249
      %v1253 = vmul.f32 %v1238, %v1246
      %v1254 = vmul.f32 %v1236, %v1250
      %v1255 = vmul.f32 %v1239, %v1246
      %v1256 = vmul.f32 %v1237, %v1250
      %1257 = vset.pattern.permute.xlu0 21
      %1258 = vperm.xlu0 %1257, %v271
      %v1259 = vpop.permute.xlu0 %1258
      %1261 = vset.pattern.permute.xlu0 21
      %1262 = vperm.xlu0 %1261, %v272
      %v1263 = vpop.permute.xlu0 %1262
      %v1265 = vmul.f32 %v1259, %v1253
      %v1266 = vmul.f32 %v1259, %v1254
      %v1267 = vmul.f32 %v1263, %v1255
      %v1268 = vmul.f32 %v1263, %v1256
      %v1269 = vadd.f32 %v1223, %v1265
      %v1270 = vadd.f32 %v1224, %v1266
      %v1271 = vadd.f32 %v1225, %v1267
      %v1272 = vadd.f32 %v1226, %v1268
      %1273 = vrot.lane.b32.xlu0 %v252, 2
      %v1274 = vpop.permute.xlu0 %1273
      %1275 = vrot.lane.b32.xlu0 %v254, 2
      %v1276 = vpop.permute.xlu0 %1275
      %1277 = vrot.lane.b32.xlu0 %v253, 2
      %v1278 = vpop.permute.xlu0 %1277
      %1279 = vrot.lane.b32.xlu0 %v255, 2
      %v1280 = vpop.permute.xlu0 %1279
      %vm1281 = vcmp.lt.s32.totalorder %v265, 2
      %v1282 = vsel %vm1281, %v1274, %v1278
      %v1283 = vsel %vm1281, %v1276, %v1280
      %v1284 = vsel %vm1281, %v1278, %v1274
      %v1285 = vsel %vm1281, %v1280, %v1276
      %s1286 = scalar_lea.vmem %s2, 38
      %v1287 = vld [vmem:[%s1286] ss:$8 sm:$0x3]
      %v1289 = vlaneseq
      %v1290 = vshrl.u32 %v1289, 7
      %v1291 = vsub.s32 0, %v1290
      %v1292 = vrot.slane %v1287, %v1291
      %v1293 = vlaneseq
      %v1294 = vshrl.u32 %v1293, 7
      %v1295 = vsub.s32 1, %v1294
      %v1296 = vrot.slane %v1287, %v1295
      %v1299 = vmul.f32 %v1284, %v1292
      %v1300 = vmul.f32 %v1282, %v1296
      %v1301 = vmul.f32 %v1285, %v1292
      %v1302 = vmul.f32 %v1283, %v1296
      %1303 = vset.pattern.permute.xlu0 22
      %1304 = vperm.xlu0 %1303, %v271
      %v1305 = vpop.permute.xlu0 %1304
      %1307 = vset.pattern.permute.xlu0 22
      %1308 = vperm.xlu0 %1307, %v272
      %v1309 = vpop.permute.xlu0 %1308
      %v1311 = vmul.f32 %v1305, %v1299
      %v1312 = vmul.f32 %v1305, %v1300
      %v1313 = vmul.f32 %v1309, %v1301
      %v1314 = vmul.f32 %v1309, %v1302
      %v1315 = vadd.f32 %v1269, %v1311
      %v1316 = vadd.f32 %v1270, %v1312
      %v1317 = vadd.f32 %v1271, %v1313
      %v1318 = vadd.f32 %v1272, %v1314
      %1319 = vrot.lane.b32.xlu0 %v252, 1
      %v1320 = vpop.permute.xlu0 %1319
      %1321 = vrot.lane.b32.xlu0 %v254, 1
      %v1322 = vpop.permute.xlu0 %1321
      %1323 = vrot.lane.b32.xlu0 %v253, 1
      %v1324 = vpop.permute.xlu0 %1323
      %1325 = vrot.lane.b32.xlu0 %v255, 1
      %v1326 = vpop.permute.xlu0 %1325
      %vm1327 = vcmp.lt.s32.totalorder %v265, 1
      %v1328 = vsel %vm1327, %v1320, %v1324
      %v1329 = vsel %vm1327, %v1322, %v1326
      %v1330 = vsel %vm1327, %v1324, %v1320
      %v1331 = vsel %vm1327, %v1326, %v1322
      %s1332 = scalar_lea.vmem %s2, 39
      %v1333 = vld [vmem:[%s1332] ss:$8 sm:$0x3]
      %v1335 = vlaneseq
      %v1336 = vshrl.u32 %v1335, 7
      %v1337 = vsub.s32 0, %v1336
      %v1338 = vrot.slane %v1333, %v1337
      %v1339 = vlaneseq
      %v1340 = vshrl.u32 %v1339, 7
      %v1341 = vsub.s32 1, %v1340
      %v1342 = vrot.slane %v1333, %v1341
      %v1345 = vmul.f32 %v1330, %v1338
      %v1346 = vmul.f32 %v1328, %v1342
      %v1347 = vmul.f32 %v1331, %v1338
      %v1348 = vmul.f32 %v1329, %v1342
      %1349 = vset.pattern.permute.xlu0 23
      %1350 = vperm.xlu0 %1349, %v271
      %v1351 = vpop.permute.xlu0 %1350
      %1353 = vset.pattern.permute.xlu0 23
      %1354 = vperm.xlu0 %1353, %v272
      %v1355 = vpop.permute.xlu0 %1354
      %v1357 = vmul.f32 %v1351, %v1345
      %v1358 = vmul.f32 %v1351, %v1346
      %v1359 = vmul.f32 %v1355, %v1347
      %v1360 = vmul.f32 %v1355, %v1348
      %v1361 = vadd.f32 %v1315, %v1357
      %v1362 = vadd.f32 %v1316, %v1358
      %v1363 = vadd.f32 %v1317, %v1359
      %v1364 = vadd.f32 %v1318, %v1360
      %s1365 = scalar_lea.vmem %s2, 48
      %v1366 = vld [vmem:[%s1365] ss:$8 sm:$0x3]
      %v1368 = vlaneseq
      %v1369 = vshrl.u32 %v1368, 7
      %v1370 = vsub.s32 0, %v1369
      %v1371 = vrot.slane %v1366, %v1370
      %v1372 = vlaneseq
      %v1373 = vshrl.u32 %v1372, 7
      %v1374 = vsub.s32 1, %v1373
      %v1375 = vrot.slane %v1366, %v1374
      %v1378 = vmul.f32 %v252, %v1371
      %v1379 = vmul.f32 %v253, %v1375
      %v1380 = vmul.f32 %v254, %v1371
      %v1381 = vmul.f32 %v255, %v1375
      %1382 = vset.pattern.permute.xlu0 24
      %1383 = vperm.xlu0 %1382, %v271
      %v1384 = vpop.permute.xlu0 %1383
      %1386 = vset.pattern.permute.xlu0 24
      %1387 = vperm.xlu0 %1386, %v272
      %v1388 = vpop.permute.xlu0 %1387
      %v1390 = vmul.f32 %v1384, %v1378
      %v1391 = vmul.f32 %v1384, %v1379
      %v1392 = vmul.f32 %v1388, %v1380
      %v1393 = vmul.f32 %v1388, %v1381
      %v1394 = vadd.f32 %v1361, %v1390
      %v1395 = vadd.f32 %v1362, %v1391
      %v1396 = vadd.f32 %v1363, %v1392
      %v1397 = vadd.f32 %v1364, %v1393
      %1398 = vrot.lane.b32.xlu0 %v252, 127
      %v1399 = vpop.permute.xlu0 %1398
      %1400 = vrot.lane.b32.xlu0 %v254, 127
      %v1401 = vpop.permute.xlu0 %1400
      %1402 = vrot.lane.b32.xlu0 %v253, 127
      %v1403 = vpop.permute.xlu0 %1402
      %1404 = vrot.lane.b32.xlu0 %v255, 127
      %v1405 = vpop.permute.xlu0 %1404
      %vm1406 = vcmp.lt.s32.totalorder %v265, 127
      %v1407 = vsel %vm1406, %v1399, %v1403
      %v1408 = vsel %vm1406, %v1401, %v1405
      %v1409 = vsel %vm1406, %v1403, %v1399
      %v1410 = vsel %vm1406, %v1405, %v1401
      %s1411 = scalar_lea.vmem %s2, 49
      %v1412 = vld [vmem:[%s1411] ss:$8 sm:$0x3]
      %v1414 = vlaneseq
      %v1415 = vshrl.u32 %v1414, 7
      %v1416 = vsub.s32 0, %v1415
      %v1417 = vrot.slane %v1412, %v1416
      %v1418 = vlaneseq
      %v1419 = vshrl.u32 %v1418, 7
      %v1420 = vsub.s32 1, %v1419
      %v1421 = vrot.slane %v1412, %v1420
      %v1424 = vmul.f32 %v1407, %v1417
      %v1425 = vmul.f32 %v1409, %v1421
      %v1426 = vmul.f32 %v1408, %v1417
      %v1427 = vmul.f32 %v1410, %v1421
      %1428 = vset.pattern.permute.xlu0 25
      %1429 = vperm.xlu0 %1428, %v271
      %v1430 = vpop.permute.xlu0 %1429
      %1432 = vset.pattern.permute.xlu0 25
      %1433 = vperm.xlu0 %1432, %v272
      %v1434 = vpop.permute.xlu0 %1433
      %v1436 = vmul.f32 %v1430, %v1424
      %v1437 = vmul.f32 %v1430, %v1425
      %v1438 = vmul.f32 %v1434, %v1426
      %v1439 = vmul.f32 %v1434, %v1427
      %v1440 = vadd.f32 %v1394, %v1436
      %v1441 = vadd.f32 %v1395, %v1437
      %v1442 = vadd.f32 %v1396, %v1438
      %v1443 = vadd.f32 %v1397, %v1439
      %1444 = vrot.lane.b32.xlu0 %v252, 126
      %v1445 = vpop.permute.xlu0 %1444
      %1446 = vrot.lane.b32.xlu0 %v254, 126
      %v1447 = vpop.permute.xlu0 %1446
      %1448 = vrot.lane.b32.xlu0 %v253, 126
      %v1449 = vpop.permute.xlu0 %1448
      %1450 = vrot.lane.b32.xlu0 %v255, 126
      %v1451 = vpop.permute.xlu0 %1450
      %vm1452 = vcmp.lt.s32.totalorder %v265, 126
      %v1453 = vsel %vm1452, %v1445, %v1449
      %v1454 = vsel %vm1452, %v1447, %v1451
      %v1455 = vsel %vm1452, %v1449, %v1445
      %v1456 = vsel %vm1452, %v1451, %v1447
      %s1457 = scalar_lea.vmem %s2, 50
      %v1458 = vld [vmem:[%s1457] ss:$8 sm:$0x3]
      %v1460 = vlaneseq
      %v1461 = vshrl.u32 %v1460, 7
      %v1462 = vsub.s32 0, %v1461
      %v1463 = vrot.slane %v1458, %v1462
      %v1464 = vlaneseq
      %v1465 = vshrl.u32 %v1464, 7
      %v1466 = vsub.s32 1, %v1465
      %v1467 = vrot.slane %v1458, %v1466
      %v1470 = vmul.f32 %v1453, %v1463
      %v1471 = vmul.f32 %v1455, %v1467
      %v1472 = vmul.f32 %v1454, %v1463
      %v1473 = vmul.f32 %v1456, %v1467
      %1474 = vset.pattern.permute.xlu0 26
      %1475 = vperm.xlu0 %1474, %v271
      %v1476 = vpop.permute.xlu0 %1475
      %1478 = vset.pattern.permute.xlu0 26
      %1479 = vperm.xlu0 %1478, %v272
      %v1480 = vpop.permute.xlu0 %1479
      %v1482 = vmul.f32 %v1476, %v1470
      %v1483 = vmul.f32 %v1476, %v1471
      %v1484 = vmul.f32 %v1480, %v1472
      %v1485 = vmul.f32 %v1480, %v1473
      %v1486 = vadd.f32 %v1440, %v1482
      %v1487 = vadd.f32 %v1441, %v1483
      %v1488 = vadd.f32 %v1442, %v1484
      %v1489 = vadd.f32 %v1443, %v1485
      %1490 = vrot.lane.b32.xlu0 %v252, 125
      %v1491 = vpop.permute.xlu0 %1490
      %1492 = vrot.lane.b32.xlu0 %v254, 125
      %v1493 = vpop.permute.xlu0 %1492
      %1494 = vrot.lane.b32.xlu0 %v253, 125
      %v1495 = vpop.permute.xlu0 %1494
      %1496 = vrot.lane.b32.xlu0 %v255, 125
      %v1497 = vpop.permute.xlu0 %1496
      %vm1498 = vcmp.lt.s32.totalorder %v265, 125
      %v1499 = vsel %vm1498, %v1491, %v1495
      %v1500 = vsel %vm1498, %v1493, %v1497
      %v1501 = vsel %vm1498, %v1495, %v1491
      %v1502 = vsel %vm1498, %v1497, %v1493
      %s1503 = scalar_lea.vmem %s2, 51
      %v1504 = vld [vmem:[%s1503] ss:$8 sm:$0x3]
      %v1506 = vlaneseq
      %v1507 = vshrl.u32 %v1506, 7
      %v1508 = vsub.s32 0, %v1507
      %v1509 = vrot.slane %v1504, %v1508
      %v1510 = vlaneseq
      %v1511 = vshrl.u32 %v1510, 7
      %v1512 = vsub.s32 1, %v1511
      %v1513 = vrot.slane %v1504, %v1512
      %v1516 = vmul.f32 %v1499, %v1509
      %v1517 = vmul.f32 %v1501, %v1513
      %v1518 = vmul.f32 %v1500, %v1509
      %v1519 = vmul.f32 %v1502, %v1513
      %1520 = vset.pattern.permute.xlu0 27
      %1521 = vperm.xlu0 %1520, %v271
      %v1522 = vpop.permute.xlu0 %1521
      %1524 = vset.pattern.permute.xlu0 27
      %1525 = vperm.xlu0 %1524, %v272
      %v1526 = vpop.permute.xlu0 %1525
      %v1528 = vmul.f32 %v1522, %v1516
      %v1529 = vmul.f32 %v1522, %v1517
      %v1530 = vmul.f32 %v1526, %v1518
      %v1531 = vmul.f32 %v1526, %v1519
      %v1532 = vadd.f32 %v1486, %v1528
      %v1533 = vadd.f32 %v1487, %v1529
      %v1534 = vadd.f32 %v1488, %v1530
      %v1535 = vadd.f32 %v1489, %v1531
      %1536 = vrot.lane.b32.xlu0 %v252, 115
      %v1537 = vpop.permute.xlu0 %1536
      %1538 = vrot.lane.b32.xlu0 %v254, 115
      %v1539 = vpop.permute.xlu0 %1538
      %1540 = vrot.lane.b32.xlu0 %v253, 115
      %v1541 = vpop.permute.xlu0 %1540
      %1542 = vrot.lane.b32.xlu0 %v255, 115
      %v1543 = vpop.permute.xlu0 %1542
      %vm1544 = vcmp.lt.s32.totalorder %v265, 115
      %v1545 = vsel %vm1544, %v1537, %v1541
      %v1546 = vsel %vm1544, %v1539, %v1543
      %v1547 = vsel %vm1544, %v1541, %v1537
      %v1548 = vsel %vm1544, %v1543, %v1539
      %s1549 = scalar_lea.vmem %s2, 52
      %v1550 = vld [vmem:[%s1549] ss:$8 sm:$0x3]
      %v1552 = vlaneseq
      %v1553 = vshrl.u32 %v1552, 7
      %v1554 = vsub.s32 0, %v1553
      %v1555 = vrot.slane %v1550, %v1554
      %v1556 = vlaneseq
      %v1557 = vshrl.u32 %v1556, 7
      %v1558 = vsub.s32 1, %v1557
      %v1559 = vrot.slane %v1550, %v1558
      %v1562 = vmul.f32 %v1545, %v1555
      %v1563 = vmul.f32 %v1547, %v1559
      %v1564 = vmul.f32 %v1546, %v1555
      %v1565 = vmul.f32 %v1548, %v1559
      %1566 = vset.pattern.permute.xlu0 28
      %1567 = vperm.xlu0 %1566, %v271
      %v1568 = vpop.permute.xlu0 %1567
      %1570 = vset.pattern.permute.xlu0 28
      %1571 = vperm.xlu0 %1570, %v272
      %v1572 = vpop.permute.xlu0 %1571
      %v1574 = vmul.f32 %v1568, %v1562
      %v1575 = vmul.f32 %v1568, %v1563
      %v1576 = vmul.f32 %v1572, %v1564
      %v1577 = vmul.f32 %v1572, %v1565
      %v1578 = vadd.f32 %v1532, %v1574
      %v1579 = vadd.f32 %v1533, %v1575
      %v1580 = vadd.f32 %v1534, %v1576
      %v1581 = vadd.f32 %v1535, %v1577
      %1582 = vrot.lane.b32.xlu0 %v252, 114
      %v1583 = vpop.permute.xlu0 %1582
      %1584 = vrot.lane.b32.xlu0 %v254, 114
      %v1585 = vpop.permute.xlu0 %1584
      %1586 = vrot.lane.b32.xlu0 %v253, 114
      %v1587 = vpop.permute.xlu0 %1586
      %1588 = vrot.lane.b32.xlu0 %v255, 114
      %v1589 = vpop.permute.xlu0 %1588
      %vm1590 = vcmp.lt.s32.totalorder %v265, 114
      %v1591 = vsel %vm1590, %v1583, %v1587
      %v1592 = vsel %vm1590, %v1585, %v1589
      %v1593 = vsel %vm1590, %v1587, %v1583
      %v1594 = vsel %vm1590, %v1589, %v1585
      %s1595 = scalar_lea.vmem %s2, 53
      %v1596 = vld [vmem:[%s1595] ss:$8 sm:$0x3]
      %v1598 = vlaneseq
      %v1599 = vshrl.u32 %v1598, 7
      %v1600 = vsub.s32 0, %v1599
      %v1601 = vrot.slane %v1596, %v1600
      %v1602 = vlaneseq
      %v1603 = vshrl.u32 %v1602, 7
      %v1604 = vsub.s32 1, %v1603
      %v1605 = vrot.slane %v1596, %v1604
      %v1608 = vmul.f32 %v1591, %v1601
      %v1609 = vmul.f32 %v1593, %v1605
      %v1610 = vmul.f32 %v1592, %v1601
      %v1611 = vmul.f32 %v1594, %v1605
      %1612 = vset.pattern.permute.xlu0 29
      %1613 = vperm.xlu0 %1612, %v271
      %v1614 = vpop.permute.xlu0 %1613
      %1616 = vset.pattern.permute.xlu0 29
      %1617 = vperm.xlu0 %1616, %v272
      %v1618 = vpop.permute.xlu0 %1617
      %v1620 = vmul.f32 %v1614, %v1608
      %v1621 = vmul.f32 %v1614, %v1609
      %v1622 = vmul.f32 %v1618, %v1610
      %v1623 = vmul.f32 %v1618, %v1611
      %v1624 = vadd.f32 %v1578, %v1620
      %v1625 = vadd.f32 %v1579, %v1621
      %v1626 = vadd.f32 %v1580, %v1622
      %v1627 = vadd.f32 %v1581, %v1623
      %1628 = vrot.lane.b32.xlu0 %v252, 113
      %v1629 = vpop.permute.xlu0 %1628
      %1630 = vrot.lane.b32.xlu0 %v254, 113
      %v1631 = vpop.permute.xlu0 %1630
      %1632 = vrot.lane.b32.xlu0 %v253, 113
      %v1633 = vpop.permute.xlu0 %1632
      %1634 = vrot.lane.b32.xlu0 %v255, 113
      %v1635 = vpop.permute.xlu0 %1634
      %vm1636 = vcmp.lt.s32.totalorder %v265, 113
      %v1637 = vsel %vm1636, %v1629, %v1633
      %v1638 = vsel %vm1636, %v1631, %v1635
      %v1639 = vsel %vm1636, %v1633, %v1629
      %v1640 = vsel %vm1636, %v1635, %v1631
      %s1641 = scalar_lea.vmem %s2, 54
      %v1642 = vld [vmem:[%s1641] ss:$8 sm:$0x3]
      %v1644 = vlaneseq
      %v1645 = vshrl.u32 %v1644, 7
      %v1646 = vsub.s32 0, %v1645
      %v1647 = vrot.slane %v1642, %v1646
      %v1648 = vlaneseq
      %v1649 = vshrl.u32 %v1648, 7
      %v1650 = vsub.s32 1, %v1649
      %v1651 = vrot.slane %v1642, %v1650
      %v1654 = vmul.f32 %v1637, %v1647
      %v1655 = vmul.f32 %v1639, %v1651
      %v1656 = vmul.f32 %v1638, %v1647
      %v1657 = vmul.f32 %v1640, %v1651
      %1658 = vset.pattern.permute.xlu0 30
      %1659 = vperm.xlu0 %1658, %v271
      %v1660 = vpop.permute.xlu0 %1659
      %1662 = vset.pattern.permute.xlu0 30
      %1663 = vperm.xlu0 %1662, %v272
      %v1664 = vpop.permute.xlu0 %1663
      %v1666 = vmul.f32 %v1660, %v1654
      %v1667 = vmul.f32 %v1660, %v1655
      %v1668 = vmul.f32 %v1664, %v1656
      %v1669 = vmul.f32 %v1664, %v1657
      %v1670 = vadd.f32 %v1624, %v1666
      %v1671 = vadd.f32 %v1625, %v1667
      %v1672 = vadd.f32 %v1626, %v1668
      %v1673 = vadd.f32 %v1627, %v1669
      %1674 = vrot.lane.b32.xlu0 %v252, 112
      %v1675 = vpop.permute.xlu0 %1674
      %1676 = vrot.lane.b32.xlu0 %v254, 112
      %v1677 = vpop.permute.xlu0 %1676
      %1678 = vrot.lane.b32.xlu0 %v253, 112
      %v1679 = vpop.permute.xlu0 %1678
      %1680 = vrot.lane.b32.xlu0 %v255, 112
      %v1681 = vpop.permute.xlu0 %1680
      %vm1682 = vcmp.lt.s32.totalorder %v265, 112
      %v1683 = vsel %vm1682, %v1675, %v1679
      %v1684 = vsel %vm1682, %v1677, %v1681
      %v1685 = vsel %vm1682, %v1679, %v1675
      %v1686 = vsel %vm1682, %v1681, %v1677
      %s1687 = scalar_lea.vmem %s2, 55
      %v1688 = vld [vmem:[%s1687] ss:$8 sm:$0x3]
      %v1690 = vlaneseq
      %v1691 = vshrl.u32 %v1690, 7
      %v1692 = vsub.s32 0, %v1691
      %v1693 = vrot.slane %v1688, %v1692
      %v1694 = vlaneseq
      %v1695 = vshrl.u32 %v1694, 7
      %v1696 = vsub.s32 1, %v1695
      %v1697 = vrot.slane %v1688, %v1696
      %v1700 = vmul.f32 %v1683, %v1693
      %v1701 = vmul.f32 %v1685, %v1697
      %v1702 = vmul.f32 %v1684, %v1693
      %v1703 = vmul.f32 %v1686, %v1697
      %1704 = vset.pattern.permute.xlu0 31
      %1705 = vperm.xlu0 %1704, %v271
      %v1706 = vpop.permute.xlu0 %1705
      %1708 = vset.pattern.permute.xlu0 31
      %1709 = vperm.xlu0 %1708, %v272
      %v1710 = vpop.permute.xlu0 %1709
      %v1712 = vmul.f32 %v1706, %v1700
      %v1713 = vmul.f32 %v1706, %v1701
      %v1714 = vmul.f32 %v1710, %v1702
      %v1715 = vmul.f32 %v1710, %v1703
      %v1716 = vadd.f32 %v1670, %v1712
      %v1717 = vadd.f32 %v1671, %v1713
      %v1718 = vadd.f32 %v1672, %v1714
      %v1719 = vadd.f32 %v1673, %v1715
      %1720 = vrot.lane.b32.xlu0 %v252, 111
      %v1721 = vpop.permute.xlu0 %1720
      %1722 = vrot.lane.b32.xlu0 %v254, 111
      %v1723 = vpop.permute.xlu0 %1722
      %1724 = vrot.lane.b32.xlu0 %v253, 111
      %v1725 = vpop.permute.xlu0 %1724
      %1726 = vrot.lane.b32.xlu0 %v255, 111
      %v1727 = vpop.permute.xlu0 %1726
      %vm1728 = vcmp.lt.s32.totalorder %v265, 111
      %v1729 = vsel %vm1728, %v1721, %v1725
      %v1730 = vsel %vm1728, %v1723, %v1727
      %v1731 = vsel %vm1728, %v1725, %v1721
      %v1732 = vsel %vm1728, %v1727, %v1723
      %s1733 = scalar_lea.vmem %s2, 64
      %v1734 = vld [vmem:[%s1733] ss:$8 sm:$0x3]
      %v1736 = vlaneseq
      %v1737 = vshrl.u32 %v1736, 7
      %v1738 = vsub.s32 0, %v1737
      %v1739 = vrot.slane %v1734, %v1738
      %v1740 = vlaneseq
      %v1741 = vshrl.u32 %v1740, 7
      %v1742 = vsub.s32 1, %v1741
      %v1743 = vrot.slane %v1734, %v1742
      %v1746 = vmul.f32 %v1729, %v1739
      %v1747 = vmul.f32 %v1731, %v1743
      %v1748 = vmul.f32 %v1730, %v1739
      %v1749 = vmul.f32 %v1732, %v1743
      %1750 = vset.pattern.permute.xlu0 32
      %1751 = vperm.xlu0 %1750, %v271
      %v1752 = vpop.permute.xlu0 %1751
      %1754 = vset.pattern.permute.xlu0 32
      %1755 = vperm.xlu0 %1754, %v272
      %v1756 = vpop.permute.xlu0 %1755
      %v1758 = vmul.f32 %v1752, %v1746
      %v1759 = vmul.f32 %v1752, %v1747
      %v1760 = vmul.f32 %v1756, %v1748
      %v1761 = vmul.f32 %v1756, %v1749
      %v1762 = vadd.f32 %v1716, %v1758
      %v1763 = vadd.f32 %v1717, %v1759
      %v1764 = vadd.f32 %v1718, %v1760
      %v1765 = vadd.f32 %v1719, %v1761
      %1766 = vrot.lane.b32.xlu0 %v252, 110
      %v1767 = vpop.permute.xlu0 %1766
      %1768 = vrot.lane.b32.xlu0 %v254, 110
      %v1769 = vpop.permute.xlu0 %1768
      %1770 = vrot.lane.b32.xlu0 %v253, 110
      %v1771 = vpop.permute.xlu0 %1770
      %1772 = vrot.lane.b32.xlu0 %v255, 110
      %v1773 = vpop.permute.xlu0 %1772
      %vm1774 = vcmp.lt.s32.totalorder %v265, 110
      %v1775 = vsel %vm1774, %v1767, %v1771
      %v1776 = vsel %vm1774, %v1769, %v1773
      %v1777 = vsel %vm1774, %v1771, %v1767
      %v1778 = vsel %vm1774, %v1773, %v1769
      %s1779 = scalar_lea.vmem %s2, 65
      %v1780 = vld [vmem:[%s1779] ss:$8 sm:$0x3]
      %v1782 = vlaneseq
      %v1783 = vshrl.u32 %v1782, 7
      %v1784 = vsub.s32 0, %v1783
      %v1785 = vrot.slane %v1780, %v1784
      %v1786 = vlaneseq
      %v1787 = vshrl.u32 %v1786, 7
      %v1788 = vsub.s32 1, %v1787
      %v1789 = vrot.slane %v1780, %v1788
      %v1792 = vmul.f32 %v1775, %v1785
      %v1793 = vmul.f32 %v1777, %v1789
      %v1794 = vmul.f32 %v1776, %v1785
      %v1795 = vmul.f32 %v1778, %v1789
      %1796 = vset.pattern.permute.xlu0 33
      %1797 = vperm.xlu0 %1796, %v271
      %v1798 = vpop.permute.xlu0 %1797
      %1800 = vset.pattern.permute.xlu0 33
      %1801 = vperm.xlu0 %1800, %v272
      %v1802 = vpop.permute.xlu0 %1801
      %v1804 = vmul.f32 %v1798, %v1792
      %v1805 = vmul.f32 %v1798, %v1793
      %v1806 = vmul.f32 %v1802, %v1794
      %v1807 = vmul.f32 %v1802, %v1795
      %v1808 = vadd.f32 %v1762, %v1804
      %v1809 = vadd.f32 %v1763, %v1805
      %v1810 = vadd.f32 %v1764, %v1806
      %v1811 = vadd.f32 %v1765, %v1807
      %1812 = vrot.lane.b32.xlu0 %v252, 109
      %v1813 = vpop.permute.xlu0 %1812
      %1814 = vrot.lane.b32.xlu0 %v254, 109
      %v1815 = vpop.permute.xlu0 %1814
      %1816 = vrot.lane.b32.xlu0 %v253, 109
      %v1817 = vpop.permute.xlu0 %1816
      %1818 = vrot.lane.b32.xlu0 %v255, 109
      %v1819 = vpop.permute.xlu0 %1818
      %vm1820 = vcmp.lt.s32.totalorder %v265, 109
      %v1821 = vsel %vm1820, %v1813, %v1817
      %v1822 = vsel %vm1820, %v1815, %v1819
      %v1823 = vsel %vm1820, %v1817, %v1813
      %v1824 = vsel %vm1820, %v1819, %v1815
      %s1825 = scalar_lea.vmem %s2, 66
      %v1826 = vld [vmem:[%s1825] ss:$8 sm:$0x3]
      %v1828 = vlaneseq
      %v1829 = vshrl.u32 %v1828, 7
      %v1830 = vsub.s32 0, %v1829
      %v1831 = vrot.slane %v1826, %v1830
      %v1832 = vlaneseq
      %v1833 = vshrl.u32 %v1832, 7
      %v1834 = vsub.s32 1, %v1833
      %v1835 = vrot.slane %v1826, %v1834
      %v1838 = vmul.f32 %v1821, %v1831
      %v1839 = vmul.f32 %v1823, %v1835
      %v1840 = vmul.f32 %v1822, %v1831
      %v1841 = vmul.f32 %v1824, %v1835
      %1842 = vset.pattern.permute.xlu0 34
      %1843 = vperm.xlu0 %1842, %v271
      %v1844 = vpop.permute.xlu0 %1843
      %1846 = vset.pattern.permute.xlu0 34
      %1847 = vperm.xlu0 %1846, %v272
      %v1848 = vpop.permute.xlu0 %1847
      %v1850 = vmul.f32 %v1844, %v1838
      %v1851 = vmul.f32 %v1844, %v1839
      %v1852 = vmul.f32 %v1848, %v1840
      %v1853 = vmul.f32 %v1848, %v1841
      %v1854 = vadd.f32 %v1808, %v1850
      %v1855 = vadd.f32 %v1809, %v1851
      %v1856 = vadd.f32 %v1810, %v1852
      %v1857 = vadd.f32 %v1811, %v1853
      %1858 = vrot.lane.b32.xlu0 %v252, 99
      %v1859 = vpop.permute.xlu0 %1858
      %1860 = vrot.lane.b32.xlu0 %v254, 99
      %v1861 = vpop.permute.xlu0 %1860
      %1862 = vrot.lane.b32.xlu0 %v253, 99
      %v1863 = vpop.permute.xlu0 %1862
      %1864 = vrot.lane.b32.xlu0 %v255, 99
      %v1865 = vpop.permute.xlu0 %1864
      %vm1866 = vcmp.lt.s32.totalorder %v265, 99
      %v1867 = vsel %vm1866, %v1859, %v1863
      %v1868 = vsel %vm1866, %v1861, %v1865
      %v1869 = vsel %vm1866, %v1863, %v1859
      %v1870 = vsel %vm1866, %v1865, %v1861
      %s1871 = scalar_lea.vmem %s2, 67
      %v1872 = vld [vmem:[%s1871] ss:$8 sm:$0x3]
      %v1874 = vlaneseq
      %v1875 = vshrl.u32 %v1874, 7
      %v1876 = vsub.s32 0, %v1875
      %v1877 = vrot.slane %v1872, %v1876
      %v1878 = vlaneseq
      %v1879 = vshrl.u32 %v1878, 7
      %v1880 = vsub.s32 1, %v1879
      %v1881 = vrot.slane %v1872, %v1880
      %v1884 = vmul.f32 %v1867, %v1877
      %v1885 = vmul.f32 %v1869, %v1881
      %v1886 = vmul.f32 %v1868, %v1877
      %v1887 = vmul.f32 %v1870, %v1881
      %1888 = vset.pattern.permute.xlu0 35
      %1889 = vperm.xlu0 %1888, %v271
      %v1890 = vpop.permute.xlu0 %1889
      %1892 = vset.pattern.permute.xlu0 35
      %1893 = vperm.xlu0 %1892, %v272
      %v1894 = vpop.permute.xlu0 %1893
      %v1896 = vmul.f32 %v1890, %v1884
      %v1897 = vmul.f32 %v1890, %v1885
      %v1898 = vmul.f32 %v1894, %v1886
      %v1899 = vmul.f32 %v1894, %v1887
      %v1900 = vadd.f32 %v1854, %v1896
      %v1901 = vadd.f32 %v1855, %v1897
      %v1902 = vadd.f32 %v1856, %v1898
      %v1903 = vadd.f32 %v1857, %v1899
      %1904 = vrot.lane.b32.xlu0 %v252, 98
      %v1905 = vpop.permute.xlu0 %1904
      %1906 = vrot.lane.b32.xlu0 %v254, 98
      %v1907 = vpop.permute.xlu0 %1906
      %1908 = vrot.lane.b32.xlu0 %v253, 98
      %v1909 = vpop.permute.xlu0 %1908
      %1910 = vrot.lane.b32.xlu0 %v255, 98
      %v1911 = vpop.permute.xlu0 %1910
      %vm1912 = vcmp.lt.s32.totalorder %v265, 98
      %v1913 = vsel %vm1912, %v1905, %v1909
      %v1914 = vsel %vm1912, %v1907, %v1911
      %v1915 = vsel %vm1912, %v1909, %v1905
      %v1916 = vsel %vm1912, %v1911, %v1907
      %s1917 = scalar_lea.vmem %s2, 68
      %v1918 = vld [vmem:[%s1917] ss:$8 sm:$0x3]
      %v1920 = vlaneseq
      %v1921 = vshrl.u32 %v1920, 7
      %v1922 = vsub.s32 0, %v1921
      %v1923 = vrot.slane %v1918, %v1922
      %v1924 = vlaneseq
      %v1925 = vshrl.u32 %v1924, 7
      %v1926 = vsub.s32 1, %v1925
      %v1927 = vrot.slane %v1918, %v1926
      %v1930 = vmul.f32 %v1913, %v1923
      %v1931 = vmul.f32 %v1915, %v1927
      %v1932 = vmul.f32 %v1914, %v1923
      %v1933 = vmul.f32 %v1916, %v1927
      %1934 = vset.pattern.permute.xlu0 36
      %1935 = vperm.xlu0 %1934, %v271
      %v1936 = vpop.permute.xlu0 %1935
      %1938 = vset.pattern.permute.xlu0 36
      %1939 = vperm.xlu0 %1938, %v272
      %v1940 = vpop.permute.xlu0 %1939
      %v1942 = vmul.f32 %v1936, %v1930
      %v1943 = vmul.f32 %v1936, %v1931
      %v1944 = vmul.f32 %v1940, %v1932
      %v1945 = vmul.f32 %v1940, %v1933
      %v1946 = vadd.f32 %v1900, %v1942
      %v1947 = vadd.f32 %v1901, %v1943
      %v1948 = vadd.f32 %v1902, %v1944
      %v1949 = vadd.f32 %v1903, %v1945
      %1950 = vrot.lane.b32.xlu0 %v252, 97
      %v1951 = vpop.permute.xlu0 %1950
      %1952 = vrot.lane.b32.xlu0 %v254, 97
      %v1953 = vpop.permute.xlu0 %1952
      %1954 = vrot.lane.b32.xlu0 %v253, 97
      %v1955 = vpop.permute.xlu0 %1954
      %1956 = vrot.lane.b32.xlu0 %v255, 97
      %v1957 = vpop.permute.xlu0 %1956
      %vm1958 = vcmp.lt.s32.totalorder %v265, 97
      %v1959 = vsel %vm1958, %v1951, %v1955
      %v1960 = vsel %vm1958, %v1953, %v1957
      %v1961 = vsel %vm1958, %v1955, %v1951
      %v1962 = vsel %vm1958, %v1957, %v1953
      %s1963 = scalar_lea.vmem %s2, 69
      %v1964 = vld [vmem:[%s1963] ss:$8 sm:$0x3]
      %v1966 = vlaneseq
      %v1967 = vshrl.u32 %v1966, 7
      %v1968 = vsub.s32 0, %v1967
      %v1969 = vrot.slane %v1964, %v1968
      %v1970 = vlaneseq
      %v1971 = vshrl.u32 %v1970, 7
      %v1972 = vsub.s32 1, %v1971
      %v1973 = vrot.slane %v1964, %v1972
      %v1976 = vmul.f32 %v1959, %v1969
      %v1977 = vmul.f32 %v1961, %v1973
      %v1978 = vmul.f32 %v1960, %v1969
      %v1979 = vmul.f32 %v1962, %v1973
      %1980 = vset.pattern.permute.xlu0 37
      %1981 = vperm.xlu0 %1980, %v271
      %v1982 = vpop.permute.xlu0 %1981
      %1984 = vset.pattern.permute.xlu0 37
      %1985 = vperm.xlu0 %1984, %v272
      %v1986 = vpop.permute.xlu0 %1985
      %v1988 = vmul.f32 %v1982, %v1976
      %v1989 = vmul.f32 %v1982, %v1977
      %v1990 = vmul.f32 %v1986, %v1978
      %v1991 = vmul.f32 %v1986, %v1979
      %v1992 = vadd.f32 %v1946, %v1988
      %v1993 = vadd.f32 %v1947, %v1989
      %v1994 = vadd.f32 %v1948, %v1990
      %v1995 = vadd.f32 %v1949, %v1991
      %1996 = vrot.lane.b32.xlu0 %v252, 96
      %v1997 = vpop.permute.xlu0 %1996
      %1998 = vrot.lane.b32.xlu0 %v254, 96
      %v1999 = vpop.permute.xlu0 %1998
      %2000 = vrot.lane.b32.xlu0 %v253, 96
      %v2001 = vpop.permute.xlu0 %2000
      %2002 = vrot.lane.b32.xlu0 %v255, 96
      %v2003 = vpop.permute.xlu0 %2002
      %vm2004 = vcmp.lt.s32.totalorder %v265, 96
      %v2005 = vsel %vm2004, %v1997, %v2001
      %v2006 = vsel %vm2004, %v1999, %v2003
      %v2007 = vsel %vm2004, %v2001, %v1997
      %v2008 = vsel %vm2004, %v2003, %v1999
      %s2009 = scalar_lea.vmem %s2, 70
      %v2010 = vld [vmem:[%s2009] ss:$8 sm:$0x3]
      %v2012 = vlaneseq
      %v2013 = vshrl.u32 %v2012, 7
      %v2014 = vsub.s32 0, %v2013
      %v2015 = vrot.slane %v2010, %v2014
      %v2016 = vlaneseq
      %v2017 = vshrl.u32 %v2016, 7
      %v2018 = vsub.s32 1, %v2017
      %v2019 = vrot.slane %v2010, %v2018
      %v2022 = vmul.f32 %v2005, %v2015
      %v2023 = vmul.f32 %v2007, %v2019
      %v2024 = vmul.f32 %v2006, %v2015
      %v2025 = vmul.f32 %v2008, %v2019
      %2026 = vset.pattern.permute.xlu0 38
      %2027 = vperm.xlu0 %2026, %v271
      %v2028 = vpop.permute.xlu0 %2027
      %2030 = vset.pattern.permute.xlu0 38
      %2031 = vperm.xlu0 %2030, %v272
      %v2032 = vpop.permute.xlu0 %2031
      %v2034 = vmul.f32 %v2028, %v2022
      %v2035 = vmul.f32 %v2028, %v2023
      %v2036 = vmul.f32 %v2032, %v2024
      %v2037 = vmul.f32 %v2032, %v2025
      %v2038 = vadd.f32 %v1992, %v2034
      %v2039 = vadd.f32 %v1993, %v2035
      %v2040 = vadd.f32 %v1994, %v2036
      %v2041 = vadd.f32 %v1995, %v2037
      %2042 = vrot.lane.b32.xlu0 %v252, 95
      %v2043 = vpop.permute.xlu0 %2042
      %2044 = vrot.lane.b32.xlu0 %v254, 95
      %v2045 = vpop.permute.xlu0 %2044
      %2046 = vrot.lane.b32.xlu0 %v253, 95
      %v2047 = vpop.permute.xlu0 %2046
      %2048 = vrot.lane.b32.xlu0 %v255, 95
      %v2049 = vpop.permute.xlu0 %2048
      %vm2050 = vcmp.lt.s32.totalorder %v265, 95
      %v2051 = vsel %vm2050, %v2043, %v2047
      %v2052 = vsel %vm2050, %v2045, %v2049
      %v2053 = vsel %vm2050, %v2047, %v2043
      %v2054 = vsel %vm2050, %v2049, %v2045
      %s2055 = scalar_lea.vmem %s2, 71
      %v2056 = vld [vmem:[%s2055] ss:$8 sm:$0x3]
      %v2058 = vlaneseq
      %v2059 = vshrl.u32 %v2058, 7
      %v2060 = vsub.s32 0, %v2059
      %v2061 = vrot.slane %v2056, %v2060
      %v2062 = vlaneseq
      %v2063 = vshrl.u32 %v2062, 7
      %v2064 = vsub.s32 1, %v2063
      %v2065 = vrot.slane %v2056, %v2064
      %v2068 = vmul.f32 %v2051, %v2061
      %v2069 = vmul.f32 %v2053, %v2065
      %v2070 = vmul.f32 %v2052, %v2061
      %v2071 = vmul.f32 %v2054, %v2065
      %2072 = vset.pattern.permute.xlu0 39
      %2073 = vperm.xlu0 %2072, %v271
      %v2074 = vpop.permute.xlu0 %2073
      %2076 = vset.pattern.permute.xlu0 39
      %2077 = vperm.xlu0 %2076, %v272
      %v2078 = vpop.permute.xlu0 %2077
      %v2080 = vmul.f32 %v2074, %v2068
      %v2081 = vmul.f32 %v2074, %v2069
      %v2082 = vmul.f32 %v2078, %v2070
      %v2083 = vmul.f32 %v2078, %v2071
      %v2084 = vadd.f32 %v2038, %v2080
      %v2085 = vadd.f32 %v2039, %v2081
      %v2086 = vadd.f32 %v2040, %v2082
      %v2087 = vadd.f32 %v2041, %v2083
      %2088 = vrot.lane.b32.xlu0 %v252, 94
      %v2089 = vpop.permute.xlu0 %2088
      %2090 = vrot.lane.b32.xlu0 %v254, 94
      %v2091 = vpop.permute.xlu0 %2090
      %2092 = vrot.lane.b32.xlu0 %v253, 94
      %v2093 = vpop.permute.xlu0 %2092
      %2094 = vrot.lane.b32.xlu0 %v255, 94
      %v2095 = vpop.permute.xlu0 %2094
      %vm2096 = vcmp.lt.s32.totalorder %v265, 94
      %v2097 = vsel %vm2096, %v2089, %v2093
      %v2098 = vsel %vm2096, %v2091, %v2095
      %v2099 = vsel %vm2096, %v2093, %v2089
      %v2100 = vsel %vm2096, %v2095, %v2091
      %s2101 = scalar_lea.vmem %s2, 80
      %v2102 = vld [vmem:[%s2101] ss:$8 sm:$0x3]
      %v2104 = vlaneseq
      %v2105 = vshrl.u32 %v2104, 7
      %v2106 = vsub.s32 0, %v2105
      %v2107 = vrot.slane %v2102, %v2106
      %v2108 = vlaneseq
      %v2109 = vshrl.u32 %v2108, 7
      %v2110 = vsub.s32 1, %v2109
      %v2111 = vrot.slane %v2102, %v2110
      %v2114 = vmul.f32 %v2097, %v2107
      %v2115 = vmul.f32 %v2099, %v2111
      %v2116 = vmul.f32 %v2098, %v2107
      %v2117 = vmul.f32 %v2100, %v2111
      %2118 = vset.pattern.permute.xlu0 40
      %2119 = vperm.xlu0 %2118, %v271
      %v2120 = vpop.permute.xlu0 %2119
      %2122 = vset.pattern.permute.xlu0 40
      %2123 = vperm.xlu0 %2122, %v272
      %v2124 = vpop.permute.xlu0 %2123
      %v2126 = vmul.f32 %v2120, %v2114
      %v2127 = vmul.f32 %v2120, %v2115
      %v2128 = vmul.f32 %v2124, %v2116
      %v2129 = vmul.f32 %v2124, %v2117
      %v2130 = vadd.f32 %v2084, %v2126
      %v2131 = vadd.f32 %v2085, %v2127
      %v2132 = vadd.f32 %v2086, %v2128
      %v2133 = vadd.f32 %v2087, %v2129
      %2134 = vrot.lane.b32.xlu0 %v252, 93
      %v2135 = vpop.permute.xlu0 %2134
      %2136 = vrot.lane.b32.xlu0 %v254, 93
      %v2137 = vpop.permute.xlu0 %2136
      %2138 = vrot.lane.b32.xlu0 %v253, 93
      %v2139 = vpop.permute.xlu0 %2138
      %2140 = vrot.lane.b32.xlu0 %v255, 93
      %v2141 = vpop.permute.xlu0 %2140
      %vm2142 = vcmp.lt.s32.totalorder %v265, 93
      %v2143 = vsel %vm2142, %v2135, %v2139
      %v2144 = vsel %vm2142, %v2137, %v2141
      %v2145 = vsel %vm2142, %v2139, %v2135
      %v2146 = vsel %vm2142, %v2141, %v2137
      %s2147 = scalar_lea.vmem %s2, 81
      %v2148 = vld [vmem:[%s2147] ss:$8 sm:$0x3]
      %v2150 = vlaneseq
      %v2151 = vshrl.u32 %v2150, 7
      %v2152 = vsub.s32 0, %v2151
      %v2153 = vrot.slane %v2148, %v2152
      %v2154 = vlaneseq
      %v2155 = vshrl.u32 %v2154, 7
      %v2156 = vsub.s32 1, %v2155
      %v2157 = vrot.slane %v2148, %v2156
      %v2160 = vmul.f32 %v2143, %v2153
      %v2161 = vmul.f32 %v2145, %v2157
      %v2162 = vmul.f32 %v2144, %v2153
      %v2163 = vmul.f32 %v2146, %v2157
      %2164 = vset.pattern.permute.xlu0 41
      %2165 = vperm.xlu0 %2164, %v271
      %v2166 = vpop.permute.xlu0 %2165
      %2168 = vset.pattern.permute.xlu0 41
      %2169 = vperm.xlu0 %2168, %v272
      %v2170 = vpop.permute.xlu0 %2169
      %v2172 = vmul.f32 %v2166, %v2160
      %v2173 = vmul.f32 %v2166, %v2161
      %v2174 = vmul.f32 %v2170, %v2162
      %v2175 = vmul.f32 %v2170, %v2163
      %v2176 = vadd.f32 %v2130, %v2172
      %v2177 = vadd.f32 %v2131, %v2173
      %v2178 = vadd.f32 %v2132, %v2174
      %v2179 = vadd.f32 %v2133, %v2175
      %2180 = vrot.lane.b32.xlu0 %v252, 83
      %v2181 = vpop.permute.xlu0 %2180
      %2182 = vrot.lane.b32.xlu0 %v254, 83
      %v2183 = vpop.permute.xlu0 %2182
      %2184 = vrot.lane.b32.xlu0 %v253, 83
      %v2185 = vpop.permute.xlu0 %2184
      %2186 = vrot.lane.b32.xlu0 %v255, 83
      %v2187 = vpop.permute.xlu0 %2186
      %vm2188 = vcmp.lt.s32.totalorder %v265, 83
      %v2189 = vsel %vm2188, %v2181, %v2185
      %v2190 = vsel %vm2188, %v2183, %v2187
      %v2191 = vsel %vm2188, %v2185, %v2181
      %v2192 = vsel %vm2188, %v2187, %v2183
      %s2193 = scalar_lea.vmem %s2, 82
      %v2194 = vld [vmem:[%s2193] ss:$8 sm:$0x3]
      %v2196 = vlaneseq
      %v2197 = vshrl.u32 %v2196, 7
      %v2198 = vsub.s32 0, %v2197
      %v2199 = vrot.slane %v2194, %v2198
      %v2200 = vlaneseq
      %v2201 = vshrl.u32 %v2200, 7
      %v2202 = vsub.s32 1, %v2201
      %v2203 = vrot.slane %v2194, %v2202
      %v2206 = vmul.f32 %v2189, %v2199
      %v2207 = vmul.f32 %v2191, %v2203
      %v2208 = vmul.f32 %v2190, %v2199
      %v2209 = vmul.f32 %v2192, %v2203
      %2210 = vset.pattern.permute.xlu0 42
      %2211 = vperm.xlu0 %2210, %v271
      %v2212 = vpop.permute.xlu0 %2211
      %2214 = vset.pattern.permute.xlu0 42
      %2215 = vperm.xlu0 %2214, %v272
      %v2216 = vpop.permute.xlu0 %2215
      %v2218 = vmul.f32 %v2212, %v2206
      %v2219 = vmul.f32 %v2212, %v2207
      %v2220 = vmul.f32 %v2216, %v2208
      %v2221 = vmul.f32 %v2216, %v2209
      %v2222 = vadd.f32 %v2176, %v2218
      %v2223 = vadd.f32 %v2177, %v2219
      %v2224 = vadd.f32 %v2178, %v2220
      %v2225 = vadd.f32 %v2179, %v2221
      %2226 = vrot.lane.b32.xlu0 %v252, 82
      %v2227 = vpop.permute.xlu0 %2226
      %2228 = vrot.lane.b32.xlu0 %v254, 82
      %v2229 = vpop.permute.xlu0 %2228
      %2230 = vrot.lane.b32.xlu0 %v253, 82
      %v2231 = vpop.permute.xlu0 %2230
      %2232 = vrot.lane.b32.xlu0 %v255, 82
      %v2233 = vpop.permute.xlu0 %2232
      %vm2234 = vcmp.lt.s32.totalorder %v265, 82
      %v2235 = vsel %vm2234, %v2227, %v2231
      %v2236 = vsel %vm2234, %v2229, %v2233
      %v2237 = vsel %vm2234, %v2231, %v2227
      %v2238 = vsel %vm2234, %v2233, %v2229
      %s2239 = scalar_lea.vmem %s2, 83
      %v2240 = vld [vmem:[%s2239] ss:$8 sm:$0x3]
      %v2242 = vlaneseq
      %v2243 = vshrl.u32 %v2242, 7
      %v2244 = vsub.s32 0, %v2243
      %v2245 = vrot.slane %v2240, %v2244
      %v2246 = vlaneseq
      %v2247 = vshrl.u32 %v2246, 7
      %v2248 = vsub.s32 1, %v2247
      %v2249 = vrot.slane %v2240, %v2248
      %v2252 = vmul.f32 %v2235, %v2245
      %v2253 = vmul.f32 %v2237, %v2249
      %v2254 = vmul.f32 %v2236, %v2245
      %v2255 = vmul.f32 %v2238, %v2249
      %2256 = vset.pattern.permute.xlu0 43
      %2257 = vperm.xlu0 %2256, %v271
      %v2258 = vpop.permute.xlu0 %2257
      %2260 = vset.pattern.permute.xlu0 43
      %2261 = vperm.xlu0 %2260, %v272
      %v2262 = vpop.permute.xlu0 %2261
      %v2264 = vmul.f32 %v2258, %v2252
      %v2265 = vmul.f32 %v2258, %v2253
      %v2266 = vmul.f32 %v2262, %v2254
      %v2267 = vmul.f32 %v2262, %v2255
      %v2268 = vadd.f32 %v2222, %v2264
      %v2269 = vadd.f32 %v2223, %v2265
      %v2270 = vadd.f32 %v2224, %v2266
      %v2271 = vadd.f32 %v2225, %v2267
      %2272 = vrot.lane.b32.xlu0 %v252, 81
      %v2273 = vpop.permute.xlu0 %2272
      %2274 = vrot.lane.b32.xlu0 %v254, 81
      %v2275 = vpop.permute.xlu0 %2274
      %2276 = vrot.lane.b32.xlu0 %v253, 81
      %v2277 = vpop.permute.xlu0 %2276
      %2278 = vrot.lane.b32.xlu0 %v255, 81
      %v2279 = vpop.permute.xlu0 %2278
      %vm2280 = vcmp.lt.s32.totalorder %v265, 81
      %v2281 = vsel %vm2280, %v2273, %v2277
      %v2282 = vsel %vm2280, %v2275, %v2279
      %v2283 = vsel %vm2280, %v2277, %v2273
      %v2284 = vsel %vm2280, %v2279, %v2275
      %s2285 = scalar_lea.vmem %s2, 84
      %v2286 = vld [vmem:[%s2285] ss:$8 sm:$0x3]
      %v2288 = vlaneseq
      %v2289 = vshrl.u32 %v2288, 7
      %v2290 = vsub.s32 0, %v2289
      %v2291 = vrot.slane %v2286, %v2290
      %v2292 = vlaneseq
      %v2293 = vshrl.u32 %v2292, 7
      %v2294 = vsub.s32 1, %v2293
      %v2295 = vrot.slane %v2286, %v2294
      %v2298 = vmul.f32 %v2281, %v2291
      %v2299 = vmul.f32 %v2283, %v2295
      %v2300 = vmul.f32 %v2282, %v2291
      %v2301 = vmul.f32 %v2284, %v2295
      %2302 = vset.pattern.permute.xlu0 44
      %2303 = vperm.xlu0 %2302, %v271
      %v2304 = vpop.permute.xlu0 %2303
      %2306 = vset.pattern.permute.xlu0 44
      %2307 = vperm.xlu0 %2306, %v272
      %v2308 = vpop.permute.xlu0 %2307
      %v2310 = vmul.f32 %v2304, %v2298
      %v2311 = vmul.f32 %v2304, %v2299
      %v2312 = vmul.f32 %v2308, %v2300
      %v2313 = vmul.f32 %v2308, %v2301
      %v2314 = vadd.f32 %v2268, %v2310
      %v2315 = vadd.f32 %v2269, %v2311
      %v2316 = vadd.f32 %v2270, %v2312
      %v2317 = vadd.f32 %v2271, %v2313
      %2318 = vrot.lane.b32.xlu0 %v252, 80
      %v2319 = vpop.permute.xlu0 %2318
      %2320 = vrot.lane.b32.xlu0 %v254, 80
      %v2321 = vpop.permute.xlu0 %2320
      %2322 = vrot.lane.b32.xlu0 %v253, 80
      %v2323 = vpop.permute.xlu0 %2322
      %2324 = vrot.lane.b32.xlu0 %v255, 80
      %v2325 = vpop.permute.xlu0 %2324
      %vm2326 = vcmp.lt.s32.totalorder %v265, 80
      %v2327 = vsel %vm2326, %v2319, %v2323
      %v2328 = vsel %vm2326, %v2321, %v2325
      %v2329 = vsel %vm2326, %v2323, %v2319
      %v2330 = vsel %vm2326, %v2325, %v2321
      %s2331 = scalar_lea.vmem %s2, 85
      %v2332 = vld [vmem:[%s2331] ss:$8 sm:$0x3]
      %v2334 = vlaneseq
      %v2335 = vshrl.u32 %v2334, 7
      %v2336 = vsub.s32 0, %v2335
      %v2337 = vrot.slane %v2332, %v2336
      %v2338 = vlaneseq
      %v2339 = vshrl.u32 %v2338, 7
      %v2340 = vsub.s32 1, %v2339
      %v2341 = vrot.slane %v2332, %v2340
      %v2344 = vmul.f32 %v2327, %v2337
      %v2345 = vmul.f32 %v2329, %v2341
      %v2346 = vmul.f32 %v2328, %v2337
      %v2347 = vmul.f32 %v2330, %v2341
      %2348 = vset.pattern.permute.xlu0 45
      %2349 = vperm.xlu0 %2348, %v271
      %v2350 = vpop.permute.xlu0 %2349
      %2352 = vset.pattern.permute.xlu0 45
      %2353 = vperm.xlu0 %2352, %v272
      %v2354 = vpop.permute.xlu0 %2353
      %v2356 = vmul.f32 %v2350, %v2344
      %v2357 = vmul.f32 %v2350, %v2345
      %v2358 = vmul.f32 %v2354, %v2346
      %v2359 = vmul.f32 %v2354, %v2347
      %v2360 = vadd.f32 %v2314, %v2356
      %v2361 = vadd.f32 %v2315, %v2357
      %v2362 = vadd.f32 %v2316, %v2358
      %v2363 = vadd.f32 %v2317, %v2359
      %2364 = vrot.lane.b32.xlu0 %v252, 79
      %v2365 = vpop.permute.xlu0 %2364
      %2366 = vrot.lane.b32.xlu0 %v254, 79
      %v2367 = vpop.permute.xlu0 %2366
      %2368 = vrot.lane.b32.xlu0 %v253, 79
      %v2369 = vpop.permute.xlu0 %2368
      %2370 = vrot.lane.b32.xlu0 %v255, 79
      %v2371 = vpop.permute.xlu0 %2370
      %vm2372 = vcmp.lt.s32.totalorder %v265, 79
      %v2373 = vsel %vm2372, %v2365, %v2369
      %v2374 = vsel %vm2372, %v2367, %v2371
      %v2375 = vsel %vm2372, %v2369, %v2365
      %v2376 = vsel %vm2372, %v2371, %v2367
      %s2377 = scalar_lea.vmem %s2, 86
      %v2378 = vld [vmem:[%s2377] ss:$8 sm:$0x3]
      %v2380 = vlaneseq
      %v2381 = vshrl.u32 %v2380, 7
      %v2382 = vsub.s32 0, %v2381
      %v2383 = vrot.slane %v2378, %v2382
      %v2384 = vlaneseq
      %v2385 = vshrl.u32 %v2384, 7
      %v2386 = vsub.s32 1, %v2385
      %v2387 = vrot.slane %v2378, %v2386
      %v2390 = vmul.f32 %v2373, %v2383
      %v2391 = vmul.f32 %v2375, %v2387
      %v2392 = vmul.f32 %v2374, %v2383
      %v2393 = vmul.f32 %v2376, %v2387
      %2394 = vset.pattern.permute.xlu0 46
      %2395 = vperm.xlu0 %2394, %v271
      %v2396 = vpop.permute.xlu0 %2395
      %2398 = vset.pattern.permute.xlu0 46
      %2399 = vperm.xlu0 %2398, %v272
      %v2400 = vpop.permute.xlu0 %2399
      %v2402 = vmul.f32 %v2396, %v2390
      %v2403 = vmul.f32 %v2396, %v2391
      %v2404 = vmul.f32 %v2400, %v2392
      %v2405 = vmul.f32 %v2400, %v2393
      %v2406 = vadd.f32 %v2360, %v2402
      %v2407 = vadd.f32 %v2361, %v2403
      %v2408 = vadd.f32 %v2362, %v2404
      %v2409 = vadd.f32 %v2363, %v2405
      %2410 = vrot.lane.b32.xlu0 %v252, 78
      %v2411 = vpop.permute.xlu0 %2410
      %2412 = vrot.lane.b32.xlu0 %v254, 78
      %v2413 = vpop.permute.xlu0 %2412
      %2414 = vrot.lane.b32.xlu0 %v253, 78
      %v2415 = vpop.permute.xlu0 %2414
      %2416 = vrot.lane.b32.xlu0 %v255, 78
      %v2417 = vpop.permute.xlu0 %2416
      %vm2418 = vcmp.lt.s32.totalorder %v265, 78
      %v2419 = vsel %vm2418, %v2411, %v2415
      %v2420 = vsel %vm2418, %v2413, %v2417
      %v2421 = vsel %vm2418, %v2415, %v2411
      %v2422 = vsel %vm2418, %v2417, %v2413
      %s2423 = scalar_lea.vmem %s2, 87
      %v2424 = vld [vmem:[%s2423] ss:$8 sm:$0x3]
      %v2426 = vlaneseq
      %v2427 = vshrl.u32 %v2426, 7
      %v2428 = vsub.s32 0, %v2427
      %v2429 = vrot.slane %v2424, %v2428
      %v2430 = vlaneseq
      %v2431 = vshrl.u32 %v2430, 7
      %v2432 = vsub.s32 1, %v2431
      %v2433 = vrot.slane %v2424, %v2432
      %v2436 = vmul.f32 %v2419, %v2429
      %v2437 = vmul.f32 %v2421, %v2433
      %v2438 = vmul.f32 %v2420, %v2429
      %v2439 = vmul.f32 %v2422, %v2433
      %2440 = vset.pattern.permute.xlu0 47
      %2441 = vperm.xlu0 %2440, %v271
      %v2442 = vpop.permute.xlu0 %2441
      %2444 = vset.pattern.permute.xlu0 47
      %2445 = vperm.xlu0 %2444, %v272
      %v2446 = vpop.permute.xlu0 %2445
      %v2448 = vmul.f32 %v2442, %v2436
      %v2449 = vmul.f32 %v2442, %v2437
      %v2450 = vmul.f32 %v2446, %v2438
      %v2451 = vmul.f32 %v2446, %v2439
      %v2452 = vadd.f32 %v2406, %v2448
      %v2453 = vadd.f32 %v2407, %v2449
      %v2454 = vadd.f32 %v2408, %v2450
      %v2455 = vadd.f32 %v2409, %v2451
      %2456 = vrot.lane.b32.xlu0 %v252, 77
      %v2457 = vpop.permute.xlu0 %2456
      %2458 = vrot.lane.b32.xlu0 %v254, 77
      %v2459 = vpop.permute.xlu0 %2458
      %2460 = vrot.lane.b32.xlu0 %v253, 77
      %v2461 = vpop.permute.xlu0 %2460
      %2462 = vrot.lane.b32.xlu0 %v255, 77
      %v2463 = vpop.permute.xlu0 %2462
      %vm2464 = vcmp.lt.s32.totalorder %v265, 77
      %v2465 = vsel %vm2464, %v2457, %v2461
      %v2466 = vsel %vm2464, %v2459, %v2463
      %v2467 = vsel %vm2464, %v2461, %v2457
      %v2468 = vsel %vm2464, %v2463, %v2459
      %s2469 = scalar_lea.vmem %s2, 96
      %v2470 = vld [vmem:[%s2469] ss:$8 sm:$0x3]
      %v2472 = vlaneseq
      %v2473 = vshrl.u32 %v2472, 7
      %v2474 = vsub.s32 0, %v2473
      %v2475 = vrot.slane %v2470, %v2474
      %v2476 = vlaneseq
      %v2477 = vshrl.u32 %v2476, 7
      %v2478 = vsub.s32 1, %v2477
      %v2479 = vrot.slane %v2470, %v2478
      %v2482 = vmul.f32 %v2465, %v2475
      %v2483 = vmul.f32 %v2467, %v2479
      %v2484 = vmul.f32 %v2466, %v2475
      %v2485 = vmul.f32 %v2468, %v2479
      %2486 = vset.pattern.permute.xlu0 48
      %2487 = vperm.xlu0 %2486, %v271
      %v2488 = vpop.permute.xlu0 %2487
      %2490 = vset.pattern.permute.xlu0 48
      %2491 = vperm.xlu0 %2490, %v272
      %v2492 = vpop.permute.xlu0 %2491
      %v2494 = vmul.f32 %v2488, %v2482
      %v2495 = vmul.f32 %v2488, %v2483
      %v2496 = vmul.f32 %v2492, %v2484
      %v2497 = vmul.f32 %v2492, %v2485
      %v2498 = vadd.f32 %v2452, %v2494
      %v2499 = vadd.f32 %v2453, %v2495
      %v2500 = vadd.f32 %v2454, %v2496
      %v2501 = vadd.f32 %v2455, %v2497
      %v2502 = vld [vmem:[%s3] sm:$0xff]
      %v2503 = vld [vmem:[%s3 + $0x8] sm:$0xff]
      %2505 = vset.pattern.permute.xlu0 0
      %2506 = vperm.xlu0 %2505, %v2502
      %v2507 = vpop.permute.xlu0 %2506
      %2510 = vset.pattern.permute.xlu0 0
      %2511 = vperm.xlu0 %2510, %v2503
      %v2512 = vpop.permute.xlu0 %2511
      %v2514 = vadd.f32 %v2498, %v2507
      %v2515 = vadd.f32 %v2499, %v2507
      %v2516 = vadd.f32 %v2500, %v2512
      %v2517 = vadd.f32 %v2501, %v2512
      %v2518 = vmul.f32 %v2514, 0.5
      %v2519 = vmul.f32 %v2515, 0.5
      %v2520 = vmul.f32 %v2516, 0.5
      %v2521 = vmul.f32 %v2517, 0.5
      %v2522 = vmul.f32 %v2514, 0.70710677
      %v2523 = vmul.f32 %v2515, 0.70710677
      %v2524 = vmul.f32 %v2516, 0.70710677
      %v2525 = vmul.f32 %v2517, 0.70710677
      %v2526 = vmax.f32 %v2522, -4.0
      %v2527 = vmax.f32 %v2523, -4.0
      %v2528 = vmax.f32 %v2524, -4.0
      %v2529 = vmax.f32 %v2525, -4.0
      %v2530 = vmin.f32 %v2526, 4.0
      %v2531 = vmin.f32 %v2527, 4.0
      %v2532 = vmin.f32 %v2528, 4.0
      %v2533 = vmin.f32 %v2529, 4.0
      %v2534 = vmul.f32 %v2530, %v2530
      %v2535 = vmul.f32 %v2531, %v2531
      %v2536 = vmul.f32 %v2532, %v2532
      %v2537 = vmul.f32 %v2533, %v2533
      %v2538 = vmul.f32 %v2534, -2.7261424e-10
      %v2539 = vmul.f32 %v2535, -2.7261424e-10
      %v2540 = vmul.f32 %v2536, -2.7261424e-10
      %v2541 = vmul.f32 %v2537, -2.7261424e-10
      %v2542 = vadd.f32 %v2538, 2.7706815e-08
      %v2543 = vadd.f32 %v2539, 2.7706815e-08
      %v2544 = vadd.f32 %v2540, 2.7706815e-08
      %v2545 = vadd.f32 %v2541, 2.7706815e-08
      %v2546 = vmul.f32 %v2542, %v2534
      %v2547 = vmul.f32 %v2543, %v2535
      %v2548 = vmul.f32 %v2544, %v2536
      %v2549 = vmul.f32 %v2545, %v2537
      %v2550 = vadd.f32 %v2546, -2.101024e-06
      %v2551 = vadd.f32 %v2547, -2.101024e-06
      %v2552 = vadd.f32 %v2548, -2.101024e-06
      %v2553 = vadd.f32 %v2549, -2.101024e-06
      %v2554 = vmul.f32 %v2550, %v2534
      %v2555 = vmul.f32 %v2551, %v2535
      %v2556 = vmul.f32 %v2552, %v2536
      %v2557 = vmul.f32 %v2553, %v2537
      %v2558 = vadd.f32 %v2554, -5.6925062e-05
      %v2559 = vadd.f32 %v2555, -5.6925062e-05
      %v2560 = vadd.f32 %v2556, -5.6925062e-05
      %v2561 = vadd.f32 %v2557, -5.6925062e-05
      %v2562 = vmul.f32 %v2558, %v2534
      %v2563 = vmul.f32 %v2559, %v2535
      %v2564 = vmul.f32 %v2560, %v2536
      %v2565 = vmul.f32 %v2561, %v2537
      %v2566 = vadd.f32 %v2562, -0.00073499064
      %v2567 = vadd.f32 %v2563, -0.00073499064
      %v2568 = vadd.f32 %v2564, -0.00073499064
      %v2569 = vadd.f32 %v2565, -0.00073499064
      %v2570 = vmul.f32 %v2566, %v2534
      %v2571 = vmul.f32 %v2567, %v2535
      %v2572 = vmul.f32 %v2568, %v2536
      %v2573 = vmul.f32 %v2569, %v2537
      %v2574 = vadd.f32 %v2570, -0.0029546
      %v2575 = vadd.f32 %v2571, -0.0029546
      %v2576 = vadd.f32 %v2572, -0.0029546
      %v2577 = vadd.f32 %v2573, -0.0029546
      %v2578 = vmul.f32 %v2574, %v2534
      %v2579 = vmul.f32 %v2575, %v2535
      %v2580 = vmul.f32 %v2576, %v2536
      %v2581 = vmul.f32 %v2577, %v2537
      %v2582 = vadd.f32 %v2578, -0.016096033
      %v2583 = vadd.f32 %v2579, -0.016096033
      %v2584 = vadd.f32 %v2580, -0.016096033
      %v2585 = vadd.f32 %v2581, -0.016096033
      %v2586 = vmul.f32 %v2582, %v2530
      %v2587 = vmul.f32 %v2583, %v2531
      %v2588 = vmul.f32 %v2584, %v2532
      %v2589 = vmul.f32 %v2585, %v2533
      %v2590 = vmul.f32 %v2534, -1.45660715e-05
      %v2591 = vmul.f32 %v2535, -1.45660715e-05
      %v2592 = vmul.f32 %v2536, -1.45660715e-05
      %v2593 = vmul.f32 %v2537, -1.45660715e-05
      %v2594 = vadd.f32 %v2590, -0.00021337405
      %v2595 = vadd.f32 %v2591, -0.00021337405
      %v2596 = vadd.f32 %v2592, -0.00021337405
      %v2597 = vadd.f32 %v2593, -0.00021337405
      %v2598 = vmul.f32 %v2594, %v2534
      %v2599 = vmul.f32 %v2595, %v2535
      %v2600 = vmul.f32 %v2596, %v2536
      %v2601 = vmul.f32 %v2597, %v2537
      %v2602 = vadd.f32 %v2598, -0.001682827
      %v2603 = vadd.f32 %v2599, -0.001682827
      %v2604 = vadd.f32 %v2600, -0.001682827
      %v2605 = vadd.f32 %v2601, -0.001682827
      %v2606 = vmul.f32 %v2602, %v2534
      %v2607 = vmul.f32 %v2603, %v2535
      %v2608 = vmul.f32 %v2604, %v2536
      %v2609 = vmul.f32 %v2605, %v2537
      %v2610 = vadd.f32 %v2606, -0.0073733293
      %v2611 = vadd.f32 %v2607, -0.0073733293
      %v2612 = vadd.f32 %v2608, -0.0073733293
      %v2613 = vadd.f32 %v2609, -0.0073733293
      %v2614 = vmul.f32 %v2610, %v2534
      %v2615 = vmul.f32 %v2611, %v2535
      %v2616 = vmul.f32 %v2612, %v2536
      %v2617 = vmul.f32 %v2613, %v2537
      %v2618 = vadd.f32 %v2614, -0.014264739
      %v2619 = vadd.f32 %v2615, -0.014264739
      %v2620 = vadd.f32 %v2616, -0.014264739
      %v2621 = vadd.f32 %v2617, -0.014264739
      %v2622 = vrcp.pop %v2618
      %v2623 = vmul.f32 %v2586, %v2622
      %v2624 = vrcp.pop %v2619
      %v2625 = vmul.f32 %v2587, %v2624
      %v2626 = vrcp.pop %v2620
      %v2627 = vmul.f32 %v2588, %v2626
      %v2628 = vrcp.pop %v2621
      %v2629 = vmul.f32 %v2589, %v2628
      %v2630 = vadd.f32 %v2623, 1.0
      %v2631 = vadd.f32 %v2625, 1.0
      %v2632 = vadd.f32 %v2627, 1.0
      %v2633 = vadd.f32 %v2629, 1.0
      %v2634 = vmul.f32 %v2518, %v2630
      %v2635 = vmul.f32 %v2519, %v2631
      %v2636 = vmul.f32 %v2520, %v2632
      %v2637 = vmul.f32 %v2521, %v2633
      %v2638 = vld [vmem:[%s4] sm:$0xf]
      %v2639 = vld [vmem:[%s5] sm:$0xf]
      %2641 = vset.pattern.permute.xlu0 0
      %2642 = vperm.xlu0 %2641, %v2639
      %v2643 = vpop.permute.xlu0 %2642
      %vm2645 = vcmask 130048
      %v2647 = vsel %vm2645, %v2638, 0
      %2649 = vmatprep.subr.mxu0 %v2635
      %2650 = vmatpush1.msra.mxu0 %v2634
      %2651 = vmatprep.subr.mxu0 %v2637
      %2652 = vmatpush1.msra.mxu0 %v2636
      %2653 = vmatprep.subr.mxu0 0.0
      %2654 = vmatpush1.msra.mxu0 0.0
      %2655 = vmatprep.subr.mxu0 0.0
      %2656 = vmatpush1.msra.mxu0 0.0
      %2657 = vmatprep.subr.mxu0 0.0
      %2658 = vmatpush1.msra.mxu0 0.0
      %2659 = vmatprep.subr.mxu0 0.0
      %2660 = vmatpush1.msra.mxu0 0.0
      %2661 = vmatprep.subr.mxu0 0.0
      %2662 = vmatpush1.msra.mxu0 0.0
      %2663 = vmatprep.subr.mxu0 0.0
      %2664 = vmatpush1.msra.mxu0 0.0
      %2665 = vmatprep.subr.mxu0 0.0
      %2666 = vmatpush1.msra.mxu0 0.0
      %2667 = vmatprep.subr.mxu0 0.0
      %2668 = vmatpush1.msra.mxu0 0.0
      %2669 = vmatprep.subr.mxu0 0.0
      %2670 = vmatpush1.msra.mxu0 0.0
      %2671 = vmatprep.subr.mxu0 0.0
      %2672 = vmatpush1.msra.mxu0 0.0
      %2673 = vmatprep.subr.mxu0 0.0
      %2674 = vmatpush1.msra.mxu0 0.0
      %2675 = vmatprep.subr.mxu0 0.0
      %2676 = vmatpush1.msra.mxu0 0.0
      %2677 = vmatprep.subr.mxu0 0.0
      %2678 = vmatpush1.msra.mxu0 0.0
      %2679 = vmatprep.subr.mxu0 0.0
      %2680 = vmatpush1.msra.mxu0 0.0
      %2681 = vmatprep.subr.mxu0 0.0
      %2682 = vmatpush1.msra.mxu0 0.0
      %2683 = vmatprep.subr.mxu0 0.0
      %2684 = vmatpush1.msra.mxu0 0.0
      %2685 = vmatprep.subr.mxu0 0.0
      %2686 = vmatpush1.msra.mxu0 0.0
      %2687 = vmatprep.subr.mxu0 0.0
      %2688 = vmatpush1.msra.mxu0 0.0
      %2689 = vmatprep.subr.mxu0 0.0
      %2690 = vmatpush1.msra.mxu0 0.0
      %2691 = vmatprep.subr.mxu0 0.0
      %2692 = vmatpush1.msra.mxu0 0.0
      %2693 = vmatprep.subr.mxu0 0.0
      %2694 = vmatpush1.msra.mxu0 0.0
      %2695 = vmatprep.subr.mxu0 0.0
      %2696 = vmatpush1.msra.mxu0 0.0
      %2697 = vmatprep.subr.mxu0 0.0
      %2698 = vmatpush1.msra.mxu0 0.0
      %2699 = vmatprep.subr.mxu0 0.0
      %2700 = vmatpush1.msra.mxu0 0.0
      %2701 = vmatprep.subr.mxu0 0.0
      %2702 = vmatpush1.msra.mxu0 0.0
      %2703 = vmatprep.subr.mxu0 0.0
      %2704 = vmatpush1.msra.mxu0 0.0
      %2705 = vmatprep.subr.mxu0 0.0
      %2706 = vmatpush1.msra.mxu0 0.0
      %2707 = vmatprep.subr.mxu0 0.0
      %2708 = vmatpush1.msra.mxu0 0.0
      %2709 = vmatprep.subr.mxu0 0.0
      %2710 = vmatpush1.msra.mxu0 0.0
      %2711 = vmatprep.subr.mxu0 0.0
      %2712 = vmatpush1.msra.mxu0 0.0
      %2713 = vmatprep.mubr.f32.mxu0 0.0
      %2714 = vmatmul.mubr.f32.gmra.mrb[0].mxu0 %v2647
      %v2715 = vpop.f32.mrb[0].mxu0
      %v2716 = vadd.f32 %v2643, %v2715
      %v2717 = vpop.f32.mrb[0].mxu0
      %v2718 = vadd.f32 %v2643, %v2717
      %2719 = vdwg.mxu0
      %v2722 = vcombine.low %v2716, %v2718
      %2724 = vst [vmem:[%s251] sm:$0xff] %v2722
      %p2725 = scmp.lt.s32.totalorder %s17, 1
      %s2726 = scalar_select %p2725, %s17, 1
      %s2727 = smul.addr %s2726, 2
      %s2728 = smul.addr %s2727, 4
      %s2729 = scalar_lea.vmem %s6, %s2728
      // Predicated region
      $region45: #{fft3_forward.3} parent=43 // pred_check
        %p2730 = pneg %p166
      $region46: #{fft3_forward.3} parent=43 // pred_check_branch
        %2732 = sbr.rel (%p2730) target = $region48
      $region47: #{fft3_forward.3} parent=43 // pred_region
        _
      $region48: #{fft3_forward.3} parent=43 // pred_fallthru
        _
    $region44: #{fft3_forward.3} parent=5 // pred_fallthru
      _
    %p2733 = scmp.le.s32.totalorder 2, %s12
    // Predicated region
    $region49: #{fft3_forward.3} parent=5 // pred_check
      %p2734 = pneg %p2733
    $region50: #{fft3_forward.3} parent=5 // pred_check_branch
      %2736 = sbr.rel (%p2734) target = $region52
    $region51: #{fft3_forward.3} parent=5 // pred_region
      %s2737 = ssub.s32 %s12, 2
      // Predicated region
      $region53: #{fft3_forward.3} parent=51 // pred_check
        %p2738 = pneg %p172
      $region54: #{fft3_forward.3} parent=51 // pred_check_branch
        %2740 = sbr.rel (%p2738) target = $region56
      $region55: #{fft3_forward.3} parent=51 // pred_region
        %p2741 = scmp.lt.s32.totalorder %s18, 1
        %s2742 = scalar_select %p2741, %s18, 1
        %s2743 = smul.addr %s2742, 2
        %s2744 = smul.addr %s2743, 4
        %s2745 = scalar_lea.vmem %s6, %s2744
      $region56: #{fft3_forward.3} parent=51 // pred_fallthru
        _
    $region52: #{fft3_forward.3} parent=5 // pred_fallthru
      _
  $region6: #{fft3_forward.3} parent=0 // loop_footer
    %s16 = sadd.s32 1, %s12
  $region7: #{fft3_forward.3} parent=0 // loop_footer_branch
    %11 = sbr.rel target = $region3
  $region8: #{fft3_forward.3} parent=0 // loop_exit
    _

</llo_original>
